<compile_context>
chip_gen: v6e
topology: v6e:2x2x1
jax: 0.10.0
libtpu: 0.0.40
codegen_flags: <defaults>
</compile_context>

<pallas_src>
import functools
import math

import jax
import jax.numpy as jnp
from jax.experimental import pallas as pl
from jax.experimental.pallas import tpu as pltpu


# ----------------------------- fused Pallas kernel -------------------------- #

def _vit_forward_kernel(*refs, B, Sp, S, D, H, depth, eps=1e-6):
    """Whole ViT forward in one kernel (single grid step, everything VMEM).

    refs layout (all full blocks):
      patches   (B*Sp, Cpp) bf16   zero rows at cls/pad slots
      add_tok   (B*Sp, D)   f32    row0=cls+pos0, rows 1..N = pos+patch_bias, pad=0
      attn_mask (Sp, Sp)    f32    0 for valid key cols, -1e30 for pad key cols
      patch_w   (Cpp, D)    bf16
      per block (x depth):
        ln1_g, ln1_b (1,D) | qkv_w (D,3D) bf16, qkv_b (1,3D)
        proj_w (D,D) bf16, proj_b (1,D) | ln2_g, ln2_b (1,D)
        fc1_w (D,Hid) bf16, fc1_b (1,Hid) | fc2_w (Hid,D) bf16, fc2_b (1,D)
      lnf_g, lnf_b (1,D) | head_w (D,C) bf16, head_b (1,C)
      out (B, C) f32
    """
    hd = D // H
    scale = 1.0 / math.sqrt(hd)
    f32, bf16 = jnp.float32, jnp.bfloat16

    it = iter(refs)
    patches_ref = next(it)
    add_tok_ref = next(it)
    mask_ref = next(it)
    patch_w_ref = next(it)
    blocks = [tuple(next(it) for _ in range(12)) for _ in range(depth)]
    lnf_g_ref = next(it)
    lnf_b_ref = next(it)
    head_w_ref = next(it)
    head_b_ref = next(it)
    out_ref = next(it)

    def mm(x, w_ref, b_ref=None):
        # bf16 MXU operands, f32 accumulate, f32 bias add
        y = jnp.dot(x.astype(bf16), w_ref[...], preferred_element_type=f32)
        if b_ref is not None:
            y = y + b_ref[...]
        return y

    def ln(x, g_ref, b_ref):
        mu = jnp.mean(x, axis=-1, keepdims=True)
        var = jnp.mean(jnp.square(x - mu), axis=-1, keepdims=True)
        return (x - mu) * jax.lax.rsqrt(var + eps) * g_ref[...] + b_ref[...]

    # ---- patch embedding + cls token + positional embedding (pre-baked) ----
    t = jnp.dot(patches_ref[...], patch_w_ref[...],
                preferred_element_type=f32) + add_tok_ref[...]     # (B*Sp, D) f32
    mask = mask_ref[...]                                           # (Sp, Sp)

    # ---- transformer blocks (unrolled; weights VMEM-resident) ----
    for (ln1_g, ln1_b, qkv_w, qkv_b, proj_w, proj_b,
         ln2_g, ln2_b, fc1_w, fc1_b, fc2_w, fc2_b) in blocks:
        # --- multi-head self attention, batched over all B*H heads ---
        h = ln(t, ln1_g, ln1_b)
        qkv = mm(h, qkv_w, qkv_b)                                  # (B*Sp, 3D) f32

        def gather_heads(col0, _qkv=qkv):
            # value slices (tile-aligned 8-row blocks) -> (B*H, Sp, hd) bf16
            return jnp.stack(
                [_qkv[b * Sp:(b + 1) * Sp,
                      col0 + hh * hd: col0 + (hh + 1) * hd]
                 for b in range(B) for hh in range(H)],
                axis=0).astype(bf16)

        q = gather_heads(0)
        k = gather_heads(D)
        v = gather_heads(2 * D)

        s = jnp.einsum('bqd,bkd->bqk', q, k,
                       preferred_element_type=f32) * scale         # (BH, Sp, Sp)
        s = s + mask                                               # mask pad keys
        s = s - jnp.max(s, axis=-1, keepdims=True)
        p = jnp.exp(s)
        p = p * pl.reciprocal(jnp.sum(p, axis=-1, keepdims=True), approx=True)
        ctx = jnp.einsum('bqk,bkd->bqd', p.astype(bf16), v,
                         preferred_element_type=f32)               # (BH, Sp, hd)

        attn = jnp.concatenate(
            [jnp.concatenate([ctx[b * H + hh] for hh in range(H)], axis=-1)
             for b in range(B)], axis=0)                           # (B*Sp, D)
        t = t + mm(attn, proj_w, proj_b)

        # --- MLP ---
        h2 = ln(t, ln2_g, ln2_b)
        h2 = mm(h2, fc1_w, fc1_b)
        h2 = jax.nn.gelu(h2, approximate=True)   # tanh GELU (EUP); ~= torch erf GELU
        t = t + mm(h2, fc2_w, fc2_b)

    # ---- cls rows -> final LN -> head -> class softmax (exact) ----
    cls_tok = jnp.concatenate([t[b * Sp:b * Sp + 1, :] for b in range(B)],
                              axis=0)                              # (B, D)
    cls_tok = ln(cls_tok, lnf_g_ref, lnf_b_ref)
    logits = mm(cls_tok, head_w_ref, head_b_ref)                   # (B, C)
    m = jnp.max(logits, axis=-1, keepdims=True)
    e = jnp.exp(logits - m)
    out_ref[...] = e / jnp.sum(e, axis=-1, keepdims=True)


# ------------------------------- wrappers ----------------------------------- #

def _full_spec(shape):
    nd = len(shape)
    return pl.BlockSpec(shape, lambda i, _nd=nd: (0,) * _nd)


def patchify(x_nchw, patch):
    """NCHW -> (B, num_patches, C*patch*patch), flattened in (C, ph, pw) order
    exactly like Conv2d(kernel=stride=patch) in timm's PatchEmbed."""
    B, C, Hh, Ww = x_nchw.shape
    GH, GW = Hh // patch, Ww // patch
    x = x_nchw.reshape(B, C, GH, patch, GW, patch)
    x = jnp.transpose(x, (0, 2, 4, 1, 3, 5))          # (B, GH, GW, C, ph, pw)
    return x.reshape(B, GH * GW, C * patch * patch)


def inference_model_forward(x_nchw, params, cfg):
    """Equivalent of InferenceModel.forward: ViT backbone then softmax(dim=1)."""
    B = x_nchw.shape[0]
    D = cfg["embed_dim"]
    H = cfg["num_heads"]
    patch = cfg["patch"]
    depth = cfg["depth"]
    C = cfg["num_classes"]
    f32, bf16 = jnp.float32, jnp.bfloat16

    patches = patchify(x_nchw.astype(f32), patch)                # (B, N, Cpp)
    _, N, Cpp = patches.shape
    S = N + 1
    Sp = ((S + 7) // 8) * 8                                      # sublane-aligned seq

    # patch rows padded: row 0 per sample = cls slot (zeros), rows 1..N = patches,
    # rows S..Sp-1 = pad (zeros).  bf16 to halve the only sizable input DMA.
    pp = jnp.zeros((B, Sp, Cpp), f32).at[:, 1:S, :].set(patches)
    pp = pp.reshape(B * Sp, Cpp).astype(bf16)

    # additive token tensor: row0 = cls + pos[0]; rows 1..N = pos[i] + patch_bias;
    # pad rows = 0.  Tiled over batch so the kernel does a single broadcast-free add.
    add = jnp.zeros((Sp, D), f32)
    add = add.at[0, :].set(params["cls"][0, 0] + params["pos"][0, 0])
    add = add.at[1:S, :].set(params["pos"][0, 1:S] + params["patch_b"][None, :])
    add_tok = jnp.tile(add, (B, 1))                              # (B*Sp, D)

    # key mask: 0 for valid key columns, -1e30 for pad key columns
    col = jax.lax.broadcasted_iota(jnp.int32, (Sp, Sp), 1)
    attn_mask = jnp.where(col < S, 0.0, -1e30).astype(f32)       # (Sp, Sp)

    inputs = [
        pp,
        add_tok,
        attn_mask,
        params["patch_w"].astype(bf16),
    ]
    for blk in params["blocks"]:
        hid = blk["fc1_b"].shape[0]
        inputs += [
            blk["ln1_g"].reshape(1, D).astype(f32),
            blk["ln1_b"].reshape(1, D).astype(f32),
            blk["qkv_w"].astype(bf16),
            blk["qkv_b"].reshape(1, 3 * D).astype(f32),
            blk["proj_w"].astype(bf16),
            blk["proj_b"].reshape(1, D).astype(f32),
            blk["ln2_g"].reshape(1, D).astype(f32),
            blk["ln2_b"].reshape(1, D).astype(f32),
            blk["fc1_w"].astype(bf16),
            blk["fc1_b"].reshape(1, hid).astype(f32),
            blk["fc2_w"].astype(bf16),
            blk["fc2_b"].reshape(1, D).astype(f32),
        ]
    inputs += [
        params["lnf_g"].reshape(1, D).astype(f32),
        params["lnf_b"].reshape(1, D).astype(f32),
        params["head_w"].astype(bf16),
        params["head_b"].reshape(1, C).astype(f32),
    ]

    kernel = functools.partial(_vit_forward_kernel,
                               B=B, Sp=Sp, S=S, D=D, H=H, depth=depth)
    return pl.pallas_call(
        kernel,
        out_shape=jax.ShapeDtypeStruct((B, C), jnp.float32),
        grid=(1,),
        in_specs=[_full_spec(a.shape) for a in inputs],
        out_specs=_full_spec((B, C)),
        compiler_params=pltpu.CompilerParams(
            dimension_semantics=("arbitrary",)),
    )(*inputs)


# ------------------------------- ViT params --------------------------------- #

def init_vit_params(key, *, img_size, patch, in_chans, embed_dim, depth,
                    num_heads, mlp_ratio, num_classes):
    keys = jax.random.split(key, 8 + depth * 8)
    ki = iter(range(len(keys)))
    std = 0.02
    n_patches = (img_size // patch) ** 2
    patch_dim = in_chans * patch * patch
    hidden = int(embed_dim * mlp_ratio)

    def nrm(shape):
        return std * jax.random.normal(keys[next(ki)], shape, dtype=jnp.float32)

    params = {
        "patch_w": nrm((patch_dim, embed_dim)),
        "patch_b": jnp.zeros((embed_dim,), jnp.float32),
        "cls": nrm((1, 1, embed_dim)),
        "pos": nrm((1, n_patches + 1, embed_dim)),
        "lnf_g": jnp.ones((embed_dim,), jnp.float32),
        "lnf_b": jnp.zeros((embed_dim,), jnp.float32),
        "head_w": nrm((embed_dim, num_classes)),
        "head_b": jnp.zeros((num_classes,), jnp.float32),
        "blocks": [],
    }
    for _ in range(depth):
        params["blocks"].append({
            "ln1_g": jnp.ones((embed_dim,), jnp.float32),
            "ln1_b": jnp.zeros((embed_dim,), jnp.float32),
            "qkv_w": nrm((embed_dim, 3 * embed_dim)),
            "qkv_b": jnp.zeros((3 * embed_dim,), jnp.float32),
            "proj_w": nrm((embed_dim, embed_dim)),
            "proj_b": jnp.zeros((embed_dim,), jnp.float32),
            "ln2_g": jnp.ones((embed_dim,), jnp.float32),
            "ln2_b": jnp.zeros((embed_dim,), jnp.float32),
            "fc1_w": nrm((embed_dim, hidden)),
            "fc1_b": jnp.zeros((hidden,), jnp.float32),
            "fc2_w": nrm((hidden, embed_dim)),
            "fc2_b": jnp.zeros((embed_dim,), jnp.float32),
        })
    cfg = dict(img_size=img_size, patch=patch, in_chans=in_chans,
               embed_dim=embed_dim, depth=depth, num_heads=num_heads,
               num_classes=num_classes)
    return params, cfg


# ---------------------------------- main ------------------------------------ #

if __name__ == "__main__":
    # Scaled-down vit_small_patch32 style config:
    # 64x64 RGB input, patch 32 -> 4 patches (+1 cls, padded to 8), embed 64,
    # 2 blocks, 4 heads, 4 classes (Covid / Lung Opacity / Normal / Viral Pneumonia).
    IMG, PATCH, C_IN = 64, 32, 3
    EMBED, DEPTH, HEADS, MLP_RATIO, CLASSES = 64, 2, 4, 4.0, 4
    BATCH = 2

    key = jax.random.PRNGKey(0)
    pkey, xkey = jax.random.split(key)
    params, cfg = init_vit_params(
        pkey, img_size=IMG, patch=PATCH, in_chans=C_IN, embed_dim=EMBED,
        depth=DEPTH, num_heads=HEADS, mlp_ratio=MLP_RATIO, num_classes=CLASSES)

    x = jax.random.normal(xkey, (BATCH, C_IN, IMG, IMG), dtype=jnp.float32)  # NCHW

    fwd = jax.jit(lambda xx: inference_model_forward(xx, params, cfg))
    probs = jax.block_until_ready(fwd(x))

    assert probs.shape == (BATCH, CLASSES)
    assert bool(jnp.all(jnp.isfinite(probs)))
    # softmax rows must sum to 1
    assert bool(jnp.allclose(jnp.sum(probs, axis=1), 1.0, atol=1e-5))

    print("KERNEL_OK")
</pallas_src>

<mosaic_0001>
module attributes {stable_mosaic.version = 11 : i64} {
  func.func @_vit_forward_kernel(%arg0: i32, %arg1: memref<16x3072xbf16, #tpu.memory_space<vmem>>, %arg2: memref<16x64xf32, #tpu.memory_space<vmem>>, %arg3: memref<8x8xf32, #tpu.memory_space<vmem>>, %arg4: memref<3072x64xbf16, #tpu.memory_space<vmem>>, %arg5: memref<1x64xf32, #tpu.memory_space<vmem>>, %arg6: memref<1x64xf32, #tpu.memory_space<vmem>>, %arg7: memref<64x192xbf16, #tpu.memory_space<vmem>>, %arg8: memref<1x192xf32, #tpu.memory_space<vmem>>, %arg9: memref<64x64xbf16, #tpu.memory_space<vmem>>, %arg10: memref<1x64xf32, #tpu.memory_space<vmem>>, %arg11: memref<1x64xf32, #tpu.memory_space<vmem>>, %arg12: memref<1x64xf32, #tpu.memory_space<vmem>>, %arg13: memref<64x256xbf16, #tpu.memory_space<vmem>>, %arg14: memref<1x256xf32, #tpu.memory_space<vmem>>, %arg15: memref<256x64xbf16, #tpu.memory_space<vmem>>, %arg16: memref<1x64xf32, #tpu.memory_space<vmem>>, %arg17: memref<1x64xf32, #tpu.memory_space<vmem>>, %arg18: memref<1x64xf32, #tpu.memory_space<vmem>>, %arg19: memref<64x192xbf16, #tpu.memory_space<vmem>>, %arg20: memref<1x192xf32, #tpu.memory_space<vmem>>, %arg21: memref<64x64xbf16, #tpu.memory_space<vmem>>, %arg22: memref<1x64xf32, #tpu.memory_space<vmem>>, %arg23: memref<1x64xf32, #tpu.memory_space<vmem>>, %arg24: memref<1x64xf32, #tpu.memory_space<vmem>>, %arg25: memref<64x256xbf16, #tpu.memory_space<vmem>>, %arg26: memref<1x256xf32, #tpu.memory_space<vmem>>, %arg27: memref<256x64xbf16, #tpu.memory_space<vmem>>, %arg28: memref<1x64xf32, #tpu.memory_space<vmem>>, %arg29: memref<1x64xf32, #tpu.memory_space<vmem>>, %arg30: memref<1x64xf32, #tpu.memory_space<vmem>>, %arg31: memref<64x4xbf16, #tpu.memory_space<vmem>>, %arg32: memref<1x4xf32, #tpu.memory_space<vmem>>, %arg33: memref<2x4xf32, #tpu.memory_space<vmem>>) attributes {dimension_semantics = [#tpu.dimension_semantics<arbitrary>], iteration_bounds = array<i64: 1>, scalar_prefetch = 0 : i64, scratch_operands = 0 : i64, tpu.core_type = #tpu.core_type<tc>, window_params = [{pipeline_mode = #tpu.pipeline_mode<synchronous>, transform_indices = @transform_0, window_bounds = array<i64: 16, 3072>}, {pipeline_mode = #tpu.pipeline_mode<synchronous>, transform_indices = @transform_1, window_bounds = array<i64: 16, 64>}, {pipeline_mode = #tpu.pipeline_mode<synchronous>, transform_indices = @transform_2, window_bounds = array<i64: 8, 8>}, {pipeline_mode = #tpu.pipeline_mode<synchronous>, transform_indices = @transform_3, window_bounds = array<i64: 3072, 64>}, {pipeline_mode = #tpu.pipeline_mode<synchronous>, transform_indices = @transform_4, window_bounds = array<i64: 1, 64>}, {pipeline_mode = #tpu.pipeline_mode<synchronous>, transform_indices = @transform_5, window_bounds = array<i64: 1, 64>}, {pipeline_mode = #tpu.pipeline_mode<synchronous>, transform_indices = @transform_6, window_bounds = array<i64: 64, 192>}, {pipeline_mode = #tpu.pipeline_mode<synchronous>, transform_indices = @transform_7, window_bounds = array<i64: 1, 192>}, {pipeline_mode = #tpu.pipeline_mode<synchronous>, transform_indices = @transform_8, window_bounds = array<i64: 64, 64>}, {pipeline_mode = #tpu.pipeline_mode<synchronous>, transform_indices = @transform_9, window_bounds = array<i64: 1, 64>}, {pipeline_mode = #tpu.pipeline_mode<synchronous>, transform_indices = @transform_10, window_bounds = array<i64: 1, 64>}, {pipeline_mode = #tpu.pipeline_mode<synchronous>, transform_indices = @transform_11, window_bounds = array<i64: 1, 64>}, {pipeline_mode = #tpu.pipeline_mode<synchronous>, transform_indices = @transform_12, window_bounds = array<i64: 64, 256>}, {pipeline_mode = #tpu.pipeline_mode<synchronous>, transform_indices = @transform_13, window_bounds = array<i64: 1, 256>}, {pipeline_mode = #tpu.pipeline_mode<synchronous>, transform_indices = @transform_14, window_bounds = array<i64: 256, 64>}, {pipeline_mode = #tpu.pipeline_mode<synchronous>, transform_indices = @transform_15, window_bounds = array<i64: 1, 64>}, {pipeline_mode = #tpu.pipeline_mode<synchronous>, transform_indices = @transform_16, window_bounds = array<i64: 1, 64>}, {pipeline_mode = #tpu.pipeline_mode<synchronous>, transform_indices = @transform_17, window_bounds = array<i64: 1, 64>}, {pipeline_mode = #tpu.pipeline_mode<synchronous>, transform_indices = @transform_18, window_bounds = array<i64: 64, 192>}, {pipeline_mode = #tpu.pipeline_mode<synchronous>, transform_indices = @transform_19, window_bounds = array<i64: 1, 192>}, {pipeline_mode = #tpu.pipeline_mode<synchronous>, transform_indices = @transform_20, window_bounds = array<i64: 64, 64>}, {pipeline_mode = #tpu.pipeline_mode<synchronous>, transform_indices = @transform_21, window_bounds = array<i64: 1, 64>}, {pipeline_mode = #tpu.pipeline_mode<synchronous>, transform_indices = @transform_22, window_bounds = array<i64: 1, 64>}, {pipeline_mode = #tpu.pipeline_mode<synchronous>, transform_indices = @transform_23, window_bounds = array<i64: 1, 64>}, {pipeline_mode = #tpu.pipeline_mode<synchronous>, transform_indices = @transform_24, window_bounds = array<i64: 64, 256>}, {pipeline_mode = #tpu.pipeline_mode<synchronous>, transform_indices = @transform_25, window_bounds = array<i64: 1, 256>}, {pipeline_mode = #tpu.pipeline_mode<synchronous>, transform_indices = @transform_26, window_bounds = array<i64: 256, 64>}, {pipeline_mode = #tpu.pipeline_mode<synchronous>, transform_indices = @transform_27, window_bounds = array<i64: 1, 64>}, {pipeline_mode = #tpu.pipeline_mode<synchronous>, transform_indices = @transform_28, window_bounds = array<i64: 1, 64>}, {pipeline_mode = #tpu.pipeline_mode<synchronous>, transform_indices = @transform_29, window_bounds = array<i64: 1, 64>}, {pipeline_mode = #tpu.pipeline_mode<synchronous>, transform_indices = @transform_30, window_bounds = array<i64: 64, 4>}, {pipeline_mode = #tpu.pipeline_mode<synchronous>, transform_indices = @transform_31, window_bounds = array<i64: 1, 4>}, {pipeline_mode = #tpu.pipeline_mode<synchronous>, transform_indices = @transform_32, window_bounds = array<i64: 2, 4>}]} {
    %c0 = arith.constant 0 : index
    %c0_0 = arith.constant 0 : index
    %0 = vector.load %arg1[%c0, %c0_0] : memref<16x3072xbf16, #tpu.memory_space<vmem>>, vector<16x3072xbf16>
    %c0_1 = arith.constant 0 : index
    %c0_2 = arith.constant 0 : index
    %1 = vector.load %arg4[%c0_1, %c0_2] : memref<3072x64xbf16, #tpu.memory_space<vmem>>, vector<3072x64xbf16>
    %cst = arith.constant dense<0.000000e+00> : vector<16x64xf32>
    %2 = tpu.matmul %0, %1, %cst {dimension_numbers = #tpu.dot_dimension_numbers<[1], [0], [0], [1], [0, 0, 1, 1], [], []>} : vector<16x3072xbf16>, vector<3072x64xbf16>, vector<16x64xf32> -> vector<16x64xf32>
    %c0_3 = arith.constant 0 : index
    %c0_4 = arith.constant 0 : index
    %3 = vector.load %arg2[%c0_3, %c0_4] : memref<16x64xf32, #tpu.memory_space<vmem>>, vector<16x64xf32>
    %4 = arith.addf %2, %3 : vector<16x64xf32>
    %c0_5 = arith.constant 0 : index
    %c0_6 = arith.constant 0 : index
    %5 = vector.load %arg3[%c0_5, %c0_6] : memref<8x8xf32, #tpu.memory_space<vmem>>, vector<8x8xf32>
    %cst_7 = arith.constant dense<0.000000e+00> : vector<16xf32>
    %6 = vector.multi_reduction <add>, %4, %cst_7 [1] : vector<16x64xf32> to vector<16xf32>
    %7 = vector.shape_cast %6 : vector<16xf32> to vector<16x1xf32>
    %cst_8 = arith.constant 6.400000e+01 : f32
    %8 = vector.broadcast %cst_8 : f32 to vector<16x1xf32>
    %9 = arith.divf %7, %8 : vector<16x1xf32>
    %10 = vector.broadcast %9 : vector<16x1xf32> to vector<16x64xf32>
    %11 = arith.subf %4, %10 : vector<16x64xf32>
    %12 = arith.mulf %11, %11 : vector<16x64xf32>
    %cst_9 = arith.constant dense<0.000000e+00> : vector<16xf32>
    %13 = vector.multi_reduction <add>, %12, %cst_9 [1] : vector<16x64xf32> to vector<16xf32>
    %14 = vector.shape_cast %13 : vector<16xf32> to vector<16x1xf32>
    %cst_10 = arith.constant 6.400000e+01 : f32
    %15 = vector.broadcast %cst_10 : f32 to vector<16x1xf32>
    %16 = arith.divf %14, %15 : vector<16x1xf32>
    %17 = vector.broadcast %9 : vector<16x1xf32> to vector<16x64xf32>
    %18 = arith.subf %4, %17 : vector<16x64xf32>
    %cst_11 = arith.constant 9.99999997E-7 : f32
    %19 = vector.broadcast %cst_11 : f32 to vector<16x1xf32>
    %20 = arith.addf %16, %19 : vector<16x1xf32>
    %21 = math.rsqrt %20 : vector<16x1xf32>
    %22 = vector.broadcast %21 : vector<16x1xf32> to vector<16x64xf32>
    %23 = arith.mulf %18, %22 : vector<16x64xf32>
    %c0_12 = arith.constant 0 : index
    %c0_13 = arith.constant 0 : index
    %24 = vector.load %arg5[%c0_12, %c0_13] : memref<1x64xf32, #tpu.memory_space<vmem>>, vector<1x64xf32>
    %25 = vector.broadcast %24 : vector<1x64xf32> to vector<16x64xf32>
    %26 = arith.mulf %23, %25 : vector<16x64xf32>
    %c0_14 = arith.constant 0 : index
    %c0_15 = arith.constant 0 : index
    %27 = vector.load %arg6[%c0_14, %c0_15] : memref<1x64xf32, #tpu.memory_space<vmem>>, vector<1x64xf32>
    %28 = vector.broadcast %27 : vector<1x64xf32> to vector<16x64xf32>
    %29 = arith.addf %26, %28 : vector<16x64xf32>
    %30 = arith.truncf %29 : vector<16x64xf32> to vector<16x64xbf16>
    %c0_16 = arith.constant 0 : index
    %c0_17 = arith.constant 0 : index
    %31 = vector.load %arg7[%c0_16, %c0_17] : memref<64x192xbf16, #tpu.memory_space<vmem>>, vector<64x192xbf16>
    %cst_18 = arith.constant dense<0.000000e+00> : vector<16x192xf32>
    %32 = tpu.matmul %30, %31, %cst_18 {dimension_numbers = #tpu.dot_dimension_numbers<[1], [0], [0], [1], [0, 0, 1, 1], [], []>} : vector<16x64xbf16>, vector<64x192xbf16>, vector<16x192xf32> -> vector<16x192xf32>
    %c0_19 = arith.constant 0 : index
    %c0_20 = arith.constant 0 : index
    %33 = vector.load %arg8[%c0_19, %c0_20] : memref<1x192xf32, #tpu.memory_space<vmem>>, vector<1x192xf32>
    %34 = vector.broadcast %33 : vector<1x192xf32> to vector<16x192xf32>
    %35 = arith.addf %32, %34 : vector<16x192xf32>
    %36 = vector.extract_strided_slice %35 {offsets = [0, 0], sizes = [8, 16], strides = [1, 1]} : vector<16x192xf32> to vector<8x16xf32>
    %37 = vector.extract_strided_slice %35 {offsets = [0, 16], sizes = [8, 16], strides = [1, 1]} : vector<16x192xf32> to vector<8x16xf32>
    %38 = vector.extract_strided_slice %35 {offsets = [0, 32], sizes = [8, 16], strides = [1, 1]} : vector<16x192xf32> to vector<8x16xf32>
    %39 = vector.extract_strided_slice %35 {offsets = [0, 48], sizes = [8, 16], strides = [1, 1]} : vector<16x192xf32> to vector<8x16xf32>
    %40 = vector.extract_strided_slice %35 {offsets = [8, 0], sizes = [8, 16], strides = [1, 1]} : vector<16x192xf32> to vector<8x16xf32>
    %41 = vector.extract_strided_slice %35 {offsets = [8, 16], sizes = [8, 16], strides = [1, 1]} : vector<16x192xf32> to vector<8x16xf32>
    %42 = vector.extract_strided_slice %35 {offsets = [8, 32], sizes = [8, 16], strides = [1, 1]} : vector<16x192xf32> to vector<8x16xf32>
    %43 = vector.extract_strided_slice %35 {offsets = [8, 48], sizes = [8, 16], strides = [1, 1]} : vector<16x192xf32> to vector<8x16xf32>
    %44 = vector.shape_cast %36 : vector<8x16xf32> to vector<1x8x16xf32>
    %45 = vector.shape_cast %37 : vector<8x16xf32> to vector<1x8x16xf32>
    %46 = vector.shape_cast %38 : vector<8x16xf32> to vector<1x8x16xf32>
    %47 = vector.shape_cast %39 : vector<8x16xf32> to vector<1x8x16xf32>
    %48 = vector.shape_cast %40 : vector<8x16xf32> to vector<1x8x16xf32>
    %49 = vector.shape_cast %41 : vector<8x16xf32> to vector<1x8x16xf32>
    %50 = vector.shape_cast %42 : vector<8x16xf32> to vector<1x8x16xf32>
    %51 = vector.shape_cast %43 : vector<8x16xf32> to vector<1x8x16xf32>
    %52 = tpu.concatenate %44, %45, %46, %47, %48, %49, %50, %51 in 0 : vector<1x8x16xf32>, vector<1x8x16xf32>, vector<1x8x16xf32>, vector<1x8x16xf32>, vector<1x8x16xf32>, vector<1x8x16xf32>, vector<1x8x16xf32>, vector<1x8x16xf32> -> vector<8x8x16xf32>
    %53 = arith.truncf %52 : vector<8x8x16xf32> to vector<8x8x16xbf16>
    %54 = vector.extract_strided_slice %35 {offsets = [0, 64], sizes = [8, 16], strides = [1, 1]} : vector<16x192xf32> to vector<8x16xf32>
    %55 = vector.extract_strided_slice %35 {offsets = [0, 80], sizes = [8, 16], strides = [1, 1]} : vector<16x192xf32> to vector<8x16xf32>
    %56 = vector.extract_strided_slice %35 {offsets = [0, 96], sizes = [8, 16], strides = [1, 1]} : vector<16x192xf32> to vector<8x16xf32>
    %57 = vector.extract_strided_slice %35 {offsets = [0, 112], sizes = [8, 16], strides = [1, 1]} : vector<16x192xf32> to vector<8x16xf32>
    %58 = vector.extract_strided_slice %35 {offsets = [8, 64], sizes = [8, 16], strides = [1, 1]} : vector<16x192xf32> to vector<8x16xf32>
    %59 = vector.extract_strided_slice %35 {offsets = [8, 80], sizes = [8, 16], strides = [1, 1]} : vector<16x192xf32> to vector<8x16xf32>
    %60 = vector.extract_strided_slice %35 {offsets = [8, 96], sizes = [8, 16], strides = [1, 1]} : vector<16x192xf32> to vector<8x16xf32>
    %61 = vector.extract_strided_slice %35 {offsets = [8, 112], sizes = [8, 16], strides = [1, 1]} : vector<16x192xf32> to vector<8x16xf32>
    %62 = vector.shape_cast %54 : vector<8x16xf32> to vector<1x8x16xf32>
    %63 = vector.shape_cast %55 : vector<8x16xf32> to vector<1x8x16xf32>
    %64 = vector.shape_cast %56 : vector<8x16xf32> to vector<1x8x16xf32>
    %65 = vector.shape_cast %57 : vector<8x16xf32> to vector<1x8x16xf32>
    %66 = vector.shape_cast %58 : vector<8x16xf32> to vector<1x8x16xf32>
    %67 = vector.shape_cast %59 : vector<8x16xf32> to vector<1x8x16xf32>
    %68 = vector.shape_cast %60 : vector<8x16xf32> to vector<1x8x16xf32>
    %69 = vector.shape_cast %61 : vector<8x16xf32> to vector<1x8x16xf32>
    %70 = tpu.concatenate %62, %63, %64, %65, %66, %67, %68, %69 in 0 : vector<1x8x16xf32>, vector<1x8x16xf32>, vector<1x8x16xf32>, vector<1x8x16xf32>, vector<1x8x16xf32>, vector<1x8x16xf32>, vector<1x8x16xf32>, vector<1x8x16xf32> -> vector<8x8x16xf32>
    %71 = arith.truncf %70 : vector<8x8x16xf32> to vector<8x8x16xbf16>
    %72 = vector.extract_strided_slice %35 {offsets = [0, 128], sizes = [8, 16], strides = [1, 1]} : vector<16x192xf32> to vector<8x16xf32>
    %73 = vector.extract_strided_slice %35 {offsets = [0, 144], sizes = [8, 16], strides = [1, 1]} : vector<16x192xf32> to vector<8x16xf32>
    %74 = vector.extract_strided_slice %35 {offsets = [0, 160], sizes = [8, 16], strides = [1, 1]} : vector<16x192xf32> to vector<8x16xf32>
    %75 = vector.extract_strided_slice %35 {offsets = [0, 176], sizes = [8, 16], strides = [1, 1]} : vector<16x192xf32> to vector<8x16xf32>
    %76 = vector.extract_strided_slice %35 {offsets = [8, 128], sizes = [8, 16], strides = [1, 1]} : vector<16x192xf32> to vector<8x16xf32>
    %77 = vector.extract_strided_slice %35 {offsets = [8, 144], sizes = [8, 16], strides = [1, 1]} : vector<16x192xf32> to vector<8x16xf32>
    %78 = vector.extract_strided_slice %35 {offsets = [8, 160], sizes = [8, 16], strides = [1, 1]} : vector<16x192xf32> to vector<8x16xf32>
    %79 = vector.extract_strided_slice %35 {offsets = [8, 176], sizes = [8, 16], strides = [1, 1]} : vector<16x192xf32> to vector<8x16xf32>
    %80 = vector.shape_cast %72 : vector<8x16xf32> to vector<1x8x16xf32>
    %81 = vector.shape_cast %73 : vector<8x16xf32> to vector<1x8x16xf32>
    %82 = vector.shape_cast %74 : vector<8x16xf32> to vector<1x8x16xf32>
    %83 = vector.shape_cast %75 : vector<8x16xf32> to vector<1x8x16xf32>
    %84 = vector.shape_cast %76 : vector<8x16xf32> to vector<1x8x16xf32>
    %85 = vector.shape_cast %77 : vector<8x16xf32> to vector<1x8x16xf32>
    %86 = vector.shape_cast %78 : vector<8x16xf32> to vector<1x8x16xf32>
    %87 = vector.shape_cast %79 : vector<8x16xf32> to vector<1x8x16xf32>
    %88 = tpu.concatenate %80, %81, %82, %83, %84, %85, %86, %87 in 0 : vector<1x8x16xf32>, vector<1x8x16xf32>, vector<1x8x16xf32>, vector<1x8x16xf32>, vector<1x8x16xf32>, vector<1x8x16xf32>, vector<1x8x16xf32>, vector<1x8x16xf32> -> vector<8x8x16xf32>
    %89 = arith.truncf %88 : vector<8x8x16xf32> to vector<8x8x16xbf16>
    "tpu.trace_start"() <{level = 10 : i32, message = "bqd,bkd->bqk"}> : () -> ()
    %cst_21 = arith.constant dense<0.000000e+00> : vector<8x8x8xf32>
    %90 = tpu.matmul %53, %71, %cst_21 {dimension_numbers = #tpu.dot_dimension_numbers<[2], [2], [1], [1], [0, 0, 0, 1, 1, 1], [0], [0]>} : vector<8x8x16xbf16>, vector<8x8x16xbf16>, vector<8x8x8xf32> -> vector<8x8x8xf32>
    "tpu.trace_stop"() : () -> ()
    %cst_22 = arith.constant 2.500000e-01 : f32
    %91 = vector.broadcast %cst_22 : f32 to vector<8x8x8xf32>
    %92 = arith.mulf %90, %91 : vector<8x8x8xf32>
    %93 = vector.shape_cast %5 : vector<8x8xf32> to vector<1x8x8xf32>
    %94 = vector.broadcast %93 : vector<1x8x8xf32> to vector<8x8x8xf32>
    %95 = arith.addf %92, %94 : vector<8x8x8xf32>
    %cst_23 = arith.constant dense<0xFF800000> : vector<8x8xf32>
    %96 = vector.multi_reduction <maximumf>, %95, %cst_23 [2] : vector<8x8x8xf32> to vector<8x8xf32>
    %97 = vector.shape_cast %96 : vector<8x8xf32> to vector<8x8x1xf32>
    %98 = vector.broadcast %97 : vector<8x8x1xf32> to vector<8x8x8xf32>
    %99 = arith.subf %95, %98 : vector<8x8x8xf32>
    %100 = math.exp %99 : vector<8x8x8xf32>
    %cst_24 = arith.constant dense<0.000000e+00> : vector<8x8xf32>
    %101 = vector.multi_reduction <add>, %100, %cst_24 [2] : vector<8x8x8xf32> to vector<8x8xf32>
    %102 = vector.shape_cast %101 : vector<8x8xf32> to vector<8x8x1xf32>
    %103 = tpu.reciprocal %102 {approx = true} : vector<8x8x1xf32> -> vector<8x8x1xf32>
    %104 = vector.broadcast %103 : vector<8x8x1xf32> to vector<8x8x8xf32>
    %105 = arith.mulf %100, %104 : vector<8x8x8xf32>
    %106 = arith.truncf %105 : vector<8x8x8xf32> to vector<8x8x8xbf16>
    "tpu.trace_start"() <{level = 10 : i32, message = "bqk,bkd->bqd"}> : () -> ()
    %cst_25 = arith.constant dense<0.000000e+00> : vector<8x8x16xf32>
    %107 = tpu.matmul %106, %89, %cst_25 {dimension_numbers = #tpu.dot_dimension_numbers<[2], [1], [1], [2], [0, 0, 0, 1, 1, 2], [0], [0]>} : vector<8x8x8xbf16>, vector<8x8x16xbf16>, vector<8x8x16xf32> -> vector<8x8x16xf32>
    "tpu.trace_stop"() : () -> ()
    %108 = vector.extract_strided_slice %107 {offsets = [0, 0, 0], sizes = [1, 8, 16], strides = [1, 1, 1]} : vector<8x8x16xf32> to vector<1x8x16xf32>
    %109 = vector.shape_cast %108 : vector<1x8x16xf32> to vector<8x16xf32>
    %110 = vector.extract_strided_slice %107 {offsets = [1, 0, 0], sizes = [1, 8, 16], strides = [1, 1, 1]} : vector<8x8x16xf32> to vector<1x8x16xf32>
    %111 = vector.shape_cast %110 : vector<1x8x16xf32> to vector<8x16xf32>
    %112 = vector.extract_strided_slice %107 {offsets = [2, 0, 0], sizes = [1, 8, 16], strides = [1, 1, 1]} : vector<8x8x16xf32> to vector<1x8x16xf32>
    %113 = vector.shape_cast %112 : vector<1x8x16xf32> to vector<8x16xf32>
    %114 = vector.extract_strided_slice %107 {offsets = [3, 0, 0], sizes = [1, 8, 16], strides = [1, 1, 1]} : vector<8x8x16xf32> to vector<1x8x16xf32>
    %115 = vector.shape_cast %114 : vector<1x8x16xf32> to vector<8x16xf32>
    %116 = tpu.concatenate %109, %111, %113, %115 in 1 : vector<8x16xf32>, vector<8x16xf32>, vector<8x16xf32>, vector<8x16xf32> -> vector<8x64xf32>
    %117 = vector.extract_strided_slice %107 {offsets = [4, 0, 0], sizes = [1, 8, 16], strides = [1, 1, 1]} : vector<8x8x16xf32> to vector<1x8x16xf32>
    %118 = vector.shape_cast %117 : vector<1x8x16xf32> to vector<8x16xf32>
    %119 = vector.extract_strided_slice %107 {offsets = [5, 0, 0], sizes = [1, 8, 16], strides = [1, 1, 1]} : vector<8x8x16xf32> to vector<1x8x16xf32>
    %120 = vector.shape_cast %119 : vector<1x8x16xf32> to vector<8x16xf32>
    %121 = vector.extract_strided_slice %107 {offsets = [6, 0, 0], sizes = [1, 8, 16], strides = [1, 1, 1]} : vector<8x8x16xf32> to vector<1x8x16xf32>
    %122 = vector.shape_cast %121 : vector<1x8x16xf32> to vector<8x16xf32>
    %123 = vector.extract_strided_slice %107 {offsets = [7, 0, 0], sizes = [1, 8, 16], strides = [1, 1, 1]} : vector<8x8x16xf32> to vector<1x8x16xf32>
    %124 = vector.shape_cast %123 : vector<1x8x16xf32> to vector<8x16xf32>
    %125 = tpu.concatenate %118, %120, %122, %124 in 1 : vector<8x16xf32>, vector<8x16xf32>, vector<8x16xf32>, vector<8x16xf32> -> vector<8x64xf32>
    %126 = tpu.concatenate %116, %125 in 0 : vector<8x64xf32>, vector<8x64xf32> -> vector<16x64xf32>
    %127 = arith.truncf %126 : vector<16x64xf32> to vector<16x64xbf16>
    %c0_26 = arith.constant 0 : index
    %c0_27 = arith.constant 0 : index
    %128 = vector.load %arg9[%c0_26, %c0_27] : memref<64x64xbf16, #tpu.memory_space<vmem>>, vector<64x64xbf16>
    %cst_28 = arith.constant dense<0.000000e+00> : vector<16x64xf32>
    %129 = tpu.matmul %127, %128, %cst_28 {dimension_numbers = #tpu.dot_dimension_numbers<[1], [0], [0], [1], [0, 0, 1, 1], [], []>} : vector<16x64xbf16>, vector<64x64xbf16>, vector<16x64xf32> -> vector<16x64xf32>
    %c0_29 = arith.constant 0 : index
    %c0_30 = arith.constant 0 : index
    %130 = vector.load %arg10[%c0_29, %c0_30] : memref<1x64xf32, #tpu.memory_space<vmem>>, vector<1x64xf32>
    %131 = vector.broadcast %130 : vector<1x64xf32> to vector<16x64xf32>
    %132 = arith.addf %129, %131 : vector<16x64xf32>
    %133 = arith.addf %4, %132 : vector<16x64xf32>
    %cst_31 = arith.constant dense<0.000000e+00> : vector<16xf32>
    %134 = vector.multi_reduction <add>, %133, %cst_31 [1] : vector<16x64xf32> to vector<16xf32>
    %135 = vector.shape_cast %134 : vector<16xf32> to vector<16x1xf32>
    %cst_32 = arith.constant 6.400000e+01 : f32
    %136 = vector.broadcast %cst_32 : f32 to vector<16x1xf32>
    %137 = arith.divf %135, %136 : vector<16x1xf32>
    %138 = vector.broadcast %137 : vector<16x1xf32> to vector<16x64xf32>
    %139 = arith.subf %133, %138 : vector<16x64xf32>
    %140 = arith.mulf %139, %139 : vector<16x64xf32>
    %cst_33 = arith.constant dense<0.000000e+00> : vector<16xf32>
    %141 = vector.multi_reduction <add>, %140, %cst_33 [1] : vector<16x64xf32> to vector<16xf32>
    %142 = vector.shape_cast %141 : vector<16xf32> to vector<16x1xf32>
    %cst_34 = arith.constant 6.400000e+01 : f32
    %143 = vector.broadcast %cst_34 : f32 to vector<16x1xf32>
    %144 = arith.divf %142, %143 : vector<16x1xf32>
    %145 = vector.broadcast %137 : vector<16x1xf32> to vector<16x64xf32>
    %146 = arith.subf %133, %145 : vector<16x64xf32>
    %cst_35 = arith.constant 9.99999997E-7 : f32
    %147 = vector.broadcast %cst_35 : f32 to vector<16x1xf32>
    %148 = arith.addf %144, %147 : vector<16x1xf32>
    %149 = math.rsqrt %148 : vector<16x1xf32>
    %150 = vector.broadcast %149 : vector<16x1xf32> to vector<16x64xf32>
    %151 = arith.mulf %146, %150 : vector<16x64xf32>
    %c0_36 = arith.constant 0 : index
    %c0_37 = arith.constant 0 : index
    %152 = vector.load %arg11[%c0_36, %c0_37] : memref<1x64xf32, #tpu.memory_space<vmem>>, vector<1x64xf32>
    %153 = vector.broadcast %152 : vector<1x64xf32> to vector<16x64xf32>
    %154 = arith.mulf %151, %153 : vector<16x64xf32>
    %c0_38 = arith.constant 0 : index
    %c0_39 = arith.constant 0 : index
    %155 = vector.load %arg12[%c0_38, %c0_39] : memref<1x64xf32, #tpu.memory_space<vmem>>, vector<1x64xf32>
    %156 = vector.broadcast %155 : vector<1x64xf32> to vector<16x64xf32>
    %157 = arith.addf %154, %156 : vector<16x64xf32>
    %158 = arith.truncf %157 : vector<16x64xf32> to vector<16x64xbf16>
    %c0_40 = arith.constant 0 : index
    %c0_41 = arith.constant 0 : index
    %159 = vector.load %arg13[%c0_40, %c0_41] : memref<64x256xbf16, #tpu.memory_space<vmem>>, vector<64x256xbf16>
    %cst_42 = arith.constant dense<0.000000e+00> : vector<16x256xf32>
    %160 = tpu.matmul %158, %159, %cst_42 {dimension_numbers = #tpu.dot_dimension_numbers<[1], [0], [0], [1], [0, 0, 1, 1], [], []>} : vector<16x64xbf16>, vector<64x256xbf16>, vector<16x256xf32> -> vector<16x256xf32>
    %c0_43 = arith.constant 0 : index
    %c0_44 = arith.constant 0 : index
    %161 = vector.load %arg14[%c0_43, %c0_44] : memref<1x256xf32, #tpu.memory_space<vmem>>, vector<1x256xf32>
    %162 = vector.broadcast %161 : vector<1x256xf32> to vector<16x256xf32>
    %163 = arith.addf %160, %162 : vector<16x256xf32>
    %164 = arith.mulf %163, %163 : vector<16x256xf32>
    %165 = arith.mulf %163, %164 : vector<16x256xf32>
    %cst_45 = arith.constant 4.471500e-02 : f32
    %166 = vector.broadcast %cst_45 : f32 to vector<16x256xf32>
    %167 = arith.mulf %166, %165 : vector<16x256xf32>
    %168 = arith.addf %163, %167 : vector<16x256xf32>
    %cst_46 = arith.constant 0.797884583 : f32
    %169 = vector.broadcast %cst_46 : f32 to vector<16x256xf32>
    %170 = arith.mulf %169, %168 : vector<16x256xf32>
    %171 = math.tanh %170 : vector<16x256xf32>
    %cst_47 = arith.constant 1.000000e+00 : f32
    %172 = vector.broadcast %cst_47 : f32 to vector<16x256xf32>
    %173 = arith.addf %172, %171 : vector<16x256xf32>
    %cst_48 = arith.constant 5.000000e-01 : f32
    %174 = vector.broadcast %cst_48 : f32 to vector<16x256xf32>
    %175 = arith.mulf %174, %173 : vector<16x256xf32>
    %176 = arith.mulf %163, %175 : vector<16x256xf32>
    %177 = arith.truncf %176 : vector<16x256xf32> to vector<16x256xbf16>
    %c0_49 = arith.constant 0 : index
    %c0_50 = arith.constant 0 : index
    %178 = vector.load %arg15[%c0_49, %c0_50] : memref<256x64xbf16, #tpu.memory_space<vmem>>, vector<256x64xbf16>
    %cst_51 = arith.constant dense<0.000000e+00> : vector<16x64xf32>
    %179 = tpu.matmul %177, %178, %cst_51 {dimension_numbers = #tpu.dot_dimension_numbers<[1], [0], [0], [1], [0, 0, 1, 1], [], []>} : vector<16x256xbf16>, vector<256x64xbf16>, vector<16x64xf32> -> vector<16x64xf32>
    %c0_52 = arith.constant 0 : index
    %c0_53 = arith.constant 0 : index
    %180 = vector.load %arg16[%c0_52, %c0_53] : memref<1x64xf32, #tpu.memory_space<vmem>>, vector<1x64xf32>
    %181 = vector.broadcast %180 : vector<1x64xf32> to vector<16x64xf32>
    %182 = arith.addf %179, %181 : vector<16x64xf32>
    %183 = arith.addf %133, %182 : vector<16x64xf32>
    %cst_54 = arith.constant dense<0.000000e+00> : vector<16xf32>
    %184 = vector.multi_reduction <add>, %183, %cst_54 [1] : vector<16x64xf32> to vector<16xf32>
    %185 = vector.shape_cast %184 : vector<16xf32> to vector<16x1xf32>
    %cst_55 = arith.constant 6.400000e+01 : f32
    %186 = vector.broadcast %cst_55 : f32 to vector<16x1xf32>
    %187 = arith.divf %185, %186 : vector<16x1xf32>
    %188 = vector.broadcast %187 : vector<16x1xf32> to vector<16x64xf32>
    %189 = arith.subf %183, %188 : vector<16x64xf32>
    %190 = arith.mulf %189, %189 : vector<16x64xf32>
    %cst_56 = arith.constant dense<0.000000e+00> : vector<16xf32>
    %191 = vector.multi_reduction <add>, %190, %cst_56 [1] : vector<16x64xf32> to vector<16xf32>
    %192 = vector.shape_cast %191 : vector<16xf32> to vector<16x1xf32>
    %cst_57 = arith.constant 6.400000e+01 : f32
    %193 = vector.broadcast %cst_57 : f32 to vector<16x1xf32>
    %194 = arith.divf %192, %193 : vector<16x1xf32>
    %195 = vector.broadcast %187 : vector<16x1xf32> to vector<16x64xf32>
    %196 = arith.subf %183, %195 : vector<16x64xf32>
    %cst_58 = arith.constant 9.99999997E-7 : f32
    %197 = vector.broadcast %cst_58 : f32 to vector<16x1xf32>
    %198 = arith.addf %194, %197 : vector<16x1xf32>
    %199 = math.rsqrt %198 : vector<16x1xf32>
    %200 = vector.broadcast %199 : vector<16x1xf32> to vector<16x64xf32>
    %201 = arith.mulf %196, %200 : vector<16x64xf32>
    %c0_59 = arith.constant 0 : index
    %c0_60 = arith.constant 0 : index
    %202 = vector.load %arg17[%c0_59, %c0_60] : memref<1x64xf32, #tpu.memory_space<vmem>>, vector<1x64xf32>
    %203 = vector.broadcast %202 : vector<1x64xf32> to vector<16x64xf32>
    %204 = arith.mulf %201, %203 : vector<16x64xf32>
    %c0_61 = arith.constant 0 : index
    %c0_62 = arith.constant 0 : index
    %205 = vector.load %arg18[%c0_61, %c0_62] : memref<1x64xf32, #tpu.memory_space<vmem>>, vector<1x64xf32>
    %206 = vector.broadcast %205 : vector<1x64xf32> to vector<16x64xf32>
    %207 = arith.addf %204, %206 : vector<16x64xf32>
    %208 = arith.truncf %207 : vector<16x64xf32> to vector<16x64xbf16>
    %c0_63 = arith.constant 0 : index
    %c0_64 = arith.constant 0 : index
    %209 = vector.load %arg19[%c0_63, %c0_64] : memref<64x192xbf16, #tpu.memory_space<vmem>>, vector<64x192xbf16>
    %cst_65 = arith.constant dense<0.000000e+00> : vector<16x192xf32>
    %210 = tpu.matmul %208, %209, %cst_65 {dimension_numbers = #tpu.dot_dimension_numbers<[1], [0], [0], [1], [0, 0, 1, 1], [], []>} : vector<16x64xbf16>, vector<64x192xbf16>, vector<16x192xf32> -> vector<16x192xf32>
    %c0_66 = arith.constant 0 : index
    %c0_67 = arith.constant 0 : index
    %211 = vector.load %arg20[%c0_66, %c0_67] : memref<1x192xf32, #tpu.memory_space<vmem>>, vector<1x192xf32>
    %212 = vector.broadcast %211 : vector<1x192xf32> to vector<16x192xf32>
    %213 = arith.addf %210, %212 : vector<16x192xf32>
    %214 = vector.extract_strided_slice %213 {offsets = [0, 0], sizes = [8, 16], strides = [1, 1]} : vector<16x192xf32> to vector<8x16xf32>
    %215 = vector.extract_strided_slice %213 {offsets = [0, 16], sizes = [8, 16], strides = [1, 1]} : vector<16x192xf32> to vector<8x16xf32>
    %216 = vector.extract_strided_slice %213 {offsets = [0, 32], sizes = [8, 16], strides = [1, 1]} : vector<16x192xf32> to vector<8x16xf32>
    %217 = vector.extract_strided_slice %213 {offsets = [0, 48], sizes = [8, 16], strides = [1, 1]} : vector<16x192xf32> to vector<8x16xf32>
    %218 = vector.extract_strided_slice %213 {offsets = [8, 0], sizes = [8, 16], strides = [1, 1]} : vector<16x192xf32> to vector<8x16xf32>
    %219 = vector.extract_strided_slice %213 {offsets = [8, 16], sizes = [8, 16], strides = [1, 1]} : vector<16x192xf32> to vector<8x16xf32>
    %220 = vector.extract_strided_slice %213 {offsets = [8, 32], sizes = [8, 16], strides = [1, 1]} : vector<16x192xf32> to vector<8x16xf32>
    %221 = vector.extract_strided_slice %213 {offsets = [8, 48], sizes = [8, 16], strides = [1, 1]} : vector<16x192xf32> to vector<8x16xf32>
    %222 = vector.shape_cast %214 : vector<8x16xf32> to vector<1x8x16xf32>
    %223 = vector.shape_cast %215 : vector<8x16xf32> to vector<1x8x16xf32>
    %224 = vector.shape_cast %216 : vector<8x16xf32> to vector<1x8x16xf32>
    %225 = vector.shape_cast %217 : vector<8x16xf32> to vector<1x8x16xf32>
    %226 = vector.shape_cast %218 : vector<8x16xf32> to vector<1x8x16xf32>
    %227 = vector.shape_cast %219 : vector<8x16xf32> to vector<1x8x16xf32>
    %228 = vector.shape_cast %220 : vector<8x16xf32> to vector<1x8x16xf32>
    %229 = vector.shape_cast %221 : vector<8x16xf32> to vector<1x8x16xf32>
    %230 = tpu.concatenate %222, %223, %224, %225, %226, %227, %228, %229 in 0 : vector<1x8x16xf32>, vector<1x8x16xf32>, vector<1x8x16xf32>, vector<1x8x16xf32>, vector<1x8x16xf32>, vector<1x8x16xf32>, vector<1x8x16xf32>, vector<1x8x16xf32> -> vector<8x8x16xf32>
    %231 = arith.truncf %230 : vector<8x8x16xf32> to vector<8x8x16xbf16>
    %232 = vector.extract_strided_slice %213 {offsets = [0, 64], sizes = [8, 16], strides = [1, 1]} : vector<16x192xf32> to vector<8x16xf32>
    %233 = vector.extract_strided_slice %213 {offsets = [0, 80], sizes = [8, 16], strides = [1, 1]} : vector<16x192xf32> to vector<8x16xf32>
    %234 = vector.extract_strided_slice %213 {offsets = [0, 96], sizes = [8, 16], strides = [1, 1]} : vector<16x192xf32> to vector<8x16xf32>
    %235 = vector.extract_strided_slice %213 {offsets = [0, 112], sizes = [8, 16], strides = [1, 1]} : vector<16x192xf32> to vector<8x16xf32>
    %236 = vector.extract_strided_slice %213 {offsets = [8, 64], sizes = [8, 16], strides = [1, 1]} : vector<16x192xf32> to vector<8x16xf32>
    %237 = vector.extract_strided_slice %213 {offsets = [8, 80], sizes = [8, 16], strides = [1, 1]} : vector<16x192xf32> to vector<8x16xf32>
    %238 = vector.extract_strided_slice %213 {offsets = [8, 96], sizes = [8, 16], strides = [1, 1]} : vector<16x192xf32> to vector<8x16xf32>
    %239 = vector.extract_strided_slice %213 {offsets = [8, 112], sizes = [8, 16], strides = [1, 1]} : vector<16x192xf32> to vector<8x16xf32>
    %240 = vector.shape_cast %232 : vector<8x16xf32> to vector<1x8x16xf32>
    %241 = vector.shape_cast %233 : vector<8x16xf32> to vector<1x8x16xf32>
    %242 = vector.shape_cast %234 : vector<8x16xf32> to vector<1x8x16xf32>
    %243 = vector.shape_cast %235 : vector<8x16xf32> to vector<1x8x16xf32>
    %244 = vector.shape_cast %236 : vector<8x16xf32> to vector<1x8x16xf32>
    %245 = vector.shape_cast %237 : vector<8x16xf32> to vector<1x8x16xf32>
    %246 = vector.shape_cast %238 : vector<8x16xf32> to vector<1x8x16xf32>
    %247 = vector.shape_cast %239 : vector<8x16xf32> to vector<1x8x16xf32>
    %248 = tpu.concatenate %240, %241, %242, %243, %244, %245, %246, %247 in 0 : vector<1x8x16xf32>, vector<1x8x16xf32>, vector<1x8x16xf32>, vector<1x8x16xf32>, vector<1x8x16xf32>, vector<1x8x16xf32>, vector<1x8x16xf32>, vector<1x8x16xf32> -> vector<8x8x16xf32>
    %249 = arith.truncf %248 : vector<8x8x16xf32> to vector<8x8x16xbf16>
    %250 = vector.extract_strided_slice %213 {offsets = [0, 128], sizes = [8, 16], strides = [1, 1]} : vector<16x192xf32> to vector<8x16xf32>
    %251 = vector.extract_strided_slice %213 {offsets = [0, 144], sizes = [8, 16], strides = [1, 1]} : vector<16x192xf32> to vector<8x16xf32>
    %252 = vector.extract_strided_slice %213 {offsets = [0, 160], sizes = [8, 16], strides = [1, 1]} : vector<16x192xf32> to vector<8x16xf32>
    %253 = vector.extract_strided_slice %213 {offsets = [0, 176], sizes = [8, 16], strides = [1, 1]} : vector<16x192xf32> to vector<8x16xf32>
    %254 = vector.extract_strided_slice %213 {offsets = [8, 128], sizes = [8, 16], strides = [1, 1]} : vector<16x192xf32> to vector<8x16xf32>
    %255 = vector.extract_strided_slice %213 {offsets = [8, 144], sizes = [8, 16], strides = [1, 1]} : vector<16x192xf32> to vector<8x16xf32>
    %256 = vector.extract_strided_slice %213 {offsets = [8, 160], sizes = [8, 16], strides = [1, 1]} : vector<16x192xf32> to vector<8x16xf32>
    %257 = vector.extract_strided_slice %213 {offsets = [8, 176], sizes = [8, 16], strides = [1, 1]} : vector<16x192xf32> to vector<8x16xf32>
    %258 = vector.shape_cast %250 : vector<8x16xf32> to vector<1x8x16xf32>
    %259 = vector.shape_cast %251 : vector<8x16xf32> to vector<1x8x16xf32>
    %260 = vector.shape_cast %252 : vector<8x16xf32> to vector<1x8x16xf32>
    %261 = vector.shape_cast %253 : vector<8x16xf32> to vector<1x8x16xf32>
    %262 = vector.shape_cast %254 : vector<8x16xf32> to vector<1x8x16xf32>
    %263 = vector.shape_cast %255 : vector<8x16xf32> to vector<1x8x16xf32>
    %264 = vector.shape_cast %256 : vector<8x16xf32> to vector<1x8x16xf32>
    %265 = vector.shape_cast %257 : vector<8x16xf32> to vector<1x8x16xf32>
    %266 = tpu.concatenate %258, %259, %260, %261, %262, %263, %264, %265 in 0 : vector<1x8x16xf32>, vector<1x8x16xf32>, vector<1x8x16xf32>, vector<1x8x16xf32>, vector<1x8x16xf32>, vector<1x8x16xf32>, vector<1x8x16xf32>, vector<1x8x16xf32> -> vector<8x8x16xf32>
    %267 = arith.truncf %266 : vector<8x8x16xf32> to vector<8x8x16xbf16>
    "tpu.trace_start"() <{level = 10 : i32, message = "bqd,bkd->bqk"}> : () -> ()
    %cst_68 = arith.constant dense<0.000000e+00> : vector<8x8x8xf32>
    %268 = tpu.matmul %231, %249, %cst_68 {dimension_numbers = #tpu.dot_dimension_numbers<[2], [2], [1], [1], [0, 0, 0, 1, 1, 1], [0], [0]>} : vector<8x8x16xbf16>, vector<8x8x16xbf16>, vector<8x8x8xf32> -> vector<8x8x8xf32>
    "tpu.trace_stop"() : () -> ()
    %cst_69 = arith.constant 2.500000e-01 : f32
    %269 = vector.broadcast %cst_69 : f32 to vector<8x8x8xf32>
    %270 = arith.mulf %268, %269 : vector<8x8x8xf32>
    %271 = vector.shape_cast %5 : vector<8x8xf32> to vector<1x8x8xf32>
    %272 = vector.broadcast %271 : vector<1x8x8xf32> to vector<8x8x8xf32>
    %273 = arith.addf %270, %272 : vector<8x8x8xf32>
    %cst_70 = arith.constant dense<0xFF800000> : vector<8x8xf32>
    %274 = vector.multi_reduction <maximumf>, %273, %cst_70 [2] : vector<8x8x8xf32> to vector<8x8xf32>
    %275 = vector.shape_cast %274 : vector<8x8xf32> to vector<8x8x1xf32>
    %276 = vector.broadcast %275 : vector<8x8x1xf32> to vector<8x8x8xf32>
    %277 = arith.subf %273, %276 : vector<8x8x8xf32>
    %278 = math.exp %277 : vector<8x8x8xf32>
    %cst_71 = arith.constant dense<0.000000e+00> : vector<8x8xf32>
    %279 = vector.multi_reduction <add>, %278, %cst_71 [2] : vector<8x8x8xf32> to vector<8x8xf32>
    %280 = vector.shape_cast %279 : vector<8x8xf32> to vector<8x8x1xf32>
    %281 = tpu.reciprocal %280 {approx = true} : vector<8x8x1xf32> -> vector<8x8x1xf32>
    %282 = vector.broadcast %281 : vector<8x8x1xf32> to vector<8x8x8xf32>
    %283 = arith.mulf %278, %282 : vector<8x8x8xf32>
    %284 = arith.truncf %283 : vector<8x8x8xf32> to vector<8x8x8xbf16>
    "tpu.trace_start"() <{level = 10 : i32, message = "bqk,bkd->bqd"}> : () -> ()
    %cst_72 = arith.constant dense<0.000000e+00> : vector<8x8x16xf32>
    %285 = tpu.matmul %284, %267, %cst_72 {dimension_numbers = #tpu.dot_dimension_numbers<[2], [1], [1], [2], [0, 0, 0, 1, 1, 2], [0], [0]>} : vector<8x8x8xbf16>, vector<8x8x16xbf16>, vector<8x8x16xf32> -> vector<8x8x16xf32>
    "tpu.trace_stop"() : () -> ()
    %286 = vector.extract_strided_slice %285 {offsets = [0, 0, 0], sizes = [1, 8, 16], strides = [1, 1, 1]} : vector<8x8x16xf32> to vector<1x8x16xf32>
    %287 = vector.shape_cast %286 : vector<1x8x16xf32> to vector<8x16xf32>
    %288 = vector.extract_strided_slice %285 {offsets = [1, 0, 0], sizes = [1, 8, 16], strides = [1, 1, 1]} : vector<8x8x16xf32> to vector<1x8x16xf32>
    %289 = vector.shape_cast %288 : vector<1x8x16xf32> to vector<8x16xf32>
    %290 = vector.extract_strided_slice %285 {offsets = [2, 0, 0], sizes = [1, 8, 16], strides = [1, 1, 1]} : vector<8x8x16xf32> to vector<1x8x16xf32>
    %291 = vector.shape_cast %290 : vector<1x8x16xf32> to vector<8x16xf32>
    %292 = vector.extract_strided_slice %285 {offsets = [3, 0, 0], sizes = [1, 8, 16], strides = [1, 1, 1]} : vector<8x8x16xf32> to vector<1x8x16xf32>
    %293 = vector.shape_cast %292 : vector<1x8x16xf32> to vector<8x16xf32>
    %294 = tpu.concatenate %287, %289, %291, %293 in 1 : vector<8x16xf32>, vector<8x16xf32>, vector<8x16xf32>, vector<8x16xf32> -> vector<8x64xf32>
    %295 = vector.extract_strided_slice %285 {offsets = [4, 0, 0], sizes = [1, 8, 16], strides = [1, 1, 1]} : vector<8x8x16xf32> to vector<1x8x16xf32>
    %296 = vector.shape_cast %295 : vector<1x8x16xf32> to vector<8x16xf32>
    %297 = vector.extract_strided_slice %285 {offsets = [5, 0, 0], sizes = [1, 8, 16], strides = [1, 1, 1]} : vector<8x8x16xf32> to vector<1x8x16xf32>
    %298 = vector.shape_cast %297 : vector<1x8x16xf32> to vector<8x16xf32>
    %299 = vector.extract_strided_slice %285 {offsets = [6, 0, 0], sizes = [1, 8, 16], strides = [1, 1, 1]} : vector<8x8x16xf32> to vector<1x8x16xf32>
    %300 = vector.shape_cast %299 : vector<1x8x16xf32> to vector<8x16xf32>
    %301 = vector.extract_strided_slice %285 {offsets = [7, 0, 0], sizes = [1, 8, 16], strides = [1, 1, 1]} : vector<8x8x16xf32> to vector<1x8x16xf32>
    %302 = vector.shape_cast %301 : vector<1x8x16xf32> to vector<8x16xf32>
    %303 = tpu.concatenate %296, %298, %300, %302 in 1 : vector<8x16xf32>, vector<8x16xf32>, vector<8x16xf32>, vector<8x16xf32> -> vector<8x64xf32>
    %304 = tpu.concatenate %294, %303 in 0 : vector<8x64xf32>, vector<8x64xf32> -> vector<16x64xf32>
    %305 = arith.truncf %304 : vector<16x64xf32> to vector<16x64xbf16>
    %c0_73 = arith.constant 0 : index
    %c0_74 = arith.constant 0 : index
    %306 = vector.load %arg21[%c0_73, %c0_74] : memref<64x64xbf16, #tpu.memory_space<vmem>>, vector<64x64xbf16>
    %cst_75 = arith.constant dense<0.000000e+00> : vector<16x64xf32>
    %307 = tpu.matmul %305, %306, %cst_75 {dimension_numbers = #tpu.dot_dimension_numbers<[1], [0], [0], [1], [0, 0, 1, 1], [], []>} : vector<16x64xbf16>, vector<64x64xbf16>, vector<16x64xf32> -> vector<16x64xf32>
    %c0_76 = arith.constant 0 : index
    %c0_77 = arith.constant 0 : index
    %308 = vector.load %arg22[%c0_76, %c0_77] : memref<1x64xf32, #tpu.memory_space<vmem>>, vector<1x64xf32>
    %309 = vector.broadcast %308 : vector<1x64xf32> to vector<16x64xf32>
    %310 = arith.addf %307, %309 : vector<16x64xf32>
    %311 = arith.addf %183, %310 : vector<16x64xf32>
    %cst_78 = arith.constant dense<0.000000e+00> : vector<16xf32>
    %312 = vector.multi_reduction <add>, %311, %cst_78 [1] : vector<16x64xf32> to vector<16xf32>
    %313 = vector.shape_cast %312 : vector<16xf32> to vector<16x1xf32>
    %cst_79 = arith.constant 6.400000e+01 : f32
    %314 = vector.broadcast %cst_79 : f32 to vector<16x1xf32>
    %315 = arith.divf %313, %314 : vector<16x1xf32>
    %316 = vector.broadcast %315 : vector<16x1xf32> to vector<16x64xf32>
    %317 = arith.subf %311, %316 : vector<16x64xf32>
    %318 = arith.mulf %317, %317 : vector<16x64xf32>
    %cst_80 = arith.constant dense<0.000000e+00> : vector<16xf32>
    %319 = vector.multi_reduction <add>, %318, %cst_80 [1] : vector<16x64xf32> to vector<16xf32>
    %320 = vector.shape_cast %319 : vector<16xf32> to vector<16x1xf32>
    %cst_81 = arith.constant 6.400000e+01 : f32
    %321 = vector.broadcast %cst_81 : f32 to vector<16x1xf32>
    %322 = arith.divf %320, %321 : vector<16x1xf32>
    %323 = vector.broadcast %315 : vector<16x1xf32> to vector<16x64xf32>
    %324 = arith.subf %311, %323 : vector<16x64xf32>
    %cst_82 = arith.constant 9.99999997E-7 : f32
    %325 = vector.broadcast %cst_82 : f32 to vector<16x1xf32>
    %326 = arith.addf %322, %325 : vector<16x1xf32>
    %327 = math.rsqrt %326 : vector<16x1xf32>
    %328 = vector.broadcast %327 : vector<16x1xf32> to vector<16x64xf32>
    %329 = arith.mulf %324, %328 : vector<16x64xf32>
    %c0_83 = arith.constant 0 : index
    %c0_84 = arith.constant 0 : index
    %330 = vector.load %arg23[%c0_83, %c0_84] : memref<1x64xf32, #tpu.memory_space<vmem>>, vector<1x64xf32>
    %331 = vector.broadcast %330 : vector<1x64xf32> to vector<16x64xf32>
    %332 = arith.mulf %329, %331 : vector<16x64xf32>
    %c0_85 = arith.constant 0 : index
    %c0_86 = arith.constant 0 : index
    %333 = vector.load %arg24[%c0_85, %c0_86] : memref<1x64xf32, #tpu.memory_space<vmem>>, vector<1x64xf32>
    %334 = vector.broadcast %333 : vector<1x64xf32> to vector<16x64xf32>
    %335 = arith.addf %332, %334 : vector<16x64xf32>
    %336 = arith.truncf %335 : vector<16x64xf32> to vector<16x64xbf16>
    %c0_87 = arith.constant 0 : index
    %c0_88 = arith.constant 0 : index
    %337 = vector.load %arg25[%c0_87, %c0_88] : memref<64x256xbf16, #tpu.memory_space<vmem>>, vector<64x256xbf16>
    %cst_89 = arith.constant dense<0.000000e+00> : vector<16x256xf32>
    %338 = tpu.matmul %336, %337, %cst_89 {dimension_numbers = #tpu.dot_dimension_numbers<[1], [0], [0], [1], [0, 0, 1, 1], [], []>} : vector<16x64xbf16>, vector<64x256xbf16>, vector<16x256xf32> -> vector<16x256xf32>
    %c0_90 = arith.constant 0 : index
    %c0_91 = arith.constant 0 : index
    %339 = vector.load %arg26[%c0_90, %c0_91] : memref<1x256xf32, #tpu.memory_space<vmem>>, vector<1x256xf32>
    %340 = vector.broadcast %339 : vector<1x256xf32> to vector<16x256xf32>
    %341 = arith.addf %338, %340 : vector<16x256xf32>
    %342 = arith.mulf %341, %341 : vector<16x256xf32>
    %343 = arith.mulf %341, %342 : vector<16x256xf32>
    %cst_92 = arith.constant 4.471500e-02 : f32
    %344 = vector.broadcast %cst_92 : f32 to vector<16x256xf32>
    %345 = arith.mulf %344, %343 : vector<16x256xf32>
    %346 = arith.addf %341, %345 : vector<16x256xf32>
    %cst_93 = arith.constant 0.797884583 : f32
    %347 = vector.broadcast %cst_93 : f32 to vector<16x256xf32>
    %348 = arith.mulf %347, %346 : vector<16x256xf32>
    %349 = math.tanh %348 : vector<16x256xf32>
    %cst_94 = arith.constant 1.000000e+00 : f32
    %350 = vector.broadcast %cst_94 : f32 to vector<16x256xf32>
    %351 = arith.addf %350, %349 : vector<16x256xf32>
    %cst_95 = arith.constant 5.000000e-01 : f32
    %352 = vector.broadcast %cst_95 : f32 to vector<16x256xf32>
    %353 = arith.mulf %352, %351 : vector<16x256xf32>
    %354 = arith.mulf %341, %353 : vector<16x256xf32>
    %355 = arith.truncf %354 : vector<16x256xf32> to vector<16x256xbf16>
    %c0_96 = arith.constant 0 : index
    %c0_97 = arith.constant 0 : index
    %356 = vector.load %arg27[%c0_96, %c0_97] : memref<256x64xbf16, #tpu.memory_space<vmem>>, vector<256x64xbf16>
    %cst_98 = arith.constant dense<0.000000e+00> : vector<16x64xf32>
    %357 = tpu.matmul %355, %356, %cst_98 {dimension_numbers = #tpu.dot_dimension_numbers<[1], [0], [0], [1], [0, 0, 1, 1], [], []>} : vector<16x256xbf16>, vector<256x64xbf16>, vector<16x64xf32> -> vector<16x64xf32>
    %c0_99 = arith.constant 0 : index
    %c0_100 = arith.constant 0 : index
    %358 = vector.load %arg28[%c0_99, %c0_100] : memref<1x64xf32, #tpu.memory_space<vmem>>, vector<1x64xf32>
    %359 = vector.broadcast %358 : vector<1x64xf32> to vector<16x64xf32>
    %360 = arith.addf %357, %359 : vector<16x64xf32>
    %361 = arith.addf %311, %360 : vector<16x64xf32>
    %362 = vector.extract_strided_slice %361 {offsets = [0, 0], sizes = [1, 64], strides = [1, 1]} : vector<16x64xf32> to vector<1x64xf32>
    %363 = vector.extract_strided_slice %361 {offsets = [8, 0], sizes = [1, 64], strides = [1, 1]} : vector<16x64xf32> to vector<1x64xf32>
    %364 = tpu.concatenate %362, %363 in 0 : vector<1x64xf32>, vector<1x64xf32> -> vector<2x64xf32>
    %cst_101 = arith.constant dense<0.000000e+00> : vector<2xf32>
    %365 = vector.multi_reduction <add>, %364, %cst_101 [1] : vector<2x64xf32> to vector<2xf32>
    %366 = vector.shape_cast %365 : vector<2xf32> to vector<2x1xf32>
    %cst_102 = arith.constant 6.400000e+01 : f32
    %367 = vector.broadcast %cst_102 : f32 to vector<2x1xf32>
    %368 = arith.divf %366, %367 : vector<2x1xf32>
    %369 = vector.broadcast %368 : vector<2x1xf32> to vector<2x64xf32>
    %370 = arith.subf %364, %369 : vector<2x64xf32>
    %371 = arith.mulf %370, %370 : vector<2x64xf32>
    %cst_103 = arith.constant dense<0.000000e+00> : vector<2xf32>
    %372 = vector.multi_reduction <add>, %371, %cst_103 [1] : vector<2x64xf32> to vector<2xf32>
    %373 = vector.shape_cast %372 : vector<2xf32> to vector<2x1xf32>
    %cst_104 = arith.constant 6.400000e+01 : f32
    %374 = vector.broadcast %cst_104 : f32 to vector<2x1xf32>
    %375 = arith.divf %373, %374 : vector<2x1xf32>
    %376 = vector.broadcast %368 : vector<2x1xf32> to vector<2x64xf32>
    %377 = arith.subf %364, %376 : vector<2x64xf32>
    %cst_105 = arith.constant 9.99999997E-7 : f32
    %378 = vector.broadcast %cst_105 : f32 to vector<2x1xf32>
    %379 = arith.addf %375, %378 : vector<2x1xf32>
    %380 = math.rsqrt %379 : vector<2x1xf32>
    %381 = vector.broadcast %380 : vector<2x1xf32> to vector<2x64xf32>
    %382 = arith.mulf %377, %381 : vector<2x64xf32>
    %c0_106 = arith.constant 0 : index
    %c0_107 = arith.constant 0 : index
    %383 = vector.load %arg29[%c0_106, %c0_107] : memref<1x64xf32, #tpu.memory_space<vmem>>, vector<1x64xf32>
    %384 = vector.broadcast %383 : vector<1x64xf32> to vector<2x64xf32>
    %385 = arith.mulf %382, %384 : vector<2x64xf32>
    %c0_108 = arith.constant 0 : index
    %c0_109 = arith.constant 0 : index
    %386 = vector.load %arg30[%c0_108, %c0_109] : memref<1x64xf32, #tpu.memory_space<vmem>>, vector<1x64xf32>
    %387 = vector.broadcast %386 : vector<1x64xf32> to vector<2x64xf32>
    %388 = arith.addf %385, %387 : vector<2x64xf32>
    %389 = arith.truncf %388 : vector<2x64xf32> to vector<2x64xbf16>
    %c0_110 = arith.constant 0 : index
    %c0_111 = arith.constant 0 : index
    %390 = vector.load %arg31[%c0_110, %c0_111] : memref<64x4xbf16, #tpu.memory_space<vmem>>, vector<64x4xbf16>
    %cst_112 = arith.constant dense<0.000000e+00> : vector<2x4xf32>
    %391 = tpu.matmul %389, %390, %cst_112 {dimension_numbers = #tpu.dot_dimension_numbers<[1], [0], [0], [1], [0, 0, 1, 1], [], []>} : vector<2x64xbf16>, vector<64x4xbf16>, vector<2x4xf32> -> vector<2x4xf32>
    %c0_113 = arith.constant 0 : index
    %c0_114 = arith.constant 0 : index
    %392 = vector.load %arg32[%c0_113, %c0_114] : memref<1x4xf32, #tpu.memory_space<vmem>>, vector<1x4xf32>
    %393 = vector.broadcast %392 : vector<1x4xf32> to vector<2x4xf32>
    %394 = arith.addf %391, %393 : vector<2x4xf32>
    %cst_115 = arith.constant dense<0xFF800000> : vector<2xf32>
    %395 = vector.multi_reduction <maximumf>, %394, %cst_115 [1] : vector<2x4xf32> to vector<2xf32>
    %396 = vector.shape_cast %395 : vector<2xf32> to vector<2x1xf32>
    %397 = vector.broadcast %396 : vector<2x1xf32> to vector<2x4xf32>
    %398 = arith.subf %394, %397 : vector<2x4xf32>
    %399 = math.exp %398 : vector<2x4xf32>
    %cst_116 = arith.constant dense<0.000000e+00> : vector<2xf32>
    %400 = vector.multi_reduction <add>, %399, %cst_116 [1] : vector<2x4xf32> to vector<2xf32>
    %401 = vector.shape_cast %400 : vector<2xf32> to vector<2x1xf32>
    %402 = vector.broadcast %401 : vector<2x1xf32> to vector<2x4xf32>
    %403 = arith.divf %399, %402 : vector<2x4xf32>
    %c0_117 = arith.constant 0 : index
    %c0_118 = arith.constant 0 : index
    %404 = vector.load %arg33[%c0_117, %c0_118] : memref<2x4xf32, #tpu.memory_space<vmem>>, vector<2x4xf32>
    tpu.vector_store %arg33[%c0_117, %c0_118], %403 {strides = array<i32>} : memref<2x4xf32, #tpu.memory_space<vmem>>, vector<2x4xf32>,
    return
  }
  func.func @transform_0(%arg0: i32) -> (i32, i32) {
    %c0_i32 = arith.constant 0 : i32
    %c0_i32_0 = arith.constant 0 : i32
    %c0_i32_1 = arith.constant 0 : i32
    return %c0_i32, %c0_i32_0 : i32, i32
  }
  func.func @transform_1(%arg0: i32) -> (i32, i32) {
    %c0_i32 = arith.constant 0 : i32
    %c0_i32_0 = arith.constant 0 : i32
    %c0_i32_1 = arith.constant 0 : i32
    return %c0_i32, %c0_i32_0 : i32, i32
  }
  func.func @transform_2(%arg0: i32) -> (i32, i32) {
    %c0_i32 = arith.constant 0 : i32
    %c0_i32_0 = arith.constant 0 : i32
    %c0_i32_1 = arith.constant 0 : i32
    return %c0_i32, %c0_i32_0 : i32, i32
  }
  func.func @transform_3(%arg0: i32) -> (i32, i32) {
    %c0_i32 = arith.constant 0 : i32
    %c0_i32_0 = arith.constant 0 : i32
    %c0_i32_1 = arith.constant 0 : i32
    return %c0_i32, %c0_i32_0 : i32, i32
  }
  func.func @transform_4(%arg0: i32) -> (i32, i32) {
    %c0_i32 = arith.constant 0 : i32
    %c0_i32_0 = arith.constant 0 : i32
    %c0_i32_1 = arith.constant 0 : i32
    return %c0_i32, %c0_i32_0 : i32, i32
  }
  func.func @transform_5(%arg0: i32) -> (i32, i32) {
    %c0_i32 = arith.constant 0 : i32
    %c0_i32_0 = arith.constant 0 : i32
    %c0_i32_1 = arith.constant 0 : i32
    return %c0_i32, %c0_i32_0 : i32, i32
  }
  func.func @transform_6(%arg0: i32) -> (i32, i32) {
    %c0_i32 = arith.constant 0 : i32
    %c0_i32_0 = arith.constant 0 : i32
    %c0_i32_1 = arith.constant 0 : i32
    return %c0_i32, %c0_i32_0 : i32, i32
  }
  func.func @transform_7(%arg0: i32) -> (i32, i32) {
    %c0_i32 = arith.constant 0 : i32
    %c0_i32_0 = arith.constant 0 : i32
    %c0_i32_1 = arith.constant 0 : i32
    return %c0_i32, %c0_i32_0 : i32, i32
  }
  func.func @transform_8(%arg0: i32) -> (i32, i32) {
    %c0_i32 = arith.constant 0 : i32
    %c0_i32_0 = arith.constant 0 : i32
    %c0_i32_1 = arith.constant 0 : i32
    return %c0_i32, %c0_i32_0 : i32, i32
  }
  func.func @transform_9(%arg0: i32) -> (i32, i32) {
    %c0_i32 = arith.constant 0 : i32
    %c0_i32_0 = arith.constant 0 : i32
    %c0_i32_1 = arith.constant 0 : i32
    return %c0_i32, %c0_i32_0 : i32, i32
  }
  func.func @transform_10(%arg0: i32) -> (i32, i32) {
    %c0_i32 = arith.constant 0 : i32
    %c0_i32_0 = arith.constant 0 : i32
    %c0_i32_1 = arith.constant 0 : i32
    return %c0_i32, %c0_i32_0 : i32, i32
  }
  func.func @transform_11(%arg0: i32) -> (i32, i32) {
    %c0_i32 = arith.constant 0 : i32
    %c0_i32_0 = arith.constant 0 : i32
    %c0_i32_1 = arith.constant 0 : i32
    return %c0_i32, %c0_i32_0 : i32, i32
  }
  func.func @transform_12(%arg0: i32) -> (i32, i32) {
    %c0_i32 = arith.constant 0 : i32
    %c0_i32_0 = arith.constant 0 : i32
    %c0_i32_1 = arith.constant 0 : i32
    return %c0_i32, %c0_i32_0 : i32, i32
  }
  func.func @transform_13(%arg0: i32) -> (i32, i32) {
    %c0_i32 = arith.constant 0 : i32
    %c0_i32_0 = arith.constant 0 : i32
    %c0_i32_1 = arith.constant 0 : i32
    return %c0_i32, %c0_i32_0 : i32, i32
  }
  func.func @transform_14(%arg0: i32) -> (i32, i32) {
    %c0_i32 = arith.constant 0 : i32
    %c0_i32_0 = arith.constant 0 : i32
    %c0_i32_1 = arith.constant 0 : i32
    return %c0_i32, %c0_i32_0 : i32, i32
  }
  func.func @transform_15(%arg0: i32) -> (i32, i32) {
    %c0_i32 = arith.constant 0 : i32
    %c0_i32_0 = arith.constant 0 : i32
    %c0_i32_1 = arith.constant 0 : i32
    return %c0_i32, %c0_i32_0 : i32, i32
  }
  func.func @transform_16(%arg0: i32) -> (i32, i32) {
    %c0_i32 = arith.constant 0 : i32
    %c0_i32_0 = arith.constant 0 : i32
    %c0_i32_1 = arith.constant 0 : i32
    return %c0_i32, %c0_i32_0 : i32, i32
  }
  func.func @transform_17(%arg0: i32) -> (i32, i32) {
    %c0_i32 = arith.constant 0 : i32
    %c0_i32_0 = arith.constant 0 : i32
    %c0_i32_1 = arith.constant 0 : i32
    return %c0_i32, %c0_i32_0 : i32, i32
  }
  func.func @transform_18(%arg0: i32) -> (i32, i32) {
    %c0_i32 = arith.constant 0 : i32
    %c0_i32_0 = arith.constant 0 : i32
    %c0_i32_1 = arith.constant 0 : i32
    return %c0_i32, %c0_i32_0 : i32, i32
  }
  func.func @transform_19(%arg0: i32) -> (i32, i32) {
    %c0_i32 = arith.constant 0 : i32
    %c0_i32_0 = arith.constant 0 : i32
    %c0_i32_1 = arith.constant 0 : i32
    return %c0_i32, %c0_i32_0 : i32, i32
  }
  func.func @transform_20(%arg0: i32) -> (i32, i32) {
    %c0_i32 = arith.constant 0 : i32
    %c0_i32_0 = arith.constant 0 : i32
    %c0_i32_1 = arith.constant 0 : i32
    return %c0_i32, %c0_i32_0 : i32, i32
  }
  func.func @transform_21(%arg0: i32) -> (i32, i32) {
    %c0_i32 = arith.constant 0 : i32
    %c0_i32_0 = arith.constant 0 : i32
    %c0_i32_1 = arith.constant 0 : i32
    return %c0_i32, %c0_i32_0 : i32, i32
  }
  func.func @transform_22(%arg0: i32) -> (i32, i32) {
    %c0_i32 = arith.constant 0 : i32
    %c0_i32_0 = arith.constant 0 : i32
    %c0_i32_1 = arith.constant 0 : i32
    return %c0_i32, %c0_i32_0 : i32, i32
  }
  func.func @transform_23(%arg0: i32) -> (i32, i32) {
    %c0_i32 = arith.constant 0 : i32
    %c0_i32_0 = arith.constant 0 : i32
    %c0_i32_1 = arith.constant 0 : i32
    return %c0_i32, %c0_i32_0 : i32, i32
  }
  func.func @transform_24(%arg0: i32) -> (i32, i32) {
    %c0_i32 = arith.constant 0 : i32
    %c0_i32_0 = arith.constant 0 : i32
    %c0_i32_1 = arith.constant 0 : i32
    return %c0_i32, %c0_i32_0 : i32, i32
  }
  func.func @transform_25(%arg0: i32) -> (i32, i32) {
    %c0_i32 = arith.constant 0 : i32
    %c0_i32_0 = arith.constant 0 : i32
    %c0_i32_1 = arith.constant 0 : i32
    return %c0_i32, %c0_i32_0 : i32, i32
  }
  func.func @transform_26(%arg0: i32) -> (i32, i32) {
    %c0_i32 = arith.constant 0 : i32
    %c0_i32_0 = arith.constant 0 : i32
    %c0_i32_1 = arith.constant 0 : i32
    return %c0_i32, %c0_i32_0 : i32, i32
  }
  func.func @transform_27(%arg0: i32) -> (i32, i32) {
    %c0_i32 = arith.constant 0 : i32
    %c0_i32_0 = arith.constant 0 : i32
    %c0_i32_1 = arith.constant 0 : i32
    return %c0_i32, %c0_i32_0 : i32, i32
  }
  func.func @transform_28(%arg0: i32) -> (i32, i32) {
    %c0_i32 = arith.constant 0 : i32
    %c0_i32_0 = arith.constant 0 : i32
    %c0_i32_1 = arith.constant 0 : i32
    return %c0_i32, %c0_i32_0 : i32, i32
  }
  func.func @transform_29(%arg0: i32) -> (i32, i32) {
    %c0_i32 = arith.constant 0 : i32
    %c0_i32_0 = arith.constant 0 : i32
    %c0_i32_1 = arith.constant 0 : i32
    return %c0_i32, %c0_i32_0 : i32, i32
  }
  func.func @transform_30(%arg0: i32) -> (i32, i32) {
    %c0_i32 = arith.constant 0 : i32
    %c0_i32_0 = arith.constant 0 : i32
    %c0_i32_1 = arith.constant 0 : i32
    return %c0_i32, %c0_i32_0 : i32, i32
  }
  func.func @transform_31(%arg0: i32) -> (i32, i32) {
    %c0_i32 = arith.constant 0 : i32
    %c0_i32_0 = arith.constant 0 : i32
    %c0_i32_1 = arith.constant 0 : i32
    return %c0_i32, %c0_i32_0 : i32, i32
  }
  func.func @transform_32(%arg0: i32) -> (i32, i32) {
    %c0_i32 = arith.constant 0 : i32
    %c0_i32_0 = arith.constant 0 : i32
    %c0_i32_1 = arith.constant 0 : i32
    return %c0_i32, %c0_i32_0 : i32, i32
  }
}

</mosaic_0001>

<llo_original>
// kernel: _lambda_.1
$region0: #{_lambda_.1}
  #allocation0 [shape = 'u32[]', space=smem, size = 0x4, offset = 0x4, fixed_abs, tag = 'smem constant byte address 0x4 - core index']
  #allocation1 [shape = 'u32[144,128]{1,0:T(1,128)}', space=vmem, size = 0x12000, scoped, tag = 'internal scratch']
  %s0 = inlined_call_operand.smem [shape: u32[33], index: -1, kind: input, shape index: {}]
  %s1 = sld [smem:[%s0]]
  %s2 = scalar_lea.smem %s0, 1
  %s3 = sld [smem:[%s2]]
  %s4 = scalar_lea.smem %s0, 2
  %s5 = sld [smem:[%s4]]
  %s6 = scalar_lea.smem %s0, 3
  %s7 = sld [smem:[%s6]]
  %s8 = scalar_lea.smem %s0, 4
  %s9 = sld [smem:[%s8]]
  %s10 = scalar_lea.smem %s0, 5
  %s11 = sld [smem:[%s10]]
  %s12 = scalar_lea.smem %s0, 6
  %s13 = sld [smem:[%s12]]
  %s14 = scalar_lea.smem %s0, 7
  %s15 = sld [smem:[%s14]]
  %s16 = scalar_lea.smem %s0, 8
  %s17 = sld [smem:[%s16]]
  %s18 = scalar_lea.smem %s0, 9
  %s19 = sld [smem:[%s18]]
  %s20 = scalar_lea.smem %s0, 10
  %s21 = sld [smem:[%s20]]
  %s22 = scalar_lea.smem %s0, 11
  %s23 = sld [smem:[%s22]]
  %s24 = scalar_lea.smem %s0, 12
  %s25 = sld [smem:[%s24]]
  %s26 = scalar_lea.smem %s0, 13
  %s27 = sld [smem:[%s26]]
  %s28 = scalar_lea.smem %s0, 14
  %s29 = sld [smem:[%s28]]
  %s30 = scalar_lea.smem %s0, 15
  %s31 = sld [smem:[%s30]]
  %s32 = scalar_lea.smem %s0, 16
  %s33 = sld [smem:[%s32]]
  %s34 = scalar_lea.smem %s0, 17
  %s35 = sld [smem:[%s34]]
  %s36 = scalar_lea.smem %s0, 18
  %s37 = sld [smem:[%s36]]
  %s38 = scalar_lea.smem %s0, 19
  %s39 = sld [smem:[%s38]]
  %s40 = scalar_lea.smem %s0, 20
  %s41 = sld [smem:[%s40]]
  %s42 = scalar_lea.smem %s0, 21
  %s43 = sld [smem:[%s42]]
  %s44 = scalar_lea.smem %s0, 22
  %s45 = sld [smem:[%s44]]
  %s46 = scalar_lea.smem %s0, 23
  %s47 = sld [smem:[%s46]]
  %s48 = scalar_lea.smem %s0, 24
  %s49 = sld [smem:[%s48]]
  %s50 = scalar_lea.smem %s0, 25
  %s51 = sld [smem:[%s50]]
  %s52 = scalar_lea.smem %s0, 26
  %s53 = sld [smem:[%s52]]
  %s54 = scalar_lea.smem %s0, 27
  %s55 = sld [smem:[%s54]]
  %s56 = scalar_lea.smem %s0, 28
  %s57 = sld [smem:[%s56]]
  %s58 = scalar_lea.smem %s0, 29
  %s59 = sld [smem:[%s58]]
  %s60 = scalar_lea.smem %s0, 30
  %s61 = sld [smem:[%s60]]
  %s62 = scalar_lea.smem %s0, 31
  %s63 = sld [smem:[%s62]]
  %s64 = scalar_lea.smem %s0, 32
  %s65 = sld [smem:[%s64]]
  %s66 = sld [smem:[#allocation0]]
  $region138: #{_lambda_.1} parent=0
    _
  %s68 = ssub.s32 1, %s66
  %s69 = scalar_select 0, %s68, %s66
  $region1: #{_lambda_.1} parent=0
    #allocation2 [shape = 'u8[1024]{0}', space=vmem, size = 0x400, scoped, tag = 'output window, operand 0, single buffered']
    #allocation3 [shape = 's32[1]{0}', space=sflag, size = 0x4, scoped, tag = 'scoped memory for _lambda_.1']
    %70 = vsyncpa [#allocation3], 0
    // Predicated region
    $region2: #{_lambda_.1} parent=1 // pred_check
      _
    $region3: #{_lambda_.1} parent=1 // pred_check_branch
      %72 = sbr.rel (0) target = $region5
    $region4: #{_lambda_.1} parent=1 // pred_region
      _
    $region5: #{_lambda_.1} parent=1 // pred_fallthru
      _
    // Predicated region
    $region6: #{_lambda_.1} parent=1 // pred_check
      _
    $region7: #{_lambda_.1} parent=1 // pred_check_branch
      %74 = sbr.rel (0) target = $region9
    $region8: #{_lambda_.1} parent=1 // pred_region
      _
    $region9: #{_lambda_.1} parent=1 // pred_fallthru
      _
    // Predicated region
    $region10: #{_lambda_.1} parent=1 // pred_check
      _
    $region11: #{_lambda_.1} parent=1 // pred_check_branch
      %76 = sbr.rel (0) target = $region13
    $region12: #{_lambda_.1} parent=1 // pred_region
      _
    $region13: #{_lambda_.1} parent=1 // pred_fallthru
      _
    // Predicated region
    $region14: #{_lambda_.1} parent=1 // pred_check
      _
    $region15: #{_lambda_.1} parent=1 // pred_check_branch
      %78 = sbr.rel (0) target = $region17
    $region16: #{_lambda_.1} parent=1 // pred_region
      _
    $region17: #{_lambda_.1} parent=1 // pred_fallthru
      _
    // Predicated region
    $region18: #{_lambda_.1} parent=1 // pred_check
      _
    $region19: #{_lambda_.1} parent=1 // pred_check_branch
      %80 = sbr.rel (0) target = $region21
    $region20: #{_lambda_.1} parent=1 // pred_region
      _
    $region21: #{_lambda_.1} parent=1 // pred_fallthru
      _
    // Predicated region
    $region22: #{_lambda_.1} parent=1 // pred_check
      _
    $region23: #{_lambda_.1} parent=1 // pred_check_branch
      %82 = sbr.rel (0) target = $region25
    $region24: #{_lambda_.1} parent=1 // pred_region
      _
    $region25: #{_lambda_.1} parent=1 // pred_fallthru
      _
    // Predicated region
    $region26: #{_lambda_.1} parent=1 // pred_check
      _
    $region27: #{_lambda_.1} parent=1 // pred_check_branch
      %84 = sbr.rel (0) target = $region29
    $region28: #{_lambda_.1} parent=1 // pred_region
      _
    $region29: #{_lambda_.1} parent=1 // pred_fallthru
      _
    // Predicated region
    $region30: #{_lambda_.1} parent=1 // pred_check
      _
    $region31: #{_lambda_.1} parent=1 // pred_check_branch
      %86 = sbr.rel (0) target = $region33
    $region32: #{_lambda_.1} parent=1 // pred_region
      _
    $region33: #{_lambda_.1} parent=1 // pred_fallthru
      _
    // Predicated region
    $region34: #{_lambda_.1} parent=1 // pred_check
      _
    $region35: #{_lambda_.1} parent=1 // pred_check_branch
      %88 = sbr.rel (0) target = $region37
    $region36: #{_lambda_.1} parent=1 // pred_region
      _
    $region37: #{_lambda_.1} parent=1 // pred_fallthru
      _
    // Predicated region
    $region38: #{_lambda_.1} parent=1 // pred_check
      _
    $region39: #{_lambda_.1} parent=1 // pred_check_branch
      %90 = sbr.rel (0) target = $region41
    $region40: #{_lambda_.1} parent=1 // pred_region
      _
    $region41: #{_lambda_.1} parent=1 // pred_fallthru
      _
    // Predicated region
    $region42: #{_lambda_.1} parent=1 // pred_check
      _
    $region43: #{_lambda_.1} parent=1 // pred_check_branch
      %92 = sbr.rel (0) target = $region45
    $region44: #{_lambda_.1} parent=1 // pred_region
      _
    $region45: #{_lambda_.1} parent=1 // pred_fallthru
      _
    // Predicated region
    $region46: #{_lambda_.1} parent=1 // pred_check
      _
    $region47: #{_lambda_.1} parent=1 // pred_check_branch
      %94 = sbr.rel (0) target = $region49
    $region48: #{_lambda_.1} parent=1 // pred_region
      _
    $region49: #{_lambda_.1} parent=1 // pred_fallthru
      _
    // Predicated region
    $region50: #{_lambda_.1} parent=1 // pred_check
      _
    $region51: #{_lambda_.1} parent=1 // pred_check_branch
      %96 = sbr.rel (0) target = $region53
    $region52: #{_lambda_.1} parent=1 // pred_region
      _
    $region53: #{_lambda_.1} parent=1 // pred_fallthru
      _
    // Predicated region
    $region54: #{_lambda_.1} parent=1 // pred_check
      _
    $region55: #{_lambda_.1} parent=1 // pred_check_branch
      %98 = sbr.rel (0) target = $region57
    $region56: #{_lambda_.1} parent=1 // pred_region
      _
    $region57: #{_lambda_.1} parent=1 // pred_fallthru
      _
    // Predicated region
    $region58: #{_lambda_.1} parent=1 // pred_check
      _
    $region59: #{_lambda_.1} parent=1 // pred_check_branch
      %100 = sbr.rel (0) target = $region61
    $region60: #{_lambda_.1} parent=1 // pred_region
      _
    $region61: #{_lambda_.1} parent=1 // pred_fallthru
      _
    // Predicated region
    $region62: #{_lambda_.1} parent=1 // pred_check
      _
    $region63: #{_lambda_.1} parent=1 // pred_check_branch
      %102 = sbr.rel (0) target = $region65
    $region64: #{_lambda_.1} parent=1 // pred_region
      _
    $region65: #{_lambda_.1} parent=1 // pred_fallthru
      _
    // Predicated region
    $region66: #{_lambda_.1} parent=1 // pred_check
      _
    $region67: #{_lambda_.1} parent=1 // pred_check_branch
      %104 = sbr.rel (0) target = $region69
    $region68: #{_lambda_.1} parent=1 // pred_region
      _
    $region69: #{_lambda_.1} parent=1 // pred_fallthru
      _
    // Predicated region
    $region70: #{_lambda_.1} parent=1 // pred_check
      _
    $region71: #{_lambda_.1} parent=1 // pred_check_branch
      %106 = sbr.rel (0) target = $region73
    $region72: #{_lambda_.1} parent=1 // pred_region
      _
    $region73: #{_lambda_.1} parent=1 // pred_fallthru
      _
    // Predicated region
    $region74: #{_lambda_.1} parent=1 // pred_check
      _
    $region75: #{_lambda_.1} parent=1 // pred_check_branch
      %108 = sbr.rel (0) target = $region77
    $region76: #{_lambda_.1} parent=1 // pred_region
      _
    $region77: #{_lambda_.1} parent=1 // pred_fallthru
      _
    // Predicated region
    $region78: #{_lambda_.1} parent=1 // pred_check
      _
    $region79: #{_lambda_.1} parent=1 // pred_check_branch
      %110 = sbr.rel (0) target = $region81
    $region80: #{_lambda_.1} parent=1 // pred_region
      _
    $region81: #{_lambda_.1} parent=1 // pred_fallthru
      _
    // Predicated region
    $region82: #{_lambda_.1} parent=1 // pred_check
      _
    $region83: #{_lambda_.1} parent=1 // pred_check_branch
      %112 = sbr.rel (0) target = $region85
    $region84: #{_lambda_.1} parent=1 // pred_region
      _
    $region85: #{_lambda_.1} parent=1 // pred_fallthru
      _
    // Predicated region
    $region86: #{_lambda_.1} parent=1 // pred_check
      _
    $region87: #{_lambda_.1} parent=1 // pred_check_branch
      %114 = sbr.rel (0) target = $region89
    $region88: #{_lambda_.1} parent=1 // pred_region
      _
    $region89: #{_lambda_.1} parent=1 // pred_fallthru
      _
    // Predicated region
    $region90: #{_lambda_.1} parent=1 // pred_check
      _
    $region91: #{_lambda_.1} parent=1 // pred_check_branch
      %116 = sbr.rel (0) target = $region93
    $region92: #{_lambda_.1} parent=1 // pred_region
      _
    $region93: #{_lambda_.1} parent=1 // pred_fallthru
      _
    // Predicated region
    $region94: #{_lambda_.1} parent=1 // pred_check
      _
    $region95: #{_lambda_.1} parent=1 // pred_check_branch
      %118 = sbr.rel (0) target = $region97
    $region96: #{_lambda_.1} parent=1 // pred_region
      _
    $region97: #{_lambda_.1} parent=1 // pred_fallthru
      _
    // Predicated region
    $region98: #{_lambda_.1} parent=1 // pred_check
      _
    $region99: #{_lambda_.1} parent=1 // pred_check_branch
      %120 = sbr.rel (0) target = $region101
    $region100: #{_lambda_.1} parent=1 // pred_region
      _
    $region101: #{_lambda_.1} parent=1 // pred_fallthru
      _
    // Predicated region
    $region102: #{_lambda_.1} parent=1 // pred_check
      _
    $region103: #{_lambda_.1} parent=1 // pred_check_branch
      %122 = sbr.rel (0) target = $region105
    $region104: #{_lambda_.1} parent=1 // pred_region
      _
    $region105: #{_lambda_.1} parent=1 // pred_fallthru
      _
    // Predicated region
    $region106: #{_lambda_.1} parent=1 // pred_check
      _
    $region107: #{_lambda_.1} parent=1 // pred_check_branch
      %124 = sbr.rel (0) target = $region109
    $region108: #{_lambda_.1} parent=1 // pred_region
      _
    $region109: #{_lambda_.1} parent=1 // pred_fallthru
      _
    // Predicated region
    $region110: #{_lambda_.1} parent=1 // pred_check
      _
    $region111: #{_lambda_.1} parent=1 // pred_check_branch
      %126 = sbr.rel (0) target = $region113
    $region112: #{_lambda_.1} parent=1 // pred_region
      _
    $region113: #{_lambda_.1} parent=1 // pred_fallthru
      _
    // Predicated region
    $region114: #{_lambda_.1} parent=1 // pred_check
      _
    $region115: #{_lambda_.1} parent=1 // pred_check_branch
      %128 = sbr.rel (0) target = $region117
    $region116: #{_lambda_.1} parent=1 // pred_region
      _
    $region117: #{_lambda_.1} parent=1 // pred_fallthru
      _
    // Predicated region
    $region118: #{_lambda_.1} parent=1 // pred_check
      _
    $region119: #{_lambda_.1} parent=1 // pred_check_branch
      %130 = sbr.rel (0) target = $region121
    $region120: #{_lambda_.1} parent=1 // pred_region
      _
    $region121: #{_lambda_.1} parent=1 // pred_fallthru
      _
    // Predicated region
    $region122: #{_lambda_.1} parent=1 // pred_check
      _
    $region123: #{_lambda_.1} parent=1 // pred_check_branch
      %132 = sbr.rel (0) target = $region125
    $region124: #{_lambda_.1} parent=1 // pred_region
      _
    $region125: #{_lambda_.1} parent=1 // pred_fallthru
      _
    // Predicated region
    $region126: #{_lambda_.1} parent=1 // pred_check
      _
    $region127: #{_lambda_.1} parent=1 // pred_check_branch
      %134 = sbr.rel (0) target = $region129
    $region128: #{_lambda_.1} parent=1 // pred_region
      _
    $region129: #{_lambda_.1} parent=1 // pred_fallthru
      _
    %v136 = vld [vmem:[%s1] sm:$0xff]
    %v137 = vld [vmem:[%s1 + $0x8] sm:$0xff]
    %v138 = vld [vmem:[%s1 + $0x10] sm:$0xff]
    %v139 = vld [vmem:[%s1 + $0x18] sm:$0xff]
    %v140 = vld [vmem:[%s1 + $0x20] sm:$0xff]
    %v141 = vld [vmem:[%s1 + $0x28] sm:$0xff]
    %v142 = vld [vmem:[%s1 + $0x30] sm:$0xff]
    %v143 = vld [vmem:[%s1 + $0x38] sm:$0xff]
    %v144 = vld [vmem:[%s1 + $0x40] sm:$0xff]
    %v145 = vld [vmem:[%s1 + $0x48] sm:$0xff]
    %v146 = vld [vmem:[%s1 + $0x50] sm:$0xff]
    %v147 = vld [vmem:[%s1 + $0x58] sm:$0xff]
    %v148 = vld [vmem:[%s1 + $0x60] sm:$0xff]
    %v149 = vld [vmem:[%s1 + $0x68] sm:$0xff]
    %v150 = vld [vmem:[%s1 + $0x70] sm:$0xff]
    %v151 = vld [vmem:[%s1 + $0x78] sm:$0xff]
    %v152 = vld [vmem:[%s1 + $0x80] sm:$0xff]
    %v153 = vld [vmem:[%s1 + $0x88] sm:$0xff]
    %v154 = vld [vmem:[%s1 + $0x90] sm:$0xff]
    %v155 = vld [vmem:[%s1 + $0x98] sm:$0xff]
    %v156 = vld [vmem:[%s1 + $0xa0] sm:$0xff]
    %v157 = vld [vmem:[%s1 + $0xa8] sm:$0xff]
    %v158 = vld [vmem:[%s1 + $0xb0] sm:$0xff]
    %v159 = vld [vmem:[%s1 + $0xb8] sm:$0xff]
    %v160 = vld [vmem:[%s7] sm:$0xf]
    %v161 = vld [vmem:[%s7 + $0x4] sm:$0xf]
    %v162 = vld [vmem:[%s7 + $0x8] sm:$0xf]
    %v163 = vld [vmem:[%s7 + $0xc] sm:$0xf]
    %v164 = vld [vmem:[%s7 + $0x10] sm:$0xf]
    %v165 = vld [vmem:[%s7 + $0x14] sm:$0xf]
    %v166 = vld [vmem:[%s7 + $0x18] sm:$0xf]
    %v167 = vld [vmem:[%s7 + $0x1c] sm:$0xf]
    %v168 = vld [vmem:[%s7 + $0x20] sm:$0xf]
    %v169 = vld [vmem:[%s7 + $0x24] sm:$0xf]
    %v170 = vld [vmem:[%s7 + $0x28] sm:$0xf]
    %v171 = vld [vmem:[%s7 + $0x2c] sm:$0xf]
    %v172 = vld [vmem:[%s7 + $0x30] sm:$0xf]
    %v173 = vld [vmem:[%s7 + $0x34] sm:$0xf]
    %v174 = vld [vmem:[%s7 + $0x38] sm:$0xf]
    %v175 = vld [vmem:[%s7 + $0x3c] sm:$0xf]
    %v176 = vld [vmem:[%s7 + $0x40] sm:$0xf]
    %v177 = vld [vmem:[%s7 + $0x44] sm:$0xf]
    %v178 = vld [vmem:[%s7 + $0x48] sm:$0xf]
    %v179 = vld [vmem:[%s7 + $0x4c] sm:$0xf]
    %v180 = vld [vmem:[%s7 + $0x50] sm:$0xf]
    %v181 = vld [vmem:[%s7 + $0x54] sm:$0xf]
    %v182 = vld [vmem:[%s7 + $0x58] sm:$0xf]
    %v183 = vld [vmem:[%s7 + $0x5c] sm:$0xf]
    %v184 = vld [vmem:[%s7 + $0x60] sm:$0xf]
    %v185 = vld [vmem:[%s7 + $0x64] sm:$0xf]
    %v186 = vld [vmem:[%s7 + $0x68] sm:$0xf]
    %v187 = vld [vmem:[%s7 + $0x6c] sm:$0xf]
    %v188 = vld [vmem:[%s7 + $0x70] sm:$0xf]
    %v189 = vld [vmem:[%s7 + $0x74] sm:$0xf]
    %v190 = vld [vmem:[%s7 + $0x78] sm:$0xf]
    %v191 = vld [vmem:[%s7 + $0x7c] sm:$0xf]
    %v192 = vld [vmem:[%s7 + $0x80] sm:$0xf]
    %v193 = vld [vmem:[%s7 + $0x84] sm:$0xf]
    %v194 = vld [vmem:[%s7 + $0x88] sm:$0xf]
    %v195 = vld [vmem:[%s7 + $0x8c] sm:$0xf]
    %v196 = vld [vmem:[%s7 + $0x90] sm:$0xf]
    %v197 = vld [vmem:[%s7 + $0x94] sm:$0xf]
    %v198 = vld [vmem:[%s7 + $0x98] sm:$0xf]
    %v199 = vld [vmem:[%s7 + $0x9c] sm:$0xf]
    %v200 = vld [vmem:[%s7 + $0xa0] sm:$0xf]
    %v201 = vld [vmem:[%s7 + $0xa4] sm:$0xf]
    %v202 = vld [vmem:[%s7 + $0xa8] sm:$0xf]
    %v203 = vld [vmem:[%s7 + $0xac] sm:$0xf]
    %v204 = vld [vmem:[%s7 + $0xb0] sm:$0xf]
    %v205 = vld [vmem:[%s7 + $0xb4] sm:$0xf]
    %v206 = vld [vmem:[%s7 + $0xb8] sm:$0xf]
    %v207 = vld [vmem:[%s7 + $0xbc] sm:$0xf]
    %v208 = vld [vmem:[%s7 + $0xc0] sm:$0xf]
    %v209 = vld [vmem:[%s7 + $0xc4] sm:$0xf]
    %v210 = vld [vmem:[%s7 + $0xc8] sm:$0xf]
    %v211 = vld [vmem:[%s7 + $0xcc] sm:$0xf]
    %v212 = vld [vmem:[%s7 + $0xd0] sm:$0xf]
    %v213 = vld [vmem:[%s7 + $0xd4] sm:$0xf]
    %v214 = vld [vmem:[%s7 + $0xd8] sm:$0xf]
    %v215 = vld [vmem:[%s7 + $0xdc] sm:$0xf]
    %v216 = vld [vmem:[%s7 + $0xe0] sm:$0xf]
    %v217 = vld [vmem:[%s7 + $0xe4] sm:$0xf]
    %v218 = vld [vmem:[%s7 + $0xe8] sm:$0xf]
    %v219 = vld [vmem:[%s7 + $0xec] sm:$0xf]
    %v220 = vld [vmem:[%s7 + $0xf0] sm:$0xf]
    %v221 = vld [vmem:[%s7 + $0xf4] sm:$0xf]
    %v222 = vld [vmem:[%s7 + $0xf8] sm:$0xf]
    %v223 = vld [vmem:[%s7 + $0xfc] sm:$0xf]
    %v224 = vld [vmem:[%s7 + $0x100] sm:$0xf]
    %v225 = vld [vmem:[%s7 + $0x104] sm:$0xf]
    %v226 = vld [vmem:[%s7 + $0x108] sm:$0xf]
    %v227 = vld [vmem:[%s7 + $0x10c] sm:$0xf]
    %v228 = vld [vmem:[%s7 + $0x110] sm:$0xf]
    %v229 = vld [vmem:[%s7 + $0x114] sm:$0xf]
    %v230 = vld [vmem:[%s7 + $0x118] sm:$0xf]
    %v231 = vld [vmem:[%s7 + $0x11c] sm:$0xf]
    %v232 = vld [vmem:[%s7 + $0x120] sm:$0xf]
    %v233 = vld [vmem:[%s7 + $0x124] sm:$0xf]
    %v234 = vld [vmem:[%s7 + $0x128] sm:$0xf]
    %v235 = vld [vmem:[%s7 + $0x12c] sm:$0xf]
    %v236 = vld [vmem:[%s7 + $0x130] sm:$0xf]
    %v237 = vld [vmem:[%s7 + $0x134] sm:$0xf]
    %v238 = vld [vmem:[%s7 + $0x138] sm:$0xf]
    %v239 = vld [vmem:[%s7 + $0x13c] sm:$0xf]
    %v240 = vld [vmem:[%s7 + $0x140] sm:$0xf]
    %v241 = vld [vmem:[%s7 + $0x144] sm:$0xf]
    %v242 = vld [vmem:[%s7 + $0x148] sm:$0xf]
    %v243 = vld [vmem:[%s7 + $0x14c] sm:$0xf]
    %v244 = vld [vmem:[%s7 + $0x150] sm:$0xf]
    %v245 = vld [vmem:[%s7 + $0x154] sm:$0xf]
    %v246 = vld [vmem:[%s7 + $0x158] sm:$0xf]
    %v247 = vld [vmem:[%s7 + $0x15c] sm:$0xf]
    %v248 = vld [vmem:[%s7 + $0x160] sm:$0xf]
    %v249 = vld [vmem:[%s7 + $0x164] sm:$0xf]
    %v250 = vld [vmem:[%s7 + $0x168] sm:$0xf]
    %v251 = vld [vmem:[%s7 + $0x16c] sm:$0xf]
    %v252 = vld [vmem:[%s7 + $0x170] sm:$0xf]
    %v253 = vld [vmem:[%s7 + $0x174] sm:$0xf]
    %v254 = vld [vmem:[%s7 + $0x178] sm:$0xf]
    %v255 = vld [vmem:[%s7 + $0x17c] sm:$0xf]
    %v256 = vld [vmem:[%s7 + $0x180] sm:$0xf]
    %v257 = vld [vmem:[%s7 + $0x184] sm:$0xf]
    %v258 = vld [vmem:[%s7 + $0x188] sm:$0xf]
    %v259 = vld [vmem:[%s7 + $0x18c] sm:$0xf]
    %v260 = vld [vmem:[%s7 + $0x190] sm:$0xf]
    %v261 = vld [vmem:[%s7 + $0x194] sm:$0xf]
    %v262 = vld [vmem:[%s7 + $0x198] sm:$0xf]
    %v263 = vld [vmem:[%s7 + $0x19c] sm:$0xf]
    %v264 = vld [vmem:[%s7 + $0x1a0] sm:$0xf]
    %v265 = vld [vmem:[%s7 + $0x1a4] sm:$0xf]
    %v266 = vld [vmem:[%s7 + $0x1a8] sm:$0xf]
    %v267 = vld [vmem:[%s7 + $0x1ac] sm:$0xf]
    %v268 = vld [vmem:[%s7 + $0x1b0] sm:$0xf]
    %v269 = vld [vmem:[%s7 + $0x1b4] sm:$0xf]
    %v270 = vld [vmem:[%s7 + $0x1b8] sm:$0xf]
    %v271 = vld [vmem:[%s7 + $0x1bc] sm:$0xf]
    %v272 = vld [vmem:[%s7 + $0x1c0] sm:$0xf]
    %v273 = vld [vmem:[%s7 + $0x1c4] sm:$0xf]
    %v274 = vld [vmem:[%s7 + $0x1c8] sm:$0xf]
    %v275 = vld [vmem:[%s7 + $0x1cc] sm:$0xf]
    %v276 = vld [vmem:[%s7 + $0x1d0] sm:$0xf]
    %v277 = vld [vmem:[%s7 + $0x1d4] sm:$0xf]
    %v278 = vld [vmem:[%s7 + $0x1d8] sm:$0xf]
    %v279 = vld [vmem:[%s7 + $0x1dc] sm:$0xf]
    %v280 = vld [vmem:[%s7 + $0x1e0] sm:$0xf]
    %v281 = vld [vmem:[%s7 + $0x1e4] sm:$0xf]
    %v282 = vld [vmem:[%s7 + $0x1e8] sm:$0xf]
    %v283 = vld [vmem:[%s7 + $0x1ec] sm:$0xf]
    %v284 = vld [vmem:[%s7 + $0x1f0] sm:$0xf]
    %v285 = vld [vmem:[%s7 + $0x1f4] sm:$0xf]
    %v286 = vld [vmem:[%s7 + $0x1f8] sm:$0xf]
    %v287 = vld [vmem:[%s7 + $0x1fc] sm:$0xf]
    %v288 = vld [vmem:[%s7 + $0x200] sm:$0xf]
    %v289 = vld [vmem:[%s7 + $0x204] sm:$0xf]
    %v290 = vld [vmem:[%s7 + $0x208] sm:$0xf]
    %v291 = vld [vmem:[%s7 + $0x20c] sm:$0xf]
    %v292 = vld [vmem:[%s7 + $0x210] sm:$0xf]
    %v293 = vld [vmem:[%s7 + $0x214] sm:$0xf]
    %v294 = vld [vmem:[%s7 + $0x218] sm:$0xf]
    %v295 = vld [vmem:[%s7 + $0x21c] sm:$0xf]
    %v296 = vld [vmem:[%s7 + $0x220] sm:$0xf]
    %v297 = vld [vmem:[%s7 + $0x224] sm:$0xf]
    %v298 = vld [vmem:[%s7 + $0x228] sm:$0xf]
    %v299 = vld [vmem:[%s7 + $0x22c] sm:$0xf]
    %v300 = vld [vmem:[%s7 + $0x230] sm:$0xf]
    %v301 = vld [vmem:[%s7 + $0x234] sm:$0xf]
    %v302 = vld [vmem:[%s7 + $0x238] sm:$0xf]
    %v303 = vld [vmem:[%s7 + $0x23c] sm:$0xf]
    %v304 = vld [vmem:[%s7 + $0x240] sm:$0xf]
    %v305 = vld [vmem:[%s7 + $0x244] sm:$0xf]
    %v306 = vld [vmem:[%s7 + $0x248] sm:$0xf]
    %v307 = vld [vmem:[%s7 + $0x24c] sm:$0xf]
    %v308 = vld [vmem:[%s7 + $0x250] sm:$0xf]
    %v309 = vld [vmem:[%s7 + $0x254] sm:$0xf]
    %v310 = vld [vmem:[%s7 + $0x258] sm:$0xf]
    %v311 = vld [vmem:[%s7 + $0x25c] sm:$0xf]
    %v312 = vld [vmem:[%s7 + $0x260] sm:$0xf]
    %v313 = vld [vmem:[%s7 + $0x264] sm:$0xf]
    %v314 = vld [vmem:[%s7 + $0x268] sm:$0xf]
    %v315 = vld [vmem:[%s7 + $0x26c] sm:$0xf]
    %v316 = vld [vmem:[%s7 + $0x270] sm:$0xf]
    %v317 = vld [vmem:[%s7 + $0x274] sm:$0xf]
    %v318 = vld [vmem:[%s7 + $0x278] sm:$0xf]
    %v319 = vld [vmem:[%s7 + $0x27c] sm:$0xf]
    %v320 = vld [vmem:[%s7 + $0x280] sm:$0xf]
    %v321 = vld [vmem:[%s7 + $0x284] sm:$0xf]
    %v322 = vld [vmem:[%s7 + $0x288] sm:$0xf]
    %v323 = vld [vmem:[%s7 + $0x28c] sm:$0xf]
    %v324 = vld [vmem:[%s7 + $0x290] sm:$0xf]
    %v325 = vld [vmem:[%s7 + $0x294] sm:$0xf]
    %v326 = vld [vmem:[%s7 + $0x298] sm:$0xf]
    %v327 = vld [vmem:[%s7 + $0x29c] sm:$0xf]
    %v328 = vld [vmem:[%s7 + $0x2a0] sm:$0xf]
    %v329 = vld [vmem:[%s7 + $0x2a4] sm:$0xf]
    %v330 = vld [vmem:[%s7 + $0x2a8] sm:$0xf]
    %v331 = vld [vmem:[%s7 + $0x2ac] sm:$0xf]
    %v332 = vld [vmem:[%s7 + $0x2b0] sm:$0xf]
    %v333 = vld [vmem:[%s7 + $0x2b4] sm:$0xf]
    %v334 = vld [vmem:[%s7 + $0x2b8] sm:$0xf]
    %v335 = vld [vmem:[%s7 + $0x2bc] sm:$0xf]
    %v336 = vld [vmem:[%s7 + $0x2c0] sm:$0xf]
    %v337 = vld [vmem:[%s7 + $0x2c4] sm:$0xf]
    %v338 = vld [vmem:[%s7 + $0x2c8] sm:$0xf]
    %v339 = vld [vmem:[%s7 + $0x2cc] sm:$0xf]
    %v340 = vld [vmem:[%s7 + $0x2d0] sm:$0xf]
    %v341 = vld [vmem:[%s7 + $0x2d4] sm:$0xf]
    %v342 = vld [vmem:[%s7 + $0x2d8] sm:$0xf]
    %v343 = vld [vmem:[%s7 + $0x2dc] sm:$0xf]
    %v344 = vld [vmem:[%s7 + $0x2e0] sm:$0xf]
    %v345 = vld [vmem:[%s7 + $0x2e4] sm:$0xf]
    %v346 = vld [vmem:[%s7 + $0x2e8] sm:$0xf]
    %v347 = vld [vmem:[%s7 + $0x2ec] sm:$0xf]
    %v348 = vld [vmem:[%s7 + $0x2f0] sm:$0xf]
    %v349 = vld [vmem:[%s7 + $0x2f4] sm:$0xf]
    %v350 = vld [vmem:[%s7 + $0x2f8] sm:$0xf]
    %v351 = vld [vmem:[%s7 + $0x2fc] sm:$0xf]
    %v352 = vld [vmem:[%s7 + $0x300] sm:$0xf]
    %v353 = vld [vmem:[%s7 + $0x304] sm:$0xf]
    %v354 = vld [vmem:[%s7 + $0x308] sm:$0xf]
    %v355 = vld [vmem:[%s7 + $0x30c] sm:$0xf]
    %v356 = vld [vmem:[%s7 + $0x310] sm:$0xf]
    %v357 = vld [vmem:[%s7 + $0x314] sm:$0xf]
    %v358 = vld [vmem:[%s7 + $0x318] sm:$0xf]
    %v359 = vld [vmem:[%s7 + $0x31c] sm:$0xf]
    %v360 = vld [vmem:[%s7 + $0x320] sm:$0xf]
    %v361 = vld [vmem:[%s7 + $0x324] sm:$0xf]
    %v362 = vld [vmem:[%s7 + $0x328] sm:$0xf]
    %v363 = vld [vmem:[%s7 + $0x32c] sm:$0xf]
    %v364 = vld [vmem:[%s7 + $0x330] sm:$0xf]
    %v365 = vld [vmem:[%s7 + $0x334] sm:$0xf]
    %v366 = vld [vmem:[%s7 + $0x338] sm:$0xf]
    %v367 = vld [vmem:[%s7 + $0x33c] sm:$0xf]
    %v368 = vld [vmem:[%s7 + $0x340] sm:$0xf]
    %v369 = vld [vmem:[%s7 + $0x344] sm:$0xf]
    %v370 = vld [vmem:[%s7 + $0x348] sm:$0xf]
    %v371 = vld [vmem:[%s7 + $0x34c] sm:$0xf]
    %v372 = vld [vmem:[%s7 + $0x350] sm:$0xf]
    %v373 = vld [vmem:[%s7 + $0x354] sm:$0xf]
    %v374 = vld [vmem:[%s7 + $0x358] sm:$0xf]
    %v375 = vld [vmem:[%s7 + $0x35c] sm:$0xf]
    %v376 = vld [vmem:[%s7 + $0x360] sm:$0xf]
    %v377 = vld [vmem:[%s7 + $0x364] sm:$0xf]
    %v378 = vld [vmem:[%s7 + $0x368] sm:$0xf]
    %v379 = vld [vmem:[%s7 + $0x36c] sm:$0xf]
    %v380 = vld [vmem:[%s7 + $0x370] sm:$0xf]
    %v381 = vld [vmem:[%s7 + $0x374] sm:$0xf]
    %v382 = vld [vmem:[%s7 + $0x378] sm:$0xf]
    %v383 = vld [vmem:[%s7 + $0x37c] sm:$0xf]
    %v384 = vld [vmem:[%s7 + $0x380] sm:$0xf]
    %v385 = vld [vmem:[%s7 + $0x384] sm:$0xf]
    %v386 = vld [vmem:[%s7 + $0x388] sm:$0xf]
    %v387 = vld [vmem:[%s7 + $0x38c] sm:$0xf]
    %v388 = vld [vmem:[%s7 + $0x390] sm:$0xf]
    %v389 = vld [vmem:[%s7 + $0x394] sm:$0xf]
    %v390 = vld [vmem:[%s7 + $0x398] sm:$0xf]
    %v391 = vld [vmem:[%s7 + $0x39c] sm:$0xf]
    %v392 = vld [vmem:[%s7 + $0x3a0] sm:$0xf]
    %v393 = vld [vmem:[%s7 + $0x3a4] sm:$0xf]
    %v394 = vld [vmem:[%s7 + $0x3a8] sm:$0xf]
    %v395 = vld [vmem:[%s7 + $0x3ac] sm:$0xf]
    %v396 = vld [vmem:[%s7 + $0x3b0] sm:$0xf]
    %v397 = vld [vmem:[%s7 + $0x3b4] sm:$0xf]
    %v398 = vld [vmem:[%s7 + $0x3b8] sm:$0xf]
    %v399 = vld [vmem:[%s7 + $0x3bc] sm:$0xf]
    %v400 = vld [vmem:[%s7 + $0x3c0] sm:$0xf]
    %v401 = vld [vmem:[%s7 + $0x3c4] sm:$0xf]
    %v402 = vld [vmem:[%s7 + $0x3c8] sm:$0xf]
    %v403 = vld [vmem:[%s7 + $0x3cc] sm:$0xf]
    %v404 = vld [vmem:[%s7 + $0x3d0] sm:$0xf]
    %v405 = vld [vmem:[%s7 + $0x3d4] sm:$0xf]
    %v406 = vld [vmem:[%s7 + $0x3d8] sm:$0xf]
    %v407 = vld [vmem:[%s7 + $0x3dc] sm:$0xf]
    %v408 = vld [vmem:[%s7 + $0x3e0] sm:$0xf]
    %v409 = vld [vmem:[%s7 + $0x3e4] sm:$0xf]
    %v410 = vld [vmem:[%s7 + $0x3e8] sm:$0xf]
    %v411 = vld [vmem:[%s7 + $0x3ec] sm:$0xf]
    %v412 = vld [vmem:[%s7 + $0x3f0] sm:$0xf]
    %v413 = vld [vmem:[%s7 + $0x3f4] sm:$0xf]
    %v414 = vld [vmem:[%s7 + $0x3f8] sm:$0xf]
    %v415 = vld [vmem:[%s7 + $0x3fc] sm:$0xf]
    %v416 = vld [vmem:[%s7 + $0x400] sm:$0xf]
    %v417 = vld [vmem:[%s7 + $0x404] sm:$0xf]
    %v418 = vld [vmem:[%s7 + $0x408] sm:$0xf]
    %v419 = vld [vmem:[%s7 + $0x40c] sm:$0xf]
    %v420 = vld [vmem:[%s7 + $0x410] sm:$0xf]
    %v421 = vld [vmem:[%s7 + $0x414] sm:$0xf]
    %v422 = vld [vmem:[%s7 + $0x418] sm:$0xf]
    %v423 = vld [vmem:[%s7 + $0x41c] sm:$0xf]
    %v424 = vld [vmem:[%s7 + $0x420] sm:$0xf]
    %v425 = vld [vmem:[%s7 + $0x424] sm:$0xf]
    %v426 = vld [vmem:[%s7 + $0x428] sm:$0xf]
    %v427 = vld [vmem:[%s7 + $0x42c] sm:$0xf]
    %v428 = vld [vmem:[%s7 + $0x430] sm:$0xf]
    %v429 = vld [vmem:[%s7 + $0x434] sm:$0xf]
    %v430 = vld [vmem:[%s7 + $0x438] sm:$0xf]
    %v431 = vld [vmem:[%s7 + $0x43c] sm:$0xf]
    %v432 = vld [vmem:[%s7 + $0x440] sm:$0xf]
    %v433 = vld [vmem:[%s7 + $0x444] sm:$0xf]
    %v434 = vld [vmem:[%s7 + $0x448] sm:$0xf]
    %v435 = vld [vmem:[%s7 + $0x44c] sm:$0xf]
    %v436 = vld [vmem:[%s7 + $0x450] sm:$0xf]
    %v437 = vld [vmem:[%s7 + $0x454] sm:$0xf]
    %v438 = vld [vmem:[%s7 + $0x458] sm:$0xf]
    %v439 = vld [vmem:[%s7 + $0x45c] sm:$0xf]
    %v440 = vld [vmem:[%s7 + $0x460] sm:$0xf]
    %v441 = vld [vmem:[%s7 + $0x464] sm:$0xf]
    %v442 = vld [vmem:[%s7 + $0x468] sm:$0xf]
    %v443 = vld [vmem:[%s7 + $0x46c] sm:$0xf]
    %v444 = vld [vmem:[%s7 + $0x470] sm:$0xf]
    %v445 = vld [vmem:[%s7 + $0x474] sm:$0xf]
    %v446 = vld [vmem:[%s7 + $0x478] sm:$0xf]
    %v447 = vld [vmem:[%s7 + $0x47c] sm:$0xf]
    %v448 = vld [vmem:[%s7 + $0x480] sm:$0xf]
    %v449 = vld [vmem:[%s7 + $0x484] sm:$0xf]
    %v450 = vld [vmem:[%s7 + $0x488] sm:$0xf]
    %v451 = vld [vmem:[%s7 + $0x48c] sm:$0xf]
    %v452 = vld [vmem:[%s7 + $0x490] sm:$0xf]
    %v453 = vld [vmem:[%s7 + $0x494] sm:$0xf]
    %v454 = vld [vmem:[%s7 + $0x498] sm:$0xf]
    %v455 = vld [vmem:[%s7 + $0x49c] sm:$0xf]
    %v456 = vld [vmem:[%s7 + $0x4a0] sm:$0xf]
    %v457 = vld [vmem:[%s7 + $0x4a4] sm:$0xf]
    %v458 = vld [vmem:[%s7 + $0x4a8] sm:$0xf]
    %v459 = vld [vmem:[%s7 + $0x4ac] sm:$0xf]
    %v460 = vld [vmem:[%s7 + $0x4b0] sm:$0xf]
    %v461 = vld [vmem:[%s7 + $0x4b4] sm:$0xf]
    %v462 = vld [vmem:[%s7 + $0x4b8] sm:$0xf]
    %v463 = vld [vmem:[%s7 + $0x4bc] sm:$0xf]
    %v464 = vld [vmem:[%s7 + $0x4c0] sm:$0xf]
    %v465 = vld [vmem:[%s7 + $0x4c4] sm:$0xf]
    %v466 = vld [vmem:[%s7 + $0x4c8] sm:$0xf]
    %v467 = vld [vmem:[%s7 + $0x4cc] sm:$0xf]
    %v468 = vld [vmem:[%s7 + $0x4d0] sm:$0xf]
    %v469 = vld [vmem:[%s7 + $0x4d4] sm:$0xf]
    %v470 = vld [vmem:[%s7 + $0x4d8] sm:$0xf]
    %v471 = vld [vmem:[%s7 + $0x4dc] sm:$0xf]
    %v472 = vld [vmem:[%s7 + $0x4e0] sm:$0xf]
    %v473 = vld [vmem:[%s7 + $0x4e4] sm:$0xf]
    %v474 = vld [vmem:[%s7 + $0x4e8] sm:$0xf]
    %v475 = vld [vmem:[%s7 + $0x4ec] sm:$0xf]
    %v476 = vld [vmem:[%s7 + $0x4f0] sm:$0xf]
    %v477 = vld [vmem:[%s7 + $0x4f4] sm:$0xf]
    %v478 = vld [vmem:[%s7 + $0x4f8] sm:$0xf]
    %v479 = vld [vmem:[%s7 + $0x4fc] sm:$0xf]
    %v480 = vld [vmem:[%s7 + $0x500] sm:$0xf]
    %v481 = vld [vmem:[%s7 + $0x504] sm:$0xf]
    %v482 = vld [vmem:[%s7 + $0x508] sm:$0xf]
    %v483 = vld [vmem:[%s7 + $0x50c] sm:$0xf]
    %v484 = vld [vmem:[%s7 + $0x510] sm:$0xf]
    %v485 = vld [vmem:[%s7 + $0x514] sm:$0xf]
    %v486 = vld [vmem:[%s7 + $0x518] sm:$0xf]
    %v487 = vld [vmem:[%s7 + $0x51c] sm:$0xf]
    %v488 = vld [vmem:[%s7 + $0x520] sm:$0xf]
    %v489 = vld [vmem:[%s7 + $0x524] sm:$0xf]
    %v490 = vld [vmem:[%s7 + $0x528] sm:$0xf]
    %v491 = vld [vmem:[%s7 + $0x52c] sm:$0xf]
    %v492 = vld [vmem:[%s7 + $0x530] sm:$0xf]
    %v493 = vld [vmem:[%s7 + $0x534] sm:$0xf]
    %v494 = vld [vmem:[%s7 + $0x538] sm:$0xf]
    %v495 = vld [vmem:[%s7 + $0x53c] sm:$0xf]
    %v496 = vld [vmem:[%s7 + $0x540] sm:$0xf]
    %v497 = vld [vmem:[%s7 + $0x544] sm:$0xf]
    %v498 = vld [vmem:[%s7 + $0x548] sm:$0xf]
    %v499 = vld [vmem:[%s7 + $0x54c] sm:$0xf]
    %v500 = vld [vmem:[%s7 + $0x550] sm:$0xf]
    %v501 = vld [vmem:[%s7 + $0x554] sm:$0xf]
    %v502 = vld [vmem:[%s7 + $0x558] sm:$0xf]
    %v503 = vld [vmem:[%s7 + $0x55c] sm:$0xf]
    %v504 = vld [vmem:[%s7 + $0x560] sm:$0xf]
    %v505 = vld [vmem:[%s7 + $0x564] sm:$0xf]
    %v506 = vld [vmem:[%s7 + $0x568] sm:$0xf]
    %v507 = vld [vmem:[%s7 + $0x56c] sm:$0xf]
    %v508 = vld [vmem:[%s7 + $0x570] sm:$0xf]
    %v509 = vld [vmem:[%s7 + $0x574] sm:$0xf]
    %v510 = vld [vmem:[%s7 + $0x578] sm:$0xf]
    %v511 = vld [vmem:[%s7 + $0x57c] sm:$0xf]
    %v512 = vld [vmem:[%s7 + $0x580] sm:$0xf]
    %v513 = vld [vmem:[%s7 + $0x584] sm:$0xf]
    %v514 = vld [vmem:[%s7 + $0x588] sm:$0xf]
    %v515 = vld [vmem:[%s7 + $0x58c] sm:$0xf]
    %v516 = vld [vmem:[%s7 + $0x590] sm:$0xf]
    %v517 = vld [vmem:[%s7 + $0x594] sm:$0xf]
    %v518 = vld [vmem:[%s7 + $0x598] sm:$0xf]
    %v519 = vld [vmem:[%s7 + $0x59c] sm:$0xf]
    %v520 = vld [vmem:[%s7 + $0x5a0] sm:$0xf]
    %v521 = vld [vmem:[%s7 + $0x5a4] sm:$0xf]
    %v522 = vld [vmem:[%s7 + $0x5a8] sm:$0xf]
    %v523 = vld [vmem:[%s7 + $0x5ac] sm:$0xf]
    %v524 = vld [vmem:[%s7 + $0x5b0] sm:$0xf]
    %v525 = vld [vmem:[%s7 + $0x5b4] sm:$0xf]
    %v526 = vld [vmem:[%s7 + $0x5b8] sm:$0xf]
    %v527 = vld [vmem:[%s7 + $0x5bc] sm:$0xf]
    %v528 = vld [vmem:[%s7 + $0x5c0] sm:$0xf]
    %v529 = vld [vmem:[%s7 + $0x5c4] sm:$0xf]
    %v530 = vld [vmem:[%s7 + $0x5c8] sm:$0xf]
    %v531 = vld [vmem:[%s7 + $0x5cc] sm:$0xf]
    %v532 = vld [vmem:[%s7 + $0x5d0] sm:$0xf]
    %v533 = vld [vmem:[%s7 + $0x5d4] sm:$0xf]
    %v534 = vld [vmem:[%s7 + $0x5d8] sm:$0xf]
    %v535 = vld [vmem:[%s7 + $0x5dc] sm:$0xf]
    %v536 = vld [vmem:[%s7 + $0x5e0] sm:$0xf]
    %v537 = vld [vmem:[%s7 + $0x5e4] sm:$0xf]
    %v538 = vld [vmem:[%s7 + $0x5e8] sm:$0xf]
    %v539 = vld [vmem:[%s7 + $0x5ec] sm:$0xf]
    %v540 = vld [vmem:[%s7 + $0x5f0] sm:$0xf]
    %v541 = vld [vmem:[%s7 + $0x5f4] sm:$0xf]
    %v542 = vld [vmem:[%s7 + $0x5f8] sm:$0xf]
    %v543 = vld [vmem:[%s7 + $0x5fc] sm:$0xf]
    %v544 = vld [vmem:[%s3] sm:$0xff]
    %v545 = vld [vmem:[%s3 + $0x8] sm:$0xff]
    %v570 = vunpack.c.l.b16 %v136
    %v571 = vunpack.c.h.b16 %v136
    %v572 = vunpack.c.l.b16 %v137
    %v573 = vunpack.c.h.b16 %v137
    %v574 = vunpack.c.l.b16 %v138
    %v575 = vunpack.c.h.b16 %v138
    %v576 = vunpack.c.l.b16 %v139
    %v577 = vunpack.c.h.b16 %v139
    %v578 = vunpack.c.l.b16 %v140
    %v579 = vunpack.c.h.b16 %v140
    %v580 = vunpack.c.l.b16 %v141
    %v581 = vunpack.c.h.b16 %v141
    %v582 = vunpack.c.l.b16 %v142
    %v583 = vunpack.c.h.b16 %v142
    %v584 = vunpack.c.l.b16 %v143
    %v585 = vunpack.c.h.b16 %v143
    %v586 = vunpack.c.l.b16 %v144
    %v587 = vunpack.c.h.b16 %v144
    %v588 = vunpack.c.l.b16 %v145
    %v589 = vunpack.c.h.b16 %v145
    %v590 = vunpack.c.l.b16 %v146
    %v591 = vunpack.c.h.b16 %v146
    %v592 = vunpack.c.l.b16 %v147
    %v593 = vunpack.c.h.b16 %v147
    %v594 = vunpack.c.l.b16 %v148
    %v595 = vunpack.c.h.b16 %v148
    %v596 = vunpack.c.l.b16 %v149
    %v597 = vunpack.c.h.b16 %v149
    %v598 = vunpack.c.l.b16 %v150
    %v599 = vunpack.c.h.b16 %v150
    %v600 = vunpack.c.l.b16 %v151
    %v601 = vunpack.c.h.b16 %v151
    %v602 = vunpack.c.l.b16 %v152
    %v603 = vunpack.c.h.b16 %v152
    %v604 = vunpack.c.l.b16 %v153
    %v605 = vunpack.c.h.b16 %v153
    %v606 = vunpack.c.l.b16 %v154
    %v607 = vunpack.c.h.b16 %v154
    %v608 = vunpack.c.l.b16 %v155
    %v609 = vunpack.c.h.b16 %v155
    %v610 = vunpack.c.l.b16 %v156
    %v611 = vunpack.c.h.b16 %v156
    %v612 = vunpack.c.l.b16 %v157
    %v613 = vunpack.c.h.b16 %v157
    %v614 = vunpack.c.l.b16 %v158
    %v615 = vunpack.c.h.b16 %v158
    %v616 = vunpack.c.l.b16 %v159
    %v617 = vunpack.c.h.b16 %v159
    %v618 = vpack.c.b16 %v594, %v570
    %v619 = vpack.c.b16 %v595, %v571
    %v620 = vpack.c.b16 %v596, %v572
    %v621 = vpack.c.b16 %v597, %v573
    %v622 = vpack.c.b16 %v598, %v574
    %v623 = vpack.c.b16 %v599, %v575
    %v624 = vpack.c.b16 %v600, %v576
    %v625 = vpack.c.b16 %v601, %v577
    %v626 = vpack.c.b16 %v602, %v578
    %v627 = vpack.c.b16 %v603, %v579
    %v628 = vpack.c.b16 %v604, %v580
    %v629 = vpack.c.b16 %v605, %v581
    %v630 = vpack.c.b16 %v606, %v582
    %v631 = vpack.c.b16 %v607, %v583
    %v632 = vpack.c.b16 %v608, %v584
    %v633 = vpack.c.b16 %v609, %v585
    %v634 = vpack.c.b16 %v610, %v586
    %v635 = vpack.c.b16 %v611, %v587
    %v636 = vpack.c.b16 %v612, %v588
    %v637 = vpack.c.b16 %v613, %v589
    %v638 = vpack.c.b16 %v614, %v590
    %v639 = vpack.c.b16 %v615, %v591
    %v640 = vpack.c.b16 %v616, %v592
    %v641 = vpack.c.b16 %v617, %v593
    %v1050 = vunpack.c.l.b16 %v160
    %v1051 = vunpack.c.l.b16 %v161
    %v1052 = vunpack.c.l.b16 %v162
    %v1053 = vunpack.c.l.b16 %v163
    %v1054 = vunpack.c.l.b16 %v164
    %v1055 = vunpack.c.l.b16 %v165
    %v1056 = vunpack.c.l.b16 %v166
    %v1057 = vunpack.c.l.b16 %v167
    %v1058 = vunpack.c.l.b16 %v168
    %v1059 = vunpack.c.l.b16 %v169
    %v1060 = vunpack.c.l.b16 %v170
    %v1061 = vunpack.c.l.b16 %v171
    %v1062 = vunpack.c.l.b16 %v172
    %v1063 = vunpack.c.l.b16 %v173
    %v1064 = vunpack.c.l.b16 %v174
    %v1065 = vunpack.c.l.b16 %v175
    %v1066 = vunpack.c.l.b16 %v176
    %v1067 = vunpack.c.l.b16 %v177
    %v1068 = vunpack.c.l.b16 %v178
    %v1069 = vunpack.c.l.b16 %v179
    %v1070 = vunpack.c.l.b16 %v180
    %v1071 = vunpack.c.l.b16 %v181
    %v1072 = vunpack.c.l.b16 %v182
    %v1073 = vunpack.c.l.b16 %v183
    %v1074 = vunpack.c.l.b16 %v184
    %v1075 = vunpack.c.l.b16 %v185
    %v1076 = vunpack.c.l.b16 %v186
    %v1077 = vunpack.c.l.b16 %v187
    %v1078 = vunpack.c.l.b16 %v188
    %v1079 = vunpack.c.l.b16 %v189
    %v1080 = vunpack.c.l.b16 %v190
    %v1081 = vunpack.c.l.b16 %v191
    %v1082 = vunpack.c.l.b16 %v192
    %v1083 = vunpack.c.l.b16 %v193
    %v1084 = vunpack.c.l.b16 %v194
    %v1085 = vunpack.c.l.b16 %v195
    %v1086 = vunpack.c.l.b16 %v196
    %v1087 = vunpack.c.l.b16 %v197
    %v1088 = vunpack.c.l.b16 %v198
    %v1089 = vunpack.c.l.b16 %v199
    %v1090 = vunpack.c.l.b16 %v200
    %v1091 = vunpack.c.l.b16 %v201
    %v1092 = vunpack.c.l.b16 %v202
    %v1093 = vunpack.c.l.b16 %v203
    %v1094 = vunpack.c.l.b16 %v204
    %v1095 = vunpack.c.l.b16 %v205
    %v1096 = vunpack.c.l.b16 %v206
    %v1097 = vunpack.c.l.b16 %v207
    %v1098 = vunpack.c.l.b16 %v208
    %v1099 = vunpack.c.l.b16 %v209
    %v1100 = vunpack.c.l.b16 %v210
    %v1101 = vunpack.c.l.b16 %v211
    %v1102 = vunpack.c.l.b16 %v212
    %v1103 = vunpack.c.l.b16 %v213
    %v1104 = vunpack.c.l.b16 %v214
    %v1105 = vunpack.c.l.b16 %v215
    %v1106 = vunpack.c.l.b16 %v216
    %v1107 = vunpack.c.l.b16 %v217
    %v1108 = vunpack.c.l.b16 %v218
    %v1109 = vunpack.c.l.b16 %v219
    %v1110 = vunpack.c.l.b16 %v220
    %v1111 = vunpack.c.l.b16 %v221
    %v1112 = vunpack.c.l.b16 %v222
    %v1113 = vunpack.c.l.b16 %v223
    %v1114 = vunpack.c.l.b16 %v224
    %v1115 = vunpack.c.l.b16 %v225
    %v1116 = vunpack.c.l.b16 %v226
    %v1117 = vunpack.c.l.b16 %v227
    %v1118 = vunpack.c.l.b16 %v228
    %v1119 = vunpack.c.l.b16 %v229
    %v1120 = vunpack.c.l.b16 %v230
    %v1121 = vunpack.c.l.b16 %v231
    %v1122 = vunpack.c.l.b16 %v232
    %v1123 = vunpack.c.l.b16 %v233
    %v1124 = vunpack.c.l.b16 %v234
    %v1125 = vunpack.c.l.b16 %v235
    %v1126 = vunpack.c.l.b16 %v236
    %v1127 = vunpack.c.l.b16 %v237
    %v1128 = vunpack.c.l.b16 %v238
    %v1129 = vunpack.c.l.b16 %v239
    %v1130 = vunpack.c.l.b16 %v240
    %v1131 = vunpack.c.l.b16 %v241
    %v1132 = vunpack.c.l.b16 %v242
    %v1133 = vunpack.c.l.b16 %v243
    %v1134 = vunpack.c.l.b16 %v244
    %v1135 = vunpack.c.l.b16 %v245
    %v1136 = vunpack.c.l.b16 %v246
    %v1137 = vunpack.c.l.b16 %v247
    %v1138 = vunpack.c.l.b16 %v248
    %v1139 = vunpack.c.l.b16 %v249
    %v1140 = vunpack.c.l.b16 %v250
    %v1141 = vunpack.c.l.b16 %v251
    %v1142 = vunpack.c.l.b16 %v252
    %v1143 = vunpack.c.l.b16 %v253
    %v1144 = vunpack.c.l.b16 %v254
    %v1145 = vunpack.c.l.b16 %v255
    %v1146 = vunpack.c.l.b16 %v256
    %v1147 = vunpack.c.l.b16 %v257
    %v1148 = vunpack.c.l.b16 %v258
    %v1149 = vunpack.c.l.b16 %v259
    %v1150 = vunpack.c.l.b16 %v260
    %v1151 = vunpack.c.l.b16 %v261
    %v1152 = vunpack.c.l.b16 %v262
    %v1153 = vunpack.c.l.b16 %v263
    %v1154 = vunpack.c.l.b16 %v264
    %v1155 = vunpack.c.l.b16 %v265
    %v1156 = vunpack.c.l.b16 %v266
    %v1157 = vunpack.c.l.b16 %v267
    %v1158 = vunpack.c.l.b16 %v268
    %v1159 = vunpack.c.l.b16 %v269
    %v1160 = vunpack.c.l.b16 %v270
    %v1161 = vunpack.c.l.b16 %v271
    %v1162 = vunpack.c.l.b16 %v272
    %v1163 = vunpack.c.l.b16 %v273
    %v1164 = vunpack.c.l.b16 %v274
    %v1165 = vunpack.c.l.b16 %v275
    %v1166 = vunpack.c.l.b16 %v276
    %v1167 = vunpack.c.l.b16 %v277
    %v1168 = vunpack.c.l.b16 %v278
    %v1169 = vunpack.c.l.b16 %v279
    %v1170 = vunpack.c.l.b16 %v280
    %v1171 = vunpack.c.l.b16 %v281
    %v1172 = vunpack.c.l.b16 %v282
    %v1173 = vunpack.c.l.b16 %v283
    %v1174 = vunpack.c.l.b16 %v284
    %v1175 = vunpack.c.l.b16 %v285
    %v1176 = vunpack.c.l.b16 %v286
    %v1177 = vunpack.c.l.b16 %v287
    %v1178 = vunpack.c.l.b16 %v288
    %v1179 = vunpack.c.l.b16 %v289
    %v1180 = vunpack.c.l.b16 %v290
    %v1181 = vunpack.c.l.b16 %v291
    %v1182 = vunpack.c.l.b16 %v292
    %v1183 = vunpack.c.l.b16 %v293
    %v1184 = vunpack.c.l.b16 %v294
    %v1185 = vunpack.c.l.b16 %v295
    %v1186 = vunpack.c.l.b16 %v296
    %v1187 = vunpack.c.l.b16 %v297
    %v1188 = vunpack.c.l.b16 %v298
    %v1189 = vunpack.c.l.b16 %v299
    %v1190 = vunpack.c.l.b16 %v300
    %v1191 = vunpack.c.l.b16 %v301
    %v1192 = vunpack.c.l.b16 %v302
    %v1193 = vunpack.c.l.b16 %v303
    %v1194 = vunpack.c.l.b16 %v304
    %v1195 = vunpack.c.l.b16 %v305
    %v1196 = vunpack.c.l.b16 %v306
    %v1197 = vunpack.c.l.b16 %v307
    %v1198 = vunpack.c.l.b16 %v308
    %v1199 = vunpack.c.l.b16 %v309
    %v1200 = vunpack.c.l.b16 %v310
    %v1201 = vunpack.c.l.b16 %v311
    %v1202 = vunpack.c.l.b16 %v312
    %v1203 = vunpack.c.l.b16 %v313
    %v1204 = vunpack.c.l.b16 %v314
    %v1205 = vunpack.c.l.b16 %v315
    %v1206 = vunpack.c.l.b16 %v316
    %v1207 = vunpack.c.l.b16 %v317
    %v1208 = vunpack.c.l.b16 %v318
    %v1209 = vunpack.c.l.b16 %v319
    %v1210 = vunpack.c.l.b16 %v320
    %v1211 = vunpack.c.l.b16 %v321
    %v1212 = vunpack.c.l.b16 %v322
    %v1213 = vunpack.c.l.b16 %v323
    %v1214 = vunpack.c.l.b16 %v324
    %v1215 = vunpack.c.l.b16 %v325
    %v1216 = vunpack.c.l.b16 %v326
    %v1217 = vunpack.c.l.b16 %v327
    %v1218 = vunpack.c.l.b16 %v328
    %v1219 = vunpack.c.l.b16 %v329
    %v1220 = vunpack.c.l.b16 %v330
    %v1221 = vunpack.c.l.b16 %v331
    %v1222 = vunpack.c.l.b16 %v332
    %v1223 = vunpack.c.l.b16 %v333
    %v1224 = vunpack.c.l.b16 %v334
    %v1225 = vunpack.c.l.b16 %v335
    %v1226 = vunpack.c.l.b16 %v336
    %v1227 = vunpack.c.l.b16 %v337
    %v1228 = vunpack.c.l.b16 %v338
    %v1229 = vunpack.c.l.b16 %v339
    %v1230 = vunpack.c.l.b16 %v340
    %v1231 = vunpack.c.l.b16 %v341
    %v1232 = vunpack.c.l.b16 %v342
    %v1233 = vunpack.c.l.b16 %v343
    %v1234 = vunpack.c.l.b16 %v344
    %v1235 = vunpack.c.l.b16 %v345
    %v1236 = vunpack.c.l.b16 %v346
    %v1237 = vunpack.c.l.b16 %v347
    %v1238 = vunpack.c.l.b16 %v348
    %v1239 = vunpack.c.l.b16 %v349
    %v1240 = vunpack.c.l.b16 %v350
    %v1241 = vunpack.c.l.b16 %v351
    %v1242 = vunpack.c.l.b16 %v352
    %v1243 = vunpack.c.l.b16 %v353
    %v1244 = vunpack.c.l.b16 %v354
    %v1245 = vunpack.c.l.b16 %v355
    %v1246 = vunpack.c.l.b16 %v356
    %v1247 = vunpack.c.l.b16 %v357
    %v1248 = vunpack.c.l.b16 %v358
    %v1249 = vunpack.c.l.b16 %v359
    %v1250 = vunpack.c.l.b16 %v360
    %v1251 = vunpack.c.l.b16 %v361
    %v1252 = vunpack.c.l.b16 %v362
    %v1253 = vunpack.c.l.b16 %v363
    %v1254 = vunpack.c.l.b16 %v364
    %v1255 = vunpack.c.l.b16 %v365
    %v1256 = vunpack.c.l.b16 %v366
    %v1257 = vunpack.c.l.b16 %v367
    %v1258 = vunpack.c.l.b16 %v368
    %v1259 = vunpack.c.l.b16 %v369
    %v1260 = vunpack.c.l.b16 %v370
    %v1261 = vunpack.c.l.b16 %v371
    %v1262 = vunpack.c.l.b16 %v372
    %v1263 = vunpack.c.l.b16 %v373
    %v1264 = vunpack.c.l.b16 %v374
    %v1265 = vunpack.c.l.b16 %v375
    %v1266 = vunpack.c.l.b16 %v376
    %v1267 = vunpack.c.l.b16 %v377
    %v1268 = vunpack.c.l.b16 %v378
    %v1269 = vunpack.c.l.b16 %v379
    %v1270 = vunpack.c.l.b16 %v380
    %v1271 = vunpack.c.l.b16 %v381
    %v1272 = vunpack.c.l.b16 %v382
    %v1273 = vunpack.c.l.b16 %v383
    %v1274 = vunpack.c.l.b16 %v384
    %v1275 = vunpack.c.l.b16 %v385
    %v1276 = vunpack.c.l.b16 %v386
    %v1277 = vunpack.c.l.b16 %v387
    %v1278 = vunpack.c.l.b16 %v388
    %v1279 = vunpack.c.l.b16 %v389
    %v1280 = vunpack.c.l.b16 %v390
    %v1281 = vunpack.c.l.b16 %v391
    %v1282 = vunpack.c.l.b16 %v392
    %v1283 = vunpack.c.l.b16 %v393
    %v1284 = vunpack.c.l.b16 %v394
    %v1285 = vunpack.c.l.b16 %v395
    %v1286 = vunpack.c.l.b16 %v396
    %v1287 = vunpack.c.l.b16 %v397
    %v1288 = vunpack.c.l.b16 %v398
    %v1289 = vunpack.c.l.b16 %v399
    %v1290 = vunpack.c.l.b16 %v400
    %v1291 = vunpack.c.l.b16 %v401
    %v1292 = vunpack.c.l.b16 %v402
    %v1293 = vunpack.c.l.b16 %v403
    %v1294 = vunpack.c.l.b16 %v404
    %v1295 = vunpack.c.l.b16 %v405
    %v1296 = vunpack.c.l.b16 %v406
    %v1297 = vunpack.c.l.b16 %v407
    %v1298 = vunpack.c.l.b16 %v408
    %v1299 = vunpack.c.l.b16 %v409
    %v1300 = vunpack.c.l.b16 %v410
    %v1301 = vunpack.c.l.b16 %v411
    %v1302 = vunpack.c.l.b16 %v412
    %v1303 = vunpack.c.l.b16 %v413
    %v1304 = vunpack.c.l.b16 %v414
    %v1305 = vunpack.c.l.b16 %v415
    %v1306 = vunpack.c.l.b16 %v416
    %v1307 = vunpack.c.l.b16 %v417
    %v1308 = vunpack.c.l.b16 %v418
    %v1309 = vunpack.c.l.b16 %v419
    %v1310 = vunpack.c.l.b16 %v420
    %v1311 = vunpack.c.l.b16 %v421
    %v1312 = vunpack.c.l.b16 %v422
    %v1313 = vunpack.c.l.b16 %v423
    %v1314 = vunpack.c.l.b16 %v424
    %v1315 = vunpack.c.l.b16 %v425
    %v1316 = vunpack.c.l.b16 %v426
    %v1317 = vunpack.c.l.b16 %v427
    %v1318 = vunpack.c.l.b16 %v428
    %v1319 = vunpack.c.l.b16 %v429
    %v1320 = vunpack.c.l.b16 %v430
    %v1321 = vunpack.c.l.b16 %v431
    %v1322 = vunpack.c.l.b16 %v432
    %v1323 = vunpack.c.l.b16 %v433
    %v1324 = vunpack.c.l.b16 %v434
    %v1325 = vunpack.c.l.b16 %v435
    %v1326 = vunpack.c.l.b16 %v436
    %v1327 = vunpack.c.l.b16 %v437
    %v1328 = vunpack.c.l.b16 %v438
    %v1329 = vunpack.c.l.b16 %v439
    %v1330 = vunpack.c.l.b16 %v440
    %v1331 = vunpack.c.l.b16 %v441
    %v1332 = vunpack.c.l.b16 %v442
    %v1333 = vunpack.c.l.b16 %v443
    %v1334 = vunpack.c.l.b16 %v444
    %v1335 = vunpack.c.l.b16 %v445
    %v1336 = vunpack.c.l.b16 %v446
    %v1337 = vunpack.c.l.b16 %v447
    %v1338 = vunpack.c.l.b16 %v448
    %v1339 = vunpack.c.l.b16 %v449
    %v1340 = vunpack.c.l.b16 %v450
    %v1341 = vunpack.c.l.b16 %v451
    %v1342 = vunpack.c.l.b16 %v452
    %v1343 = vunpack.c.l.b16 %v453
    %v1344 = vunpack.c.l.b16 %v454
    %v1345 = vunpack.c.l.b16 %v455
    %v1346 = vunpack.c.l.b16 %v456
    %v1347 = vunpack.c.l.b16 %v457
    %v1348 = vunpack.c.l.b16 %v458
    %v1349 = vunpack.c.l.b16 %v459
    %v1350 = vunpack.c.l.b16 %v460
    %v1351 = vunpack.c.l.b16 %v461
    %v1352 = vunpack.c.l.b16 %v462
    %v1353 = vunpack.c.l.b16 %v463
    %v1354 = vunpack.c.l.b16 %v464
    %v1355 = vunpack.c.l.b16 %v465
    %v1356 = vunpack.c.l.b16 %v466
    %v1357 = vunpack.c.l.b16 %v467
    %v1358 = vunpack.c.l.b16 %v468
    %v1359 = vunpack.c.l.b16 %v469
    %v1360 = vunpack.c.l.b16 %v470
    %v1361 = vunpack.c.l.b16 %v471
    %v1362 = vunpack.c.l.b16 %v472
    %v1363 = vunpack.c.l.b16 %v473
    %v1364 = vunpack.c.l.b16 %v474
    %v1365 = vunpack.c.l.b16 %v475
    %v1366 = vunpack.c.l.b16 %v476
    %v1367 = vunpack.c.l.b16 %v477
    %v1368 = vunpack.c.l.b16 %v478
    %v1369 = vunpack.c.l.b16 %v479
    %v1370 = vunpack.c.l.b16 %v480
    %v1371 = vunpack.c.l.b16 %v481
    %v1372 = vunpack.c.l.b16 %v482
    %v1373 = vunpack.c.l.b16 %v483
    %v1374 = vunpack.c.l.b16 %v484
    %v1375 = vunpack.c.l.b16 %v485
    %v1376 = vunpack.c.l.b16 %v486
    %v1377 = vunpack.c.l.b16 %v487
    %v1378 = vunpack.c.l.b16 %v488
    %v1379 = vunpack.c.l.b16 %v489
    %v1380 = vunpack.c.l.b16 %v490
    %v1381 = vunpack.c.l.b16 %v491
    %v1382 = vunpack.c.l.b16 %v492
    %v1383 = vunpack.c.l.b16 %v493
    %v1384 = vunpack.c.l.b16 %v494
    %v1385 = vunpack.c.l.b16 %v495
    %v1386 = vunpack.c.l.b16 %v496
    %v1387 = vunpack.c.l.b16 %v497
    %v1388 = vunpack.c.l.b16 %v498
    %v1389 = vunpack.c.l.b16 %v499
    %v1390 = vunpack.c.l.b16 %v500
    %v1391 = vunpack.c.l.b16 %v501
    %v1392 = vunpack.c.l.b16 %v502
    %v1393 = vunpack.c.l.b16 %v503
    %v1394 = vunpack.c.l.b16 %v504
    %v1395 = vunpack.c.l.b16 %v505
    %v1396 = vunpack.c.l.b16 %v506
    %v1397 = vunpack.c.l.b16 %v507
    %v1398 = vunpack.c.l.b16 %v508
    %v1399 = vunpack.c.l.b16 %v509
    %v1400 = vunpack.c.l.b16 %v510
    %v1401 = vunpack.c.l.b16 %v511
    %v1402 = vunpack.c.l.b16 %v512
    %v1403 = vunpack.c.l.b16 %v513
    %v1404 = vunpack.c.l.b16 %v514
    %v1405 = vunpack.c.l.b16 %v515
    %v1406 = vunpack.c.l.b16 %v516
    %v1407 = vunpack.c.l.b16 %v517
    %v1408 = vunpack.c.l.b16 %v518
    %v1409 = vunpack.c.l.b16 %v519
    %v1410 = vunpack.c.l.b16 %v520
    %v1411 = vunpack.c.l.b16 %v521
    %v1412 = vunpack.c.l.b16 %v522
    %v1413 = vunpack.c.l.b16 %v523
    %v1414 = vunpack.c.l.b16 %v524
    %v1415 = vunpack.c.l.b16 %v525
    %v1416 = vunpack.c.l.b16 %v526
    %v1417 = vunpack.c.l.b16 %v527
    %v1418 = vunpack.c.l.b16 %v528
    %v1419 = vunpack.c.l.b16 %v529
    %v1420 = vunpack.c.l.b16 %v530
    %v1421 = vunpack.c.l.b16 %v531
    %v1422 = vunpack.c.l.b16 %v532
    %v1423 = vunpack.c.l.b16 %v533
    %v1424 = vunpack.c.l.b16 %v534
    %v1425 = vunpack.c.l.b16 %v535
    %v1426 = vunpack.c.l.b16 %v536
    %v1427 = vunpack.c.l.b16 %v537
    %v1428 = vunpack.c.l.b16 %v538
    %v1429 = vunpack.c.l.b16 %v539
    %v1430 = vunpack.c.l.b16 %v540
    %v1431 = vunpack.c.l.b16 %v541
    %v1432 = vunpack.c.l.b16 %v542
    %v1433 = vunpack.c.l.b16 %v543
    %v1434 = vpack.c.b16 %v1051, %v1050
    %v1435 = vpack.c.b16 %v1053, %v1052
    %v1436 = vpack.c.b16 %v1055, %v1054
    %v1437 = vpack.c.b16 %v1057, %v1056
    %v1438 = vpack.c.b16 %v1059, %v1058
    %v1439 = vpack.c.b16 %v1061, %v1060
    %v1440 = vpack.c.b16 %v1063, %v1062
    %v1441 = vpack.c.b16 %v1065, %v1064
    %v1442 = vpack.c.b16 %v1067, %v1066
    %v1443 = vpack.c.b16 %v1069, %v1068
    %v1444 = vpack.c.b16 %v1071, %v1070
    %v1445 = vpack.c.b16 %v1073, %v1072
    %v1446 = vpack.c.b16 %v1075, %v1074
    %v1447 = vpack.c.b16 %v1077, %v1076
    %v1448 = vpack.c.b16 %v1079, %v1078
    %v1449 = vpack.c.b16 %v1081, %v1080
    %v1450 = vpack.c.b16 %v1083, %v1082
    %v1451 = vpack.c.b16 %v1085, %v1084
    %v1452 = vpack.c.b16 %v1087, %v1086
    %v1453 = vpack.c.b16 %v1089, %v1088
    %v1454 = vpack.c.b16 %v1091, %v1090
    %v1455 = vpack.c.b16 %v1093, %v1092
    %v1456 = vpack.c.b16 %v1095, %v1094
    %v1457 = vpack.c.b16 %v1097, %v1096
    %v1458 = vpack.c.b16 %v1099, %v1098
    %v1459 = vpack.c.b16 %v1101, %v1100
    %v1460 = vpack.c.b16 %v1103, %v1102
    %v1461 = vpack.c.b16 %v1105, %v1104
    %v1462 = vpack.c.b16 %v1107, %v1106
    %v1463 = vpack.c.b16 %v1109, %v1108
    %v1464 = vpack.c.b16 %v1111, %v1110
    %v1465 = vpack.c.b16 %v1113, %v1112
    %v1466 = vpack.c.b16 %v1115, %v1114
    %v1467 = vpack.c.b16 %v1117, %v1116
    %v1468 = vpack.c.b16 %v1119, %v1118
    %v1469 = vpack.c.b16 %v1121, %v1120
    %v1470 = vpack.c.b16 %v1123, %v1122
    %v1471 = vpack.c.b16 %v1125, %v1124
    %v1472 = vpack.c.b16 %v1127, %v1126
    %v1473 = vpack.c.b16 %v1129, %v1128
    %v1474 = vpack.c.b16 %v1131, %v1130
    %v1475 = vpack.c.b16 %v1133, %v1132
    %v1476 = vpack.c.b16 %v1135, %v1134
    %v1477 = vpack.c.b16 %v1137, %v1136
    %v1478 = vpack.c.b16 %v1139, %v1138
    %v1479 = vpack.c.b16 %v1141, %v1140
    %v1480 = vpack.c.b16 %v1143, %v1142
    %v1481 = vpack.c.b16 %v1145, %v1144
    %v1482 = vpack.c.b16 %v1147, %v1146
    %v1483 = vpack.c.b16 %v1149, %v1148
    %v1484 = vpack.c.b16 %v1151, %v1150
    %v1485 = vpack.c.b16 %v1153, %v1152
    %v1486 = vpack.c.b16 %v1155, %v1154
    %v1487 = vpack.c.b16 %v1157, %v1156
    %v1488 = vpack.c.b16 %v1159, %v1158
    %v1489 = vpack.c.b16 %v1161, %v1160
    %v1490 = vpack.c.b16 %v1163, %v1162
    %v1491 = vpack.c.b16 %v1165, %v1164
    %v1492 = vpack.c.b16 %v1167, %v1166
    %v1493 = vpack.c.b16 %v1169, %v1168
    %v1494 = vpack.c.b16 %v1171, %v1170
    %v1495 = vpack.c.b16 %v1173, %v1172
    %v1496 = vpack.c.b16 %v1175, %v1174
    %v1497 = vpack.c.b16 %v1177, %v1176
    %v1498 = vpack.c.b16 %v1179, %v1178
    %v1499 = vpack.c.b16 %v1181, %v1180
    %v1500 = vpack.c.b16 %v1183, %v1182
    %v1501 = vpack.c.b16 %v1185, %v1184
    %v1502 = vpack.c.b16 %v1187, %v1186
    %v1503 = vpack.c.b16 %v1189, %v1188
    %v1504 = vpack.c.b16 %v1191, %v1190
    %v1505 = vpack.c.b16 %v1193, %v1192
    %v1506 = vpack.c.b16 %v1195, %v1194
    %v1507 = vpack.c.b16 %v1197, %v1196
    %v1508 = vpack.c.b16 %v1199, %v1198
    %v1509 = vpack.c.b16 %v1201, %v1200
    %v1510 = vpack.c.b16 %v1203, %v1202
    %v1511 = vpack.c.b16 %v1205, %v1204
    %v1512 = vpack.c.b16 %v1207, %v1206
    %v1513 = vpack.c.b16 %v1209, %v1208
    %v1514 = vpack.c.b16 %v1211, %v1210
    %v1515 = vpack.c.b16 %v1213, %v1212
    %v1516 = vpack.c.b16 %v1215, %v1214
    %v1517 = vpack.c.b16 %v1217, %v1216
    %v1518 = vpack.c.b16 %v1219, %v1218
    %v1519 = vpack.c.b16 %v1221, %v1220
    %v1520 = vpack.c.b16 %v1223, %v1222
    %v1521 = vpack.c.b16 %v1225, %v1224
    %v1522 = vpack.c.b16 %v1227, %v1226
    %v1523 = vpack.c.b16 %v1229, %v1228
    %v1524 = vpack.c.b16 %v1231, %v1230
    %v1525 = vpack.c.b16 %v1233, %v1232
    %v1526 = vpack.c.b16 %v1235, %v1234
    %v1527 = vpack.c.b16 %v1237, %v1236
    %v1528 = vpack.c.b16 %v1239, %v1238
    %v1529 = vpack.c.b16 %v1241, %v1240
    %v1530 = vpack.c.b16 %v1243, %v1242
    %v1531 = vpack.c.b16 %v1245, %v1244
    %v1532 = vpack.c.b16 %v1247, %v1246
    %v1533 = vpack.c.b16 %v1249, %v1248
    %v1534 = vpack.c.b16 %v1251, %v1250
    %v1535 = vpack.c.b16 %v1253, %v1252
    %v1536 = vpack.c.b16 %v1255, %v1254
    %v1537 = vpack.c.b16 %v1257, %v1256
    %v1538 = vpack.c.b16 %v1259, %v1258
    %v1539 = vpack.c.b16 %v1261, %v1260
    %v1540 = vpack.c.b16 %v1263, %v1262
    %v1541 = vpack.c.b16 %v1265, %v1264
    %v1542 = vpack.c.b16 %v1267, %v1266
    %v1543 = vpack.c.b16 %v1269, %v1268
    %v1544 = vpack.c.b16 %v1271, %v1270
    %v1545 = vpack.c.b16 %v1273, %v1272
    %v1546 = vpack.c.b16 %v1275, %v1274
    %v1547 = vpack.c.b16 %v1277, %v1276
    %v1548 = vpack.c.b16 %v1279, %v1278
    %v1549 = vpack.c.b16 %v1281, %v1280
    %v1550 = vpack.c.b16 %v1283, %v1282
    %v1551 = vpack.c.b16 %v1285, %v1284
    %v1552 = vpack.c.b16 %v1287, %v1286
    %v1553 = vpack.c.b16 %v1289, %v1288
    %v1554 = vpack.c.b16 %v1291, %v1290
    %v1555 = vpack.c.b16 %v1293, %v1292
    %v1556 = vpack.c.b16 %v1295, %v1294
    %v1557 = vpack.c.b16 %v1297, %v1296
    %v1558 = vpack.c.b16 %v1299, %v1298
    %v1559 = vpack.c.b16 %v1301, %v1300
    %v1560 = vpack.c.b16 %v1303, %v1302
    %v1561 = vpack.c.b16 %v1305, %v1304
    %v1562 = vpack.c.b16 %v1307, %v1306
    %v1563 = vpack.c.b16 %v1309, %v1308
    %v1564 = vpack.c.b16 %v1311, %v1310
    %v1565 = vpack.c.b16 %v1313, %v1312
    %v1566 = vpack.c.b16 %v1315, %v1314
    %v1567 = vpack.c.b16 %v1317, %v1316
    %v1568 = vpack.c.b16 %v1319, %v1318
    %v1569 = vpack.c.b16 %v1321, %v1320
    %v1570 = vpack.c.b16 %v1323, %v1322
    %v1571 = vpack.c.b16 %v1325, %v1324
    %v1572 = vpack.c.b16 %v1327, %v1326
    %v1573 = vpack.c.b16 %v1329, %v1328
    %v1574 = vpack.c.b16 %v1331, %v1330
    %v1575 = vpack.c.b16 %v1333, %v1332
    %v1576 = vpack.c.b16 %v1335, %v1334
    %v1577 = vpack.c.b16 %v1337, %v1336
    %v1578 = vpack.c.b16 %v1339, %v1338
    %v1579 = vpack.c.b16 %v1341, %v1340
    %v1580 = vpack.c.b16 %v1343, %v1342
    %v1581 = vpack.c.b16 %v1345, %v1344
    %v1582 = vpack.c.b16 %v1347, %v1346
    %v1583 = vpack.c.b16 %v1349, %v1348
    %v1584 = vpack.c.b16 %v1351, %v1350
    %v1585 = vpack.c.b16 %v1353, %v1352
    %v1586 = vpack.c.b16 %v1355, %v1354
    %v1587 = vpack.c.b16 %v1357, %v1356
    %v1588 = vpack.c.b16 %v1359, %v1358
    %v1589 = vpack.c.b16 %v1361, %v1360
    %v1590 = vpack.c.b16 %v1363, %v1362
    %v1591 = vpack.c.b16 %v1365, %v1364
    %v1592 = vpack.c.b16 %v1367, %v1366
    %v1593 = vpack.c.b16 %v1369, %v1368
    %v1594 = vpack.c.b16 %v1371, %v1370
    %v1595 = vpack.c.b16 %v1373, %v1372
    %v1596 = vpack.c.b16 %v1375, %v1374
    %v1597 = vpack.c.b16 %v1377, %v1376
    %v1598 = vpack.c.b16 %v1379, %v1378
    %v1599 = vpack.c.b16 %v1381, %v1380
    %v1600 = vpack.c.b16 %v1383, %v1382
    %v1601 = vpack.c.b16 %v1385, %v1384
    %v1602 = vpack.c.b16 %v1387, %v1386
    %v1603 = vpack.c.b16 %v1389, %v1388
    %v1604 = vpack.c.b16 %v1391, %v1390
    %v1605 = vpack.c.b16 %v1393, %v1392
    %v1606 = vpack.c.b16 %v1395, %v1394
    %v1607 = vpack.c.b16 %v1397, %v1396
    %v1608 = vpack.c.b16 %v1399, %v1398
    %v1609 = vpack.c.b16 %v1401, %v1400
    %v1610 = vpack.c.b16 %v1403, %v1402
    %v1611 = vpack.c.b16 %v1405, %v1404
    %v1612 = vpack.c.b16 %v1407, %v1406
    %v1613 = vpack.c.b16 %v1409, %v1408
    %v1614 = vpack.c.b16 %v1411, %v1410
    %v1615 = vpack.c.b16 %v1413, %v1412
    %v1616 = vpack.c.b16 %v1415, %v1414
    %v1617 = vpack.c.b16 %v1417, %v1416
    %v1618 = vpack.c.b16 %v1419, %v1418
    %v1619 = vpack.c.b16 %v1421, %v1420
    %v1620 = vpack.c.b16 %v1423, %v1422
    %v1621 = vpack.c.b16 %v1425, %v1424
    %v1622 = vpack.c.b16 %v1427, %v1426
    %v1623 = vpack.c.b16 %v1429, %v1428
    %v1624 = vpack.c.b16 %v1431, %v1430
    %v1625 = vpack.c.b16 %v1433, %v1432
    %1818 = vmatprep.subr.bf16.mxu0 0
    %1819 = vmatpush1.bf16.msra.mxu0 %v1441
    %1820 = vmatprep.subr.bf16.mxu0 0
    %1821 = vmatpush1.bf16.msra.mxu0 %v1440
    %1822 = vmatprep.subr.bf16.mxu0 0
    %1823 = vmatpush1.bf16.msra.mxu0 %v1439
    %1824 = vmatprep.subr.bf16.mxu0 0
    %1825 = vmatpush1.bf16.msra.mxu0 %v1438
    %1826 = vmatprep.subr.bf16.mxu0 0
    %1827 = vmatpush1.bf16.msra.mxu0 %v1437
    %1828 = vmatprep.subr.bf16.mxu0 0
    %1829 = vmatpush1.bf16.msra.mxu0 %v1436
    %1830 = vmatprep.subr.bf16.mxu0 0
    %1831 = vmatpush1.bf16.msra.mxu0 %v1435
    %1832 = vmatprep.subr.bf16.mxu0 0
    %1833 = vmatpush1.bf16.msra.mxu0 %v1434
    %1834 = vmatprep.subr.bf16.mxu0 0
    %1835 = vmatpush2.bf16.msra.mxu0 %v1449
    %1836 = vmatprep.subr.bf16.mxu0 0
    %1837 = vmatpush2.bf16.msra.mxu0 %v1448
    %1838 = vmatprep.subr.bf16.mxu0 0
    %1839 = vmatpush2.bf16.msra.mxu0 %v1447
    %1840 = vmatprep.subr.bf16.mxu0 0
    %1841 = vmatpush2.bf16.msra.mxu0 %v1446
    %1842 = vmatprep.subr.bf16.mxu0 0
    %1843 = vmatpush2.bf16.msra.mxu0 %v1445
    %1844 = vmatprep.subr.bf16.mxu0 0
    %1845 = vmatpush2.bf16.msra.mxu0 %v1444
    %1846 = vmatprep.subr.bf16.mxu0 0
    %1847 = vmatpush2.bf16.msra.mxu0 %v1443
    %1848 = vmatprep.subr.bf16.mxu0 0
    %1849 = vmatpush2.bf16.msra.mxu0 %v1442
    %1850 = vmatprep.mubr.bf16.mxu0 %v619
    %1851 = vmatmul.mubr.bf16.gmra.mxu0 %v618
    %v1852 = vpop.f32.mrf.mxu0
    %v1853 = vadd.f32 %v544, %v1852
    %v1854 = vpop.f32.mrf.mxu0
    %v1855 = vpop.f32.mrf.mxu0
    %v1856 = vadd.f32 %v545, %v1855
    %v1857 = vpop.f32.mrf.mxu0
    %1858 = vdwg.mxu0
    %1859 = vmatprep.subr.bf16.mxu0 0
    %1860 = vmatpush1.bf16.msra.mxu0 %v1457
    %1861 = vmatprep.subr.bf16.mxu0 0
    %1862 = vmatpush1.bf16.msra.mxu0 %v1456
    %1863 = vmatprep.subr.bf16.mxu0 0
    %1864 = vmatpush1.bf16.msra.mxu0 %v1455
    %1865 = vmatprep.subr.bf16.mxu0 0
    %1866 = vmatpush1.bf16.msra.mxu0 %v1454
    %1867 = vmatprep.subr.bf16.mxu0 0
    %1868 = vmatpush1.bf16.msra.mxu0 %v1453
    %1869 = vmatprep.subr.bf16.mxu0 0
    %1870 = vmatpush1.bf16.msra.mxu0 %v1452
    %1871 = vmatprep.subr.bf16.mxu0 0
    %1872 = vmatpush1.bf16.msra.mxu0 %v1451
    %1873 = vmatprep.subr.bf16.mxu0 0
    %1874 = vmatpush1.bf16.msra.mxu0 %v1450
    %1875 = vmatprep.subr.bf16.mxu0 0
    %1876 = vmatpush2.bf16.msra.mxu0 %v1465
    %1877 = vmatprep.subr.bf16.mxu0 0
    %1878 = vmatpush2.bf16.msra.mxu0 %v1464
    %1879 = vmatprep.subr.bf16.mxu0 0
    %1880 = vmatpush2.bf16.msra.mxu0 %v1463
    %1881 = vmatprep.subr.bf16.mxu0 0
    %1882 = vmatpush2.bf16.msra.mxu0 %v1462
    %1883 = vmatprep.subr.bf16.mxu0 0
    %1884 = vmatpush2.bf16.msra.mxu0 %v1461
    %1885 = vmatprep.subr.bf16.mxu0 0
    %1886 = vmatpush2.bf16.msra.mxu0 %v1460
    %1887 = vmatprep.subr.bf16.mxu0 0
    %1888 = vmatpush2.bf16.msra.mxu0 %v1459
    %1889 = vmatprep.subr.bf16.mxu0 0
    %1890 = vmatpush2.bf16.msra.mxu0 %v1458
    %1891 = vmatprep.mubr.bf16.mxu0 %v621
    %1892 = vmatmul.mubr.bf16.gmra.mxu0 %v620
    %v1893 = vpop.f32.mrf.mxu0
    %v1894 = vadd.f32 %v1853, %v1893
    %v1895 = vpop.f32.mrf.mxu0
    %v1896 = vpop.f32.mrf.mxu0
    %v1897 = vadd.f32 %v1856, %v1896
    %v1898 = vpop.f32.mrf.mxu0
    %1899 = vdwg.mxu0
    %1900 = vmatprep.subr.bf16.mxu0 0
    %1901 = vmatpush1.bf16.msra.mxu0 %v1473
    %1902 = vmatprep.subr.bf16.mxu0 0
    %1903 = vmatpush1.bf16.msra.mxu0 %v1472
    %1904 = vmatprep.subr.bf16.mxu0 0
    %1905 = vmatpush1.bf16.msra.mxu0 %v1471
    %1906 = vmatprep.subr.bf16.mxu0 0
    %1907 = vmatpush1.bf16.msra.mxu0 %v1470
    %1908 = vmatprep.subr.bf16.mxu0 0
    %1909 = vmatpush1.bf16.msra.mxu0 %v1469
    %1910 = vmatprep.subr.bf16.mxu0 0
    %1911 = vmatpush1.bf16.msra.mxu0 %v1468
    %1912 = vmatprep.subr.bf16.mxu0 0
    %1913 = vmatpush1.bf16.msra.mxu0 %v1467
    %1914 = vmatprep.subr.bf16.mxu0 0
    %1915 = vmatpush1.bf16.msra.mxu0 %v1466
    %1916 = vmatprep.subr.bf16.mxu0 0
    %1917 = vmatpush2.bf16.msra.mxu0 %v1481
    %1918 = vmatprep.subr.bf16.mxu0 0
    %1919 = vmatpush2.bf16.msra.mxu0 %v1480
    %1920 = vmatprep.subr.bf16.mxu0 0
    %1921 = vmatpush2.bf16.msra.mxu0 %v1479
    %1922 = vmatprep.subr.bf16.mxu0 0
    %1923 = vmatpush2.bf16.msra.mxu0 %v1478
    %1924 = vmatprep.subr.bf16.mxu0 0
    %1925 = vmatpush2.bf16.msra.mxu0 %v1477
    %1926 = vmatprep.subr.bf16.mxu0 0
    %1927 = vmatpush2.bf16.msra.mxu0 %v1476
    %1928 = vmatprep.subr.bf16.mxu0 0
    %1929 = vmatpush2.bf16.msra.mxu0 %v1475
    %1930 = vmatprep.subr.bf16.mxu0 0
    %1931 = vmatpush2.bf16.msra.mxu0 %v1474
    %1932 = vmatprep.mubr.bf16.mxu0 %v623
    %1933 = vmatmul.mubr.bf16.gmra.mxu0 %v622
    %v1934 = vpop.f32.mrf.mxu0
    %v1935 = vadd.f32 %v1894, %v1934
    %v1936 = vpop.f32.mrf.mxu0
    %v1937 = vpop.f32.mrf.mxu0
    %v1938 = vadd.f32 %v1897, %v1937
    %v1939 = vpop.f32.mrf.mxu0
    %1940 = vdwg.mxu0
    %1941 = vmatprep.subr.bf16.mxu0 0
    %1942 = vmatpush1.bf16.msra.mxu0 %v1489
    %1943 = vmatprep.subr.bf16.mxu0 0
    %1944 = vmatpush1.bf16.msra.mxu0 %v1488
    %1945 = vmatprep.subr.bf16.mxu0 0
    %1946 = vmatpush1.bf16.msra.mxu0 %v1487
    %1947 = vmatprep.subr.bf16.mxu0 0
    %1948 = vmatpush1.bf16.msra.mxu0 %v1486
    %1949 = vmatprep.subr.bf16.mxu0 0
    %1950 = vmatpush1.bf16.msra.mxu0 %v1485
    %1951 = vmatprep.subr.bf16.mxu0 0
    %1952 = vmatpush1.bf16.msra.mxu0 %v1484
    %1953 = vmatprep.subr.bf16.mxu0 0
    %1954 = vmatpush1.bf16.msra.mxu0 %v1483
    %1955 = vmatprep.subr.bf16.mxu0 0
    %1956 = vmatpush1.bf16.msra.mxu0 %v1482
    %1957 = vmatprep.subr.bf16.mxu0 0
    %1958 = vmatpush2.bf16.msra.mxu0 %v1497
    %1959 = vmatprep.subr.bf16.mxu0 0
    %1960 = vmatpush2.bf16.msra.mxu0 %v1496
    %1961 = vmatprep.subr.bf16.mxu0 0
    %1962 = vmatpush2.bf16.msra.mxu0 %v1495
    %1963 = vmatprep.subr.bf16.mxu0 0
    %1964 = vmatpush2.bf16.msra.mxu0 %v1494
    %1965 = vmatprep.subr.bf16.mxu0 0
    %1966 = vmatpush2.bf16.msra.mxu0 %v1493
    %1967 = vmatprep.subr.bf16.mxu0 0
    %1968 = vmatpush2.bf16.msra.mxu0 %v1492
    %1969 = vmatprep.subr.bf16.mxu0 0
    %1970 = vmatpush2.bf16.msra.mxu0 %v1491
    %1971 = vmatprep.subr.bf16.mxu0 0
    %1972 = vmatpush2.bf16.msra.mxu0 %v1490
    %1973 = vmatprep.mubr.bf16.mxu0 %v625
    %1974 = vmatmul.mubr.bf16.gmra.mxu0 %v624
    %v1975 = vpop.f32.mrf.mxu0
    %v1976 = vadd.f32 %v1935, %v1975
    %v1977 = vpop.f32.mrf.mxu0
    %v1978 = vpop.f32.mrf.mxu0
    %v1979 = vadd.f32 %v1938, %v1978
    %v1980 = vpop.f32.mrf.mxu0
    %1981 = vdwg.mxu0
    %1982 = vmatprep.subr.bf16.mxu0 0
    %1983 = vmatpush1.bf16.msra.mxu0 %v1505
    %1984 = vmatprep.subr.bf16.mxu0 0
    %1985 = vmatpush1.bf16.msra.mxu0 %v1504
    %1986 = vmatprep.subr.bf16.mxu0 0
    %1987 = vmatpush1.bf16.msra.mxu0 %v1503
    %1988 = vmatprep.subr.bf16.mxu0 0
    %1989 = vmatpush1.bf16.msra.mxu0 %v1502
    %1990 = vmatprep.subr.bf16.mxu0 0
    %1991 = vmatpush1.bf16.msra.mxu0 %v1501
    %1992 = vmatprep.subr.bf16.mxu0 0
    %1993 = vmatpush1.bf16.msra.mxu0 %v1500
    %1994 = vmatprep.subr.bf16.mxu0 0
    %1995 = vmatpush1.bf16.msra.mxu0 %v1499
    %1996 = vmatprep.subr.bf16.mxu0 0
    %1997 = vmatpush1.bf16.msra.mxu0 %v1498
    %1998 = vmatprep.subr.bf16.mxu0 0
    %1999 = vmatpush2.bf16.msra.mxu0 %v1513
    %2000 = vmatprep.subr.bf16.mxu0 0
    %2001 = vmatpush2.bf16.msra.mxu0 %v1512
    %2002 = vmatprep.subr.bf16.mxu0 0
    %2003 = vmatpush2.bf16.msra.mxu0 %v1511
    %2004 = vmatprep.subr.bf16.mxu0 0
    %2005 = vmatpush2.bf16.msra.mxu0 %v1510
    %2006 = vmatprep.subr.bf16.mxu0 0
    %2007 = vmatpush2.bf16.msra.mxu0 %v1509
    %2008 = vmatprep.subr.bf16.mxu0 0
    %2009 = vmatpush2.bf16.msra.mxu0 %v1508
    %2010 = vmatprep.subr.bf16.mxu0 0
    %2011 = vmatpush2.bf16.msra.mxu0 %v1507
    %2012 = vmatprep.subr.bf16.mxu0 0
    %2013 = vmatpush2.bf16.msra.mxu0 %v1506
    %2014 = vmatprep.mubr.bf16.mxu0 %v627
    %2015 = vmatmul.mubr.bf16.gmra.mxu0 %v626
    %v2016 = vpop.f32.mrf.mxu0
    %v2017 = vadd.f32 %v1976, %v2016
    %v2018 = vpop.f32.mrf.mxu0
    %v2019 = vpop.f32.mrf.mxu0
    %v2020 = vadd.f32 %v1979, %v2019
    %v2021 = vpop.f32.mrf.mxu0
    %2022 = vdwg.mxu0
    %2023 = vmatprep.subr.bf16.mxu0 0
    %2024 = vmatpush1.bf16.msra.mxu0 %v1521
    %2025 = vmatprep.subr.bf16.mxu0 0
    %2026 = vmatpush1.bf16.msra.mxu0 %v1520
    %2027 = vmatprep.subr.bf16.mxu0 0
    %2028 = vmatpush1.bf16.msra.mxu0 %v1519
    %2029 = vmatprep.subr.bf16.mxu0 0
    %2030 = vmatpush1.bf16.msra.mxu0 %v1518
    %2031 = vmatprep.subr.bf16.mxu0 0
    %2032 = vmatpush1.bf16.msra.mxu0 %v1517
    %2033 = vmatprep.subr.bf16.mxu0 0
    %2034 = vmatpush1.bf16.msra.mxu0 %v1516
    %2035 = vmatprep.subr.bf16.mxu0 0
    %2036 = vmatpush1.bf16.msra.mxu0 %v1515
    %2037 = vmatprep.subr.bf16.mxu0 0
    %2038 = vmatpush1.bf16.msra.mxu0 %v1514
    %2039 = vmatprep.subr.bf16.mxu0 0
    %2040 = vmatpush2.bf16.msra.mxu0 %v1529
    %2041 = vmatprep.subr.bf16.mxu0 0
    %2042 = vmatpush2.bf16.msra.mxu0 %v1528
    %2043 = vmatprep.subr.bf16.mxu0 0
    %2044 = vmatpush2.bf16.msra.mxu0 %v1527
    %2045 = vmatprep.subr.bf16.mxu0 0
    %2046 = vmatpush2.bf16.msra.mxu0 %v1526
    %2047 = vmatprep.subr.bf16.mxu0 0
    %2048 = vmatpush2.bf16.msra.mxu0 %v1525
    %2049 = vmatprep.subr.bf16.mxu0 0
    %2050 = vmatpush2.bf16.msra.mxu0 %v1524
    %2051 = vmatprep.subr.bf16.mxu0 0
    %2052 = vmatpush2.bf16.msra.mxu0 %v1523
    %2053 = vmatprep.subr.bf16.mxu0 0
    %2054 = vmatpush2.bf16.msra.mxu0 %v1522
    %2055 = vmatprep.mubr.bf16.mxu0 %v629
    %2056 = vmatmul.mubr.bf16.gmra.mxu0 %v628
    %v2057 = vpop.f32.mrf.mxu0
    %v2058 = vadd.f32 %v2017, %v2057
    %v2059 = vpop.f32.mrf.mxu0
    %v2060 = vpop.f32.mrf.mxu0
    %v2061 = vadd.f32 %v2020, %v2060
    %v2062 = vpop.f32.mrf.mxu0
    %2063 = vdwg.mxu0
    %2064 = vmatprep.subr.bf16.mxu0 0
    %2065 = vmatpush1.bf16.msra.mxu0 %v1537
    %2066 = vmatprep.subr.bf16.mxu0 0
    %2067 = vmatpush1.bf16.msra.mxu0 %v1536
    %2068 = vmatprep.subr.bf16.mxu0 0
    %2069 = vmatpush1.bf16.msra.mxu0 %v1535
    %2070 = vmatprep.subr.bf16.mxu0 0
    %2071 = vmatpush1.bf16.msra.mxu0 %v1534
    %2072 = vmatprep.subr.bf16.mxu0 0
    %2073 = vmatpush1.bf16.msra.mxu0 %v1533
    %2074 = vmatprep.subr.bf16.mxu0 0
    %2075 = vmatpush1.bf16.msra.mxu0 %v1532
    %2076 = vmatprep.subr.bf16.mxu0 0
    %2077 = vmatpush1.bf16.msra.mxu0 %v1531
    %2078 = vmatprep.subr.bf16.mxu0 0
    %2079 = vmatpush1.bf16.msra.mxu0 %v1530
    %2080 = vmatprep.subr.bf16.mxu0 0
    %2081 = vmatpush2.bf16.msra.mxu0 %v1545
    %2082 = vmatprep.subr.bf16.mxu0 0
    %2083 = vmatpush2.bf16.msra.mxu0 %v1544
    %2084 = vmatprep.subr.bf16.mxu0 0
    %2085 = vmatpush2.bf16.msra.mxu0 %v1543
    %2086 = vmatprep.subr.bf16.mxu0 0
    %2087 = vmatpush2.bf16.msra.mxu0 %v1542
    %2088 = vmatprep.subr.bf16.mxu0 0
    %2089 = vmatpush2.bf16.msra.mxu0 %v1541
    %2090 = vmatprep.subr.bf16.mxu0 0
    %2091 = vmatpush2.bf16.msra.mxu0 %v1540
    %2092 = vmatprep.subr.bf16.mxu0 0
    %2093 = vmatpush2.bf16.msra.mxu0 %v1539
    %2094 = vmatprep.subr.bf16.mxu0 0
    %2095 = vmatpush2.bf16.msra.mxu0 %v1538
    %2096 = vmatprep.mubr.bf16.mxu0 %v631
    %2097 = vmatmul.mubr.bf16.gmra.mxu0 %v630
    %v2098 = vpop.f32.mrf.mxu0
    %v2099 = vadd.f32 %v2058, %v2098
    %v2100 = vpop.f32.mrf.mxu0
    %v2101 = vpop.f32.mrf.mxu0
    %v2102 = vadd.f32 %v2061, %v2101
    %v2103 = vpop.f32.mrf.mxu0
    %2104 = vdwg.mxu0
    %2105 = vmatprep.subr.bf16.mxu0 0
    %2106 = vmatpush1.bf16.msra.mxu0 %v1553
    %2107 = vmatprep.subr.bf16.mxu0 0
    %2108 = vmatpush1.bf16.msra.mxu0 %v1552
    %2109 = vmatprep.subr.bf16.mxu0 0
    %2110 = vmatpush1.bf16.msra.mxu0 %v1551
    %2111 = vmatprep.subr.bf16.mxu0 0
    %2112 = vmatpush1.bf16.msra.mxu0 %v1550
    %2113 = vmatprep.subr.bf16.mxu0 0
    %2114 = vmatpush1.bf16.msra.mxu0 %v1549
    %2115 = vmatprep.subr.bf16.mxu0 0
    %2116 = vmatpush1.bf16.msra.mxu0 %v1548
    %2117 = vmatprep.subr.bf16.mxu0 0
    %2118 = vmatpush1.bf16.msra.mxu0 %v1547
    %2119 = vmatprep.subr.bf16.mxu0 0
    %2120 = vmatpush1.bf16.msra.mxu0 %v1546
    %2121 = vmatprep.subr.bf16.mxu0 0
    %2122 = vmatpush2.bf16.msra.mxu0 %v1561
    %2123 = vmatprep.subr.bf16.mxu0 0
    %2124 = vmatpush2.bf16.msra.mxu0 %v1560
    %2125 = vmatprep.subr.bf16.mxu0 0
    %2126 = vmatpush2.bf16.msra.mxu0 %v1559
    %2127 = vmatprep.subr.bf16.mxu0 0
    %2128 = vmatpush2.bf16.msra.mxu0 %v1558
    %2129 = vmatprep.subr.bf16.mxu0 0
    %2130 = vmatpush2.bf16.msra.mxu0 %v1557
    %2131 = vmatprep.subr.bf16.mxu0 0
    %2132 = vmatpush2.bf16.msra.mxu0 %v1556
    %2133 = vmatprep.subr.bf16.mxu0 0
    %2134 = vmatpush2.bf16.msra.mxu0 %v1555
    %2135 = vmatprep.subr.bf16.mxu0 0
    %2136 = vmatpush2.bf16.msra.mxu0 %v1554
    %2137 = vmatprep.mubr.bf16.mxu0 %v633
    %2138 = vmatmul.mubr.bf16.gmra.mxu0 %v632
    %v2139 = vpop.f32.mrf.mxu0
    %v2140 = vadd.f32 %v2099, %v2139
    %v2141 = vpop.f32.mrf.mxu0
    %v2142 = vpop.f32.mrf.mxu0
    %v2143 = vadd.f32 %v2102, %v2142
    %v2144 = vpop.f32.mrf.mxu0
    %2145 = vdwg.mxu0
    %2146 = vmatprep.subr.bf16.mxu0 0
    %2147 = vmatpush1.bf16.msra.mxu0 %v1569
    %2148 = vmatprep.subr.bf16.mxu0 0
    %2149 = vmatpush1.bf16.msra.mxu0 %v1568
    %2150 = vmatprep.subr.bf16.mxu0 0
    %2151 = vmatpush1.bf16.msra.mxu0 %v1567
    %2152 = vmatprep.subr.bf16.mxu0 0
    %2153 = vmatpush1.bf16.msra.mxu0 %v1566
    %2154 = vmatprep.subr.bf16.mxu0 0
    %2155 = vmatpush1.bf16.msra.mxu0 %v1565
    %2156 = vmatprep.subr.bf16.mxu0 0
    %2157 = vmatpush1.bf16.msra.mxu0 %v1564
    %2158 = vmatprep.subr.bf16.mxu0 0
    %2159 = vmatpush1.bf16.msra.mxu0 %v1563
    %2160 = vmatprep.subr.bf16.mxu0 0
    %2161 = vmatpush1.bf16.msra.mxu0 %v1562
    %2162 = vmatprep.subr.bf16.mxu0 0
    %2163 = vmatpush2.bf16.msra.mxu0 %v1577
    %2164 = vmatprep.subr.bf16.mxu0 0
    %2165 = vmatpush2.bf16.msra.mxu0 %v1576
    %2166 = vmatprep.subr.bf16.mxu0 0
    %2167 = vmatpush2.bf16.msra.mxu0 %v1575
    %2168 = vmatprep.subr.bf16.mxu0 0
    %2169 = vmatpush2.bf16.msra.mxu0 %v1574
    %2170 = vmatprep.subr.bf16.mxu0 0
    %2171 = vmatpush2.bf16.msra.mxu0 %v1573
    %2172 = vmatprep.subr.bf16.mxu0 0
    %2173 = vmatpush2.bf16.msra.mxu0 %v1572
    %2174 = vmatprep.subr.bf16.mxu0 0
    %2175 = vmatpush2.bf16.msra.mxu0 %v1571
    %2176 = vmatprep.subr.bf16.mxu0 0
    %2177 = vmatpush2.bf16.msra.mxu0 %v1570
    %2178 = vmatprep.mubr.bf16.mxu0 %v635
    %2179 = vmatmul.mubr.bf16.gmra.mxu0 %v634
    %v2180 = vpop.f32.mrf.mxu0
    %v2181 = vadd.f32 %v2140, %v2180
    %v2182 = vpop.f32.mrf.mxu0
    %v2183 = vpop.f32.mrf.mxu0
    %v2184 = vadd.f32 %v2143, %v2183
    %v2185 = vpop.f32.mrf.mxu0
    %2186 = vdwg.mxu0
    %2187 = vmatprep.subr.bf16.mxu0 0
    %2188 = vmatpush1.bf16.msra.mxu0 %v1585
    %2189 = vmatprep.subr.bf16.mxu0 0
    %2190 = vmatpush1.bf16.msra.mxu0 %v1584
    %2191 = vmatprep.subr.bf16.mxu0 0
    %2192 = vmatpush1.bf16.msra.mxu0 %v1583
    %2193 = vmatprep.subr.bf16.mxu0 0
    %2194 = vmatpush1.bf16.msra.mxu0 %v1582
    %2195 = vmatprep.subr.bf16.mxu0 0
    %2196 = vmatpush1.bf16.msra.mxu0 %v1581
    %2197 = vmatprep.subr.bf16.mxu0 0
    %2198 = vmatpush1.bf16.msra.mxu0 %v1580
    %2199 = vmatprep.subr.bf16.mxu0 0
    %2200 = vmatpush1.bf16.msra.mxu0 %v1579
    %2201 = vmatprep.subr.bf16.mxu0 0
    %2202 = vmatpush1.bf16.msra.mxu0 %v1578
    %2203 = vmatprep.subr.bf16.mxu0 0
    %2204 = vmatpush2.bf16.msra.mxu0 %v1593
    %2205 = vmatprep.subr.bf16.mxu0 0
    %2206 = vmatpush2.bf16.msra.mxu0 %v1592
    %2207 = vmatprep.subr.bf16.mxu0 0
    %2208 = vmatpush2.bf16.msra.mxu0 %v1591
    %2209 = vmatprep.subr.bf16.mxu0 0
    %2210 = vmatpush2.bf16.msra.mxu0 %v1590
    %2211 = vmatprep.subr.bf16.mxu0 0
    %2212 = vmatpush2.bf16.msra.mxu0 %v1589
    %2213 = vmatprep.subr.bf16.mxu0 0
    %2214 = vmatpush2.bf16.msra.mxu0 %v1588
    %2215 = vmatprep.subr.bf16.mxu0 0
    %2216 = vmatpush2.bf16.msra.mxu0 %v1587
    %2217 = vmatprep.subr.bf16.mxu0 0
    %2218 = vmatpush2.bf16.msra.mxu0 %v1586
    %2219 = vmatprep.mubr.bf16.mxu0 %v637
    %2220 = vmatmul.mubr.bf16.gmra.mxu0 %v636
    %v2221 = vpop.f32.mrf.mxu0
    %v2222 = vadd.f32 %v2181, %v2221
    %v2223 = vpop.f32.mrf.mxu0
    %v2224 = vpop.f32.mrf.mxu0
    %v2225 = vadd.f32 %v2184, %v2224
    %v2226 = vpop.f32.mrf.mxu0
    %2227 = vdwg.mxu0
    %2228 = vmatprep.subr.bf16.mxu0 0
    %2229 = vmatpush1.bf16.msra.mxu0 %v1601
    %2230 = vmatprep.subr.bf16.mxu0 0
    %2231 = vmatpush1.bf16.msra.mxu0 %v1600
    %2232 = vmatprep.subr.bf16.mxu0 0
    %2233 = vmatpush1.bf16.msra.mxu0 %v1599
    %2234 = vmatprep.subr.bf16.mxu0 0
    %2235 = vmatpush1.bf16.msra.mxu0 %v1598
    %2236 = vmatprep.subr.bf16.mxu0 0
    %2237 = vmatpush1.bf16.msra.mxu0 %v1597
    %2238 = vmatprep.subr.bf16.mxu0 0
    %2239 = vmatpush1.bf16.msra.mxu0 %v1596
    %2240 = vmatprep.subr.bf16.mxu0 0
    %2241 = vmatpush1.bf16.msra.mxu0 %v1595
    %2242 = vmatprep.subr.bf16.mxu0 0
    %2243 = vmatpush1.bf16.msra.mxu0 %v1594
    %2244 = vmatprep.subr.bf16.mxu0 0
    %2245 = vmatpush2.bf16.msra.mxu0 %v1609
    %2246 = vmatprep.subr.bf16.mxu0 0
    %2247 = vmatpush2.bf16.msra.mxu0 %v1608
    %2248 = vmatprep.subr.bf16.mxu0 0
    %2249 = vmatpush2.bf16.msra.mxu0 %v1607
    %2250 = vmatprep.subr.bf16.mxu0 0
    %2251 = vmatpush2.bf16.msra.mxu0 %v1606
    %2252 = vmatprep.subr.bf16.mxu0 0
    %2253 = vmatpush2.bf16.msra.mxu0 %v1605
    %2254 = vmatprep.subr.bf16.mxu0 0
    %2255 = vmatpush2.bf16.msra.mxu0 %v1604
    %2256 = vmatprep.subr.bf16.mxu0 0
    %2257 = vmatpush2.bf16.msra.mxu0 %v1603
    %2258 = vmatprep.subr.bf16.mxu0 0
    %2259 = vmatpush2.bf16.msra.mxu0 %v1602
    %2260 = vmatprep.mubr.bf16.mxu0 %v639
    %2261 = vmatmul.mubr.bf16.gmra.mxu0 %v638
    %v2262 = vpop.f32.mrf.mxu0
    %v2263 = vadd.f32 %v2222, %v2262
    %v2264 = vpop.f32.mrf.mxu0
    %v2265 = vpop.f32.mrf.mxu0
    %v2266 = vadd.f32 %v2225, %v2265
    %v2267 = vpop.f32.mrf.mxu0
    %2268 = vdwg.mxu0
    %2269 = vmatprep.subr.bf16.mxu0 0
    %2270 = vmatpush1.bf16.msra.mxu0 %v1617
    %2271 = vmatprep.subr.bf16.mxu0 0
    %2272 = vmatpush1.bf16.msra.mxu0 %v1616
    %2273 = vmatprep.subr.bf16.mxu0 0
    %2274 = vmatpush1.bf16.msra.mxu0 %v1615
    %2275 = vmatprep.subr.bf16.mxu0 0
    %2276 = vmatpush1.bf16.msra.mxu0 %v1614
    %2277 = vmatprep.subr.bf16.mxu0 0
    %2278 = vmatpush1.bf16.msra.mxu0 %v1613
    %2279 = vmatprep.subr.bf16.mxu0 0
    %2280 = vmatpush1.bf16.msra.mxu0 %v1612
    %2281 = vmatprep.subr.bf16.mxu0 0
    %2282 = vmatpush1.bf16.msra.mxu0 %v1611
    %2283 = vmatprep.subr.bf16.mxu0 0
    %2284 = vmatpush1.bf16.msra.mxu0 %v1610
    %2285 = vmatprep.subr.bf16.mxu0 0
    %2286 = vmatpush2.bf16.msra.mxu0 %v1625
    %2287 = vmatprep.subr.bf16.mxu0 0
    %2288 = vmatpush2.bf16.msra.mxu0 %v1624
    %2289 = vmatprep.subr.bf16.mxu0 0
    %2290 = vmatpush2.bf16.msra.mxu0 %v1623
    %2291 = vmatprep.subr.bf16.mxu0 0
    %2292 = vmatpush2.bf16.msra.mxu0 %v1622
    %2293 = vmatprep.subr.bf16.mxu0 0
    %2294 = vmatpush2.bf16.msra.mxu0 %v1621
    %2295 = vmatprep.subr.bf16.mxu0 0
    %2296 = vmatpush2.bf16.msra.mxu0 %v1620
    %2297 = vmatprep.subr.bf16.mxu0 0
    %2298 = vmatpush2.bf16.msra.mxu0 %v1619
    %2299 = vmatprep.subr.bf16.mxu0 0
    %2300 = vmatpush2.bf16.msra.mxu0 %v1618
    %2301 = vmatprep.mubr.bf16.mxu0 %v641
    %2302 = vmatmul.mubr.bf16.gmra.mxu0 %v640
    %v2303 = vpop.f32.mrf.mxu0
    %v2304 = vadd.f32 %v2263, %v2303
    %v2305 = vpop.f32.mrf.mxu0
    %v2306 = vpop.f32.mrf.mxu0
    %v2307 = vadd.f32 %v2266, %v2306
    %v2308 = vpop.f32.mrf.mxu0
    %2309 = vdwg.mxu0
    %v2310 = vld [vmem:[%s5] sm:$0xff]
    %vm2311 = vcmask 523264
    %v2312 = vsel %vm2311, %v2304, 0.0
    %2313 = vadd.xlane.f32.xlu0 %v2312
    %v2314 = vpop.xlane.xlu0 %2313
    %v2315 = vsel %vm2311, %v2307, 0.0
    %2316 = vadd.xlane.f32.xlu0 %v2315
    %v2317 = vpop.xlane.xlu0 %2316
    %v2318 = vrcp.pop 64.0
    %v2319 = vmul.f32 %v2314, %v2318
    %v2320 = vmul.f32 %v2317, %v2318
    %v2321 = vsub.f32 %v2304, %v2319
    %v2322 = vsub.f32 %v2307, %v2320
    %v2323 = vmul.f32 %v2321, %v2321
    %v2324 = vmul.f32 %v2322, %v2322
    %v2325 = vsel %vm2311, %v2323, 0.0
    %2326 = vadd.xlane.f32.xlu0 %v2325
    %v2327 = vpop.xlane.xlu0 %2326
    %v2328 = vsel %vm2311, %v2324, 0.0
    %2329 = vadd.xlane.f32.xlu0 %v2328
    %v2330 = vpop.xlane.xlu0 %2329
    %v2331 = vmul.f32 %v2327, %v2318
    %v2332 = vmul.f32 %v2330, %v2318
    %v2333 = vadd.f32 %v2331, 1e-06
    %v2334 = vadd.f32 %v2332, 1e-06
    %v2335 = vrsqrt.pop %v2333
    %v2336 = vrsqrt.pop %v2334
    %v2337 = vmul.f32 %v2321, %v2335
    %v2338 = vmul.f32 %v2322, %v2336
    %v2339 = vld [vmem:[%s9] sm:$0x1]
    %v2341 = vlaneseq
    %v2342 = vshrl.u32 %v2341, 7
    %v2343 = vsub.s32 0, %v2342
    %v2344 = vrot.slane %v2339, %v2343
    %v2346 = vmul.f32 %v2337, %v2344
    %v2347 = vmul.f32 %v2338, %v2344
    %v2348 = vld [vmem:[%s11] sm:$0x1]
    %v2350 = vlaneseq
    %v2351 = vshrl.u32 %v2350, 7
    %v2352 = vsub.s32 0, %v2351
    %v2353 = vrot.slane %v2348, %v2352
    %v2355 = vadd.f32 %v2346, %v2353
    %v2356 = vadd.f32 %v2347, %v2353
    %v2357 = vpack.c.bf16 %v2356, %v2355
    %v2358 = vld [vmem:[%s13] sm:$0xff]
    %v2359 = vld [vmem:[%s13 + $0x8] sm:$0xff]
    %v2360 = vld [vmem:[%s13 + $0x10] sm:$0xff]
    %v2361 = vld [vmem:[%s13 + $0x18] sm:$0xff]
    %v2362 = vld [vmem:[%s13 + $0x20] sm:$0xff]
    %v2363 = vld [vmem:[%s13 + $0x28] sm:$0xff]
    %v2364 = vld [vmem:[%s13 + $0x30] sm:$0xff]
    %v2365 = vld [vmem:[%s13 + $0x38] sm:$0xff]
    %v2366 = vld [vmem:[%s15] sm:$0x3]
    %v2368 = vlaneseq
    %v2369 = vshrl.u32 %v2368, 7
    %v2370 = vsub.s32 0, %v2369
    %v2371 = vrot.slane %v2366, %v2370
    %v2372 = vlaneseq
    %v2373 = vshrl.u32 %v2372, 7
    %v2374 = vsub.s32 1, %v2373
    %v2375 = vrot.slane %v2366, %v2374
    %v2386 = vunpack.c.l.b16 %v2358
    %v2387 = vunpack.c.h.b16 %v2358
    %v2388 = vunpack.c.l.b16 %v2359
    %v2389 = vunpack.c.h.b16 %v2359
    %v2390 = vunpack.c.l.b16 %v2360
    %v2391 = vunpack.c.h.b16 %v2360
    %v2392 = vunpack.c.l.b16 %v2361
    %v2393 = vunpack.c.h.b16 %v2361
    %v2394 = vunpack.c.l.b16 %v2362
    %v2395 = vunpack.c.h.b16 %v2362
    %v2396 = vunpack.c.l.b16 %v2363
    %v2397 = vunpack.c.h.b16 %v2363
    %v2398 = vunpack.c.l.b16 %v2364
    %v2399 = vunpack.c.h.b16 %v2364
    %v2400 = vunpack.c.l.b16 %v2365
    %v2401 = vunpack.c.h.b16 %v2365
    %v2402 = vpack.c.b16 %v2388, %v2386
    %v2403 = vpack.c.b16 %v2389, %v2387
    %v2404 = vpack.c.b16 %v2392, %v2390
    %v2405 = vpack.c.b16 %v2393, %v2391
    %v2406 = vpack.c.b16 %v2396, %v2394
    %v2407 = vpack.c.b16 %v2397, %v2395
    %v2408 = vpack.c.b16 %v2400, %v2398
    %v2409 = vpack.c.b16 %v2401, %v2399
    %v2419 = vsel %vm2311, %v2357, 0
    %2421 = vmatprep.subr.bf16.mxu0 0
    %2422 = vmatpush1.bf16.msra.mxu0 0
    %2423 = vmatprep.subr.bf16.mxu0 0
    %2424 = vmatpush1.bf16.msra.mxu0 0
    %2425 = vmatprep.subr.bf16.mxu0 0
    %2426 = vmatpush1.bf16.msra.mxu0 0
    %2427 = vmatprep.subr.bf16.mxu0 0
    %2428 = vmatpush1.bf16.msra.mxu0 0
    %2429 = vmatprep.subr.bf16.mxu0 %v2409
    %2430 = vmatpush1.bf16.msra.mxu0 %v2408
    %2431 = vmatprep.subr.bf16.mxu0 %v2407
    %2432 = vmatpush1.bf16.msra.mxu0 %v2406
    %2433 = vmatprep.subr.bf16.mxu0 %v2405
    %2434 = vmatpush1.bf16.msra.mxu0 %v2404
    %2435 = vmatprep.subr.bf16.mxu0 %v2403
    %2436 = vmatpush1.bf16.msra.mxu0 %v2402
    %2437 = vmatprep.subr.bf16.mxu0 0
    %2438 = vmatpush2.bf16.msra.mxu0 0
    %2439 = vmatprep.subr.bf16.mxu0 0
    %2440 = vmatpush2.bf16.msra.mxu0 0
    %2441 = vmatprep.subr.bf16.mxu0 0
    %2442 = vmatpush2.bf16.msra.mxu0 0
    %2443 = vmatprep.subr.bf16.mxu0 0
    %2444 = vmatpush2.bf16.msra.mxu0 0
    %2445 = vmatprep.subr.bf16.mxu0 0
    %2446 = vmatpush2.bf16.msra.mxu0 0
    %2447 = vmatprep.subr.bf16.mxu0 0
    %2448 = vmatpush2.bf16.msra.mxu0 0
    %2449 = vmatprep.subr.bf16.mxu0 0
    %2450 = vmatpush2.bf16.msra.mxu0 0
    %2451 = vmatprep.subr.bf16.mxu0 0
    %2452 = vmatpush2.bf16.msra.mxu0 0
    %2453 = vmatprep.mubr.bf16.mxu0 0
    %2454 = vmatmul.mubr.bf16.gmra.mxu0 %v2419
    %v2455 = vpop.f32.mrf.mxu0
    %v2456 = vadd.f32 %v2371, %v2455
    %v2457 = vpop.f32.mrf.mxu0
    %v2458 = vadd.f32 %v2375, %v2457
    %v2459 = vpop.f32.mrf.mxu0
    %v2460 = vadd.f32 %v2371, %v2459
    %v2461 = vpop.f32.mrf.mxu0
    %v2462 = vadd.f32 %v2375, %v2461
    %2463 = vdwg.mxu0
    %2465 = vrot.lane.b32.xlu0 %v2456, 112
    %v2466 = vpop.permute.xlu0 %2465
    %2468 = vrot.lane.b32.xlu0 %v2456, 96
    %v2469 = vpop.permute.xlu0 %2468
    %2471 = vrot.lane.b32.xlu0 %v2456, 80
    %v2472 = vpop.permute.xlu0 %2471
    %2475 = vrot.lane.b32.xlu0 %v2460, 112
    %v2476 = vpop.permute.xlu0 %2475
    %2478 = vrot.lane.b32.xlu0 %v2460, 96
    %v2479 = vpop.permute.xlu0 %2478
    %2481 = vrot.lane.b32.xlu0 %v2460, 80
    %v2482 = vpop.permute.xlu0 %2481
    %v2484 = vpack.c.bf16 %v2456, %v2456
    %v2485 = vpack.c.bf16 %v2466, %v2466
    %v2486 = vpack.c.bf16 %v2469, %v2469
    %v2487 = vpack.c.bf16 %v2472, %v2472
    %v2488 = vpack.c.bf16 %v2460, %v2460
    %v2489 = vpack.c.bf16 %v2476, %v2476
    %v2490 = vpack.c.bf16 %v2479, %v2479
    %v2491 = vpack.c.bf16 %v2482, %v2482
    %2493 = vrot.lane.b32.xlu0 %v2458, 112
    %v2494 = vpop.permute.xlu0 %2493
    %2496 = vrot.lane.b32.xlu0 %v2458, 96
    %v2497 = vpop.permute.xlu0 %2496
    %2499 = vrot.lane.b32.xlu0 %v2458, 80
    %v2500 = vpop.permute.xlu0 %2499
    %2503 = vrot.lane.b32.xlu0 %v2462, 112
    %v2504 = vpop.permute.xlu0 %2503
    %2506 = vrot.lane.b32.xlu0 %v2462, 96
    %v2507 = vpop.permute.xlu0 %2506
    %2509 = vrot.lane.b32.xlu0 %v2462, 80
    %v2510 = vpop.permute.xlu0 %2509
    %v2512 = vpack.c.bf16 %v2458, %v2458
    %v2513 = vpack.c.bf16 %v2494, %v2494
    %v2514 = vpack.c.bf16 %v2497, %v2497
    %v2515 = vpack.c.bf16 %v2500, %v2500
    %v2516 = vpack.c.bf16 %v2462, %v2462
    %v2517 = vpack.c.bf16 %v2504, %v2504
    %v2518 = vpack.c.bf16 %v2507, %v2507
    %v2519 = vpack.c.bf16 %v2510, %v2510
    %2521 = vrot.lane.b32.xlu0 %v2484, 64
    %v2522 = vpop.permute.xlu0 %2521
    %vm2523 = vcmask 130048
    %v2525 = vsel %vm2523, %v2484, 0
    %v2528 = vsel %vm2523, %v2522, 0
    %2530 = vmatprep.subr.bf16.mxu0 0
    %2531 = vmatpush1.bf16.xpose.msra.mxu0 0
    %2532 = vmatprep.subr.bf16.mxu0 0
    %2533 = vmatpush1.bf16.xpose.msra.mxu0 0
    %2534 = vmatprep.subr.bf16.mxu0 0
    %2535 = vmatpush1.bf16.xpose.msra.mxu0 0
    %2536 = vmatprep.subr.bf16.mxu0 0
    %2537 = vmatpush1.bf16.xpose.msra.mxu0 0
    %2538 = vmatprep.subr.bf16.mxu0 0
    %2539 = vmatpush1.bf16.xpose.msra.mxu0 0
    %2540 = vmatprep.subr.bf16.mxu0 0
    %2541 = vmatpush1.bf16.xpose.msra.mxu0 0
    %2542 = vmatprep.subr.bf16.mxu0 0
    %2543 = vmatpush1.bf16.xpose.msra.mxu0 0
    %2544 = vmatprep.subr.bf16.mxu0 0
    %2545 = vmatpush1.bf16.xpose.msra.mxu0 %v2528
    %2546 = vmatprep.subr.bf16.mxu0 0
    %2547 = vmatpush2.bf16.xpose.msra.mxu0 0
    %2548 = vmatprep.subr.bf16.mxu0 0
    %2549 = vmatpush2.bf16.xpose.msra.mxu0 0
    %2550 = vmatprep.subr.bf16.mxu0 0
    %2551 = vmatpush2.bf16.xpose.msra.mxu0 0
    %2552 = vmatprep.subr.bf16.mxu0 0
    %2553 = vmatpush2.bf16.xpose.msra.mxu0 0
    %2554 = vmatprep.subr.bf16.mxu0 0
    %2555 = vmatpush2.bf16.xpose.msra.mxu0 0
    %2556 = vmatprep.subr.bf16.mxu0 0
    %2557 = vmatpush2.bf16.xpose.msra.mxu0 0
    %2558 = vmatprep.subr.bf16.mxu0 0
    %2559 = vmatpush2.bf16.xpose.msra.mxu0 0
    %2560 = vmatprep.subr.bf16.mxu0 0
    %2561 = vmatpush2.bf16.xpose.msra.mxu0 0
    %2562 = vmatprep.mubr.bf16.mxu0 0
    %2563 = vmatmul.mubr.bf16.gmra.mxu0 %v2525
    %v2564 = vpop.f32.mrf.mxu0
    %v2565 = vadd.f32 0.0, %v2564
    %v2566 = vpop.f32.mrf.mxu0
    %v2567 = vpop.f32.mrf.mxu0
    %v2568 = vpop.f32.mrf.mxu0
    %2569 = vdwg.mxu0
    %2571 = vrot.lane.b32.xlu0 %v2485, 64
    %v2572 = vpop.permute.xlu0 %2571
    %v2574 = vsel %vm2523, %v2485, 0
    %v2577 = vsel %vm2523, %v2572, 0
    %2579 = vmatprep.subr.bf16.mxu0 0
    %2580 = vmatpush1.bf16.xpose.msra.mxu0 0
    %2581 = vmatprep.subr.bf16.mxu0 0
    %2582 = vmatpush1.bf16.xpose.msra.mxu0 0
    %2583 = vmatprep.subr.bf16.mxu0 0
    %2584 = vmatpush1.bf16.xpose.msra.mxu0 0
    %2585 = vmatprep.subr.bf16.mxu0 0
    %2586 = vmatpush1.bf16.xpose.msra.mxu0 0
    %2587 = vmatprep.subr.bf16.mxu0 0
    %2588 = vmatpush1.bf16.xpose.msra.mxu0 0
    %2589 = vmatprep.subr.bf16.mxu0 0
    %2590 = vmatpush1.bf16.xpose.msra.mxu0 0
    %2591 = vmatprep.subr.bf16.mxu0 0
    %2592 = vmatpush1.bf16.xpose.msra.mxu0 0
    %2593 = vmatprep.subr.bf16.mxu0 0
    %2594 = vmatpush1.bf16.xpose.msra.mxu0 %v2577
    %2595 = vmatprep.subr.bf16.mxu0 0
    %2596 = vmatpush2.bf16.xpose.msra.mxu0 0
    %2597 = vmatprep.subr.bf16.mxu0 0
    %2598 = vmatpush2.bf16.xpose.msra.mxu0 0
    %2599 = vmatprep.subr.bf16.mxu0 0
    %2600 = vmatpush2.bf16.xpose.msra.mxu0 0
    %2601 = vmatprep.subr.bf16.mxu0 0
    %2602 = vmatpush2.bf16.xpose.msra.mxu0 0
    %2603 = vmatprep.subr.bf16.mxu0 0
    %2604 = vmatpush2.bf16.xpose.msra.mxu0 0
    %2605 = vmatprep.subr.bf16.mxu0 0
    %2606 = vmatpush2.bf16.xpose.msra.mxu0 0
    %2607 = vmatprep.subr.bf16.mxu0 0
    %2608 = vmatpush2.bf16.xpose.msra.mxu0 0
    %2609 = vmatprep.subr.bf16.mxu0 0
    %2610 = vmatpush2.bf16.xpose.msra.mxu0 0
    %2611 = vmatprep.mubr.bf16.mxu0 0
    %2612 = vmatmul.mubr.bf16.gmra.mxu0 %v2574
    %v2613 = vpop.f32.mrf.mxu0
    %v2614 = vadd.f32 0.0, %v2613
    %v2615 = vpop.f32.mrf.mxu0
    %v2616 = vpop.f32.mrf.mxu0
    %v2617 = vpop.f32.mrf.mxu0
    %2618 = vdwg.mxu0
    %2620 = vrot.lane.b32.xlu0 %v2486, 64
    %v2621 = vpop.permute.xlu0 %2620
    %v2623 = vsel %vm2523, %v2486, 0
    %v2626 = vsel %vm2523, %v2621, 0
    %2628 = vmatprep.subr.bf16.mxu0 0
    %2629 = vmatpush1.bf16.xpose.msra.mxu0 0
    %2630 = vmatprep.subr.bf16.mxu0 0
    %2631 = vmatpush1.bf16.xpose.msra.mxu0 0
    %2632 = vmatprep.subr.bf16.mxu0 0
    %2633 = vmatpush1.bf16.xpose.msra.mxu0 0
    %2634 = vmatprep.subr.bf16.mxu0 0
    %2635 = vmatpush1.bf16.xpose.msra.mxu0 0
    %2636 = vmatprep.subr.bf16.mxu0 0
    %2637 = vmatpush1.bf16.xpose.msra.mxu0 0
    %2638 = vmatprep.subr.bf16.mxu0 0
    %2639 = vmatpush1.bf16.xpose.msra.mxu0 0
    %2640 = vmatprep.subr.bf16.mxu0 0
    %2641 = vmatpush1.bf16.xpose.msra.mxu0 0
    %2642 = vmatprep.subr.bf16.mxu0 0
    %2643 = vmatpush1.bf16.xpose.msra.mxu0 %v2626
    %2644 = vmatprep.subr.bf16.mxu0 0
    %2645 = vmatpush2.bf16.xpose.msra.mxu0 0
    %2646 = vmatprep.subr.bf16.mxu0 0
    %2647 = vmatpush2.bf16.xpose.msra.mxu0 0
    %2648 = vmatprep.subr.bf16.mxu0 0
    %2649 = vmatpush2.bf16.xpose.msra.mxu0 0
    %2650 = vmatprep.subr.bf16.mxu0 0
    %2651 = vmatpush2.bf16.xpose.msra.mxu0 0
    %2652 = vmatprep.subr.bf16.mxu0 0
    %2653 = vmatpush2.bf16.xpose.msra.mxu0 0
    %2654 = vmatprep.subr.bf16.mxu0 0
    %2655 = vmatpush2.bf16.xpose.msra.mxu0 0
    %2656 = vmatprep.subr.bf16.mxu0 0
    %2657 = vmatpush2.bf16.xpose.msra.mxu0 0
    %2658 = vmatprep.subr.bf16.mxu0 0
    %2659 = vmatpush2.bf16.xpose.msra.mxu0 0
    %2660 = vmatprep.mubr.bf16.mxu0 0
    %2661 = vmatmul.mubr.bf16.gmra.mxu0 %v2623
    %v2662 = vpop.f32.mrf.mxu0
    %v2663 = vadd.f32 0.0, %v2662
    %v2664 = vpop.f32.mrf.mxu0
    %v2665 = vpop.f32.mrf.mxu0
    %v2666 = vpop.f32.mrf.mxu0
    %2667 = vdwg.mxu0
    %2669 = vrot.lane.b32.xlu0 %v2487, 64
    %v2670 = vpop.permute.xlu0 %2669
    %v2672 = vsel %vm2523, %v2487, 0
    %v2675 = vsel %vm2523, %v2670, 0
    %2677 = vmatprep.subr.bf16.mxu0 0
    %2678 = vmatpush1.bf16.xpose.msra.mxu0 0
    %2679 = vmatprep.subr.bf16.mxu0 0
    %2680 = vmatpush1.bf16.xpose.msra.mxu0 0
    %2681 = vmatprep.subr.bf16.mxu0 0
    %2682 = vmatpush1.bf16.xpose.msra.mxu0 0
    %2683 = vmatprep.subr.bf16.mxu0 0
    %2684 = vmatpush1.bf16.xpose.msra.mxu0 0
    %2685 = vmatprep.subr.bf16.mxu0 0
    %2686 = vmatpush1.bf16.xpose.msra.mxu0 0
    %2687 = vmatprep.subr.bf16.mxu0 0
    %2688 = vmatpush1.bf16.xpose.msra.mxu0 0
    %2689 = vmatprep.subr.bf16.mxu0 0
    %2690 = vmatpush1.bf16.xpose.msra.mxu0 0
    %2691 = vmatprep.subr.bf16.mxu0 0
    %2692 = vmatpush1.bf16.xpose.msra.mxu0 %v2675
    %2693 = vmatprep.subr.bf16.mxu0 0
    %2694 = vmatpush2.bf16.xpose.msra.mxu0 0
    %2695 = vmatprep.subr.bf16.mxu0 0
    %2696 = vmatpush2.bf16.xpose.msra.mxu0 0
    %2697 = vmatprep.subr.bf16.mxu0 0
    %2698 = vmatpush2.bf16.xpose.msra.mxu0 0
    %2699 = vmatprep.subr.bf16.mxu0 0
    %2700 = vmatpush2.bf16.xpose.msra.mxu0 0
    %2701 = vmatprep.subr.bf16.mxu0 0
    %2702 = vmatpush2.bf16.xpose.msra.mxu0 0
    %2703 = vmatprep.subr.bf16.mxu0 0
    %2704 = vmatpush2.bf16.xpose.msra.mxu0 0
    %2705 = vmatprep.subr.bf16.mxu0 0
    %2706 = vmatpush2.bf16.xpose.msra.mxu0 0
    %2707 = vmatprep.subr.bf16.mxu0 0
    %2708 = vmatpush2.bf16.xpose.msra.mxu0 0
    %2709 = vmatprep.mubr.bf16.mxu0 0
    %2710 = vmatmul.mubr.bf16.gmra.mxu0 %v2672
    %v2711 = vpop.f32.mrf.mxu0
    %v2712 = vadd.f32 0.0, %v2711
    %v2713 = vpop.f32.mrf.mxu0
    %v2714 = vpop.f32.mrf.mxu0
    %v2715 = vpop.f32.mrf.mxu0
    %2716 = vdwg.mxu0
    %2718 = vrot.lane.b32.xlu0 %v2488, 64
    %v2719 = vpop.permute.xlu0 %2718
    %v2721 = vsel %vm2523, %v2488, 0
    %v2724 = vsel %vm2523, %v2719, 0
    %2726 = vmatprep.subr.bf16.mxu0 0
    %2727 = vmatpush1.bf16.xpose.msra.mxu0 0
    %2728 = vmatprep.subr.bf16.mxu0 0
    %2729 = vmatpush1.bf16.xpose.msra.mxu0 0
    %2730 = vmatprep.subr.bf16.mxu0 0
    %2731 = vmatpush1.bf16.xpose.msra.mxu0 0
    %2732 = vmatprep.subr.bf16.mxu0 0
    %2733 = vmatpush1.bf16.xpose.msra.mxu0 0
    %2734 = vmatprep.subr.bf16.mxu0 0
    %2735 = vmatpush1.bf16.xpose.msra.mxu0 0
    %2736 = vmatprep.subr.bf16.mxu0 0
    %2737 = vmatpush1.bf16.xpose.msra.mxu0 0
    %2738 = vmatprep.subr.bf16.mxu0 0
    %2739 = vmatpush1.bf16.xpose.msra.mxu0 0
    %2740 = vmatprep.subr.bf16.mxu0 0
    %2741 = vmatpush1.bf16.xpose.msra.mxu0 %v2724
    %2742 = vmatprep.subr.bf16.mxu0 0
    %2743 = vmatpush2.bf16.xpose.msra.mxu0 0
    %2744 = vmatprep.subr.bf16.mxu0 0
    %2745 = vmatpush2.bf16.xpose.msra.mxu0 0
    %2746 = vmatprep.subr.bf16.mxu0 0
    %2747 = vmatpush2.bf16.xpose.msra.mxu0 0
    %2748 = vmatprep.subr.bf16.mxu0 0
    %2749 = vmatpush2.bf16.xpose.msra.mxu0 0
    %2750 = vmatprep.subr.bf16.mxu0 0
    %2751 = vmatpush2.bf16.xpose.msra.mxu0 0
    %2752 = vmatprep.subr.bf16.mxu0 0
    %2753 = vmatpush2.bf16.xpose.msra.mxu0 0
    %2754 = vmatprep.subr.bf16.mxu0 0
    %2755 = vmatpush2.bf16.xpose.msra.mxu0 0
    %2756 = vmatprep.subr.bf16.mxu0 0
    %2757 = vmatpush2.bf16.xpose.msra.mxu0 0
    %2758 = vmatprep.mubr.bf16.mxu0 0
    %2759 = vmatmul.mubr.bf16.gmra.mxu0 %v2721
    %v2760 = vpop.f32.mrf.mxu0
    %v2761 = vadd.f32 0.0, %v2760
    %v2762 = vpop.f32.mrf.mxu0
    %v2763 = vpop.f32.mrf.mxu0
    %v2764 = vpop.f32.mrf.mxu0
    %2765 = vdwg.mxu0
    %2767 = vrot.lane.b32.xlu0 %v2489, 64
    %v2768 = vpop.permute.xlu0 %2767
    %v2770 = vsel %vm2523, %v2489, 0
    %v2773 = vsel %vm2523, %v2768, 0
    %2775 = vmatprep.subr.bf16.mxu0 0
    %2776 = vmatpush1.bf16.xpose.msra.mxu0 0
    %2777 = vmatprep.subr.bf16.mxu0 0
    %2778 = vmatpush1.bf16.xpose.msra.mxu0 0
    %2779 = vmatprep.subr.bf16.mxu0 0
    %2780 = vmatpush1.bf16.xpose.msra.mxu0 0
    %2781 = vmatprep.subr.bf16.mxu0 0
    %2782 = vmatpush1.bf16.xpose.msra.mxu0 0
    %2783 = vmatprep.subr.bf16.mxu0 0
    %2784 = vmatpush1.bf16.xpose.msra.mxu0 0
    %2785 = vmatprep.subr.bf16.mxu0 0
    %2786 = vmatpush1.bf16.xpose.msra.mxu0 0
    %2787 = vmatprep.subr.bf16.mxu0 0
    %2788 = vmatpush1.bf16.xpose.msra.mxu0 0
    %2789 = vmatprep.subr.bf16.mxu0 0
    %2790 = vmatpush1.bf16.xpose.msra.mxu0 %v2773
    %2791 = vmatprep.subr.bf16.mxu0 0
    %2792 = vmatpush2.bf16.xpose.msra.mxu0 0
    %2793 = vmatprep.subr.bf16.mxu0 0
    %2794 = vmatpush2.bf16.xpose.msra.mxu0 0
    %2795 = vmatprep.subr.bf16.mxu0 0
    %2796 = vmatpush2.bf16.xpose.msra.mxu0 0
    %2797 = vmatprep.subr.bf16.mxu0 0
    %2798 = vmatpush2.bf16.xpose.msra.mxu0 0
    %2799 = vmatprep.subr.bf16.mxu0 0
    %2800 = vmatpush2.bf16.xpose.msra.mxu0 0
    %2801 = vmatprep.subr.bf16.mxu0 0
    %2802 = vmatpush2.bf16.xpose.msra.mxu0 0
    %2803 = vmatprep.subr.bf16.mxu0 0
    %2804 = vmatpush2.bf16.xpose.msra.mxu0 0
    %2805 = vmatprep.subr.bf16.mxu0 0
    %2806 = vmatpush2.bf16.xpose.msra.mxu0 0
    %2807 = vmatprep.mubr.bf16.mxu0 0
    %2808 = vmatmul.mubr.bf16.gmra.mxu0 %v2770
    %v2809 = vpop.f32.mrf.mxu0
    %v2810 = vadd.f32 0.0, %v2809
    %v2811 = vpop.f32.mrf.mxu0
    %v2812 = vpop.f32.mrf.mxu0
    %v2813 = vpop.f32.mrf.mxu0
    %2814 = vdwg.mxu0
    %2816 = vrot.lane.b32.xlu0 %v2490, 64
    %v2817 = vpop.permute.xlu0 %2816
    %v2819 = vsel %vm2523, %v2490, 0
    %v2822 = vsel %vm2523, %v2817, 0
    %2824 = vmatprep.subr.bf16.mxu0 0
    %2825 = vmatpush1.bf16.xpose.msra.mxu0 0
    %2826 = vmatprep.subr.bf16.mxu0 0
    %2827 = vmatpush1.bf16.xpose.msra.mxu0 0
    %2828 = vmatprep.subr.bf16.mxu0 0
    %2829 = vmatpush1.bf16.xpose.msra.mxu0 0
    %2830 = vmatprep.subr.bf16.mxu0 0
    %2831 = vmatpush1.bf16.xpose.msra.mxu0 0
    %2832 = vmatprep.subr.bf16.mxu0 0
    %2833 = vmatpush1.bf16.xpose.msra.mxu0 0
    %2834 = vmatprep.subr.bf16.mxu0 0
    %2835 = vmatpush1.bf16.xpose.msra.mxu0 0
    %2836 = vmatprep.subr.bf16.mxu0 0
    %2837 = vmatpush1.bf16.xpose.msra.mxu0 0
    %2838 = vmatprep.subr.bf16.mxu0 0
    %2839 = vmatpush1.bf16.xpose.msra.mxu0 %v2822
    %2840 = vmatprep.subr.bf16.mxu0 0
    %2841 = vmatpush2.bf16.xpose.msra.mxu0 0
    %2842 = vmatprep.subr.bf16.mxu0 0
    %2843 = vmatpush2.bf16.xpose.msra.mxu0 0
    %2844 = vmatprep.subr.bf16.mxu0 0
    %2845 = vmatpush2.bf16.xpose.msra.mxu0 0
    %2846 = vmatprep.subr.bf16.mxu0 0
    %2847 = vmatpush2.bf16.xpose.msra.mxu0 0
    %2848 = vmatprep.subr.bf16.mxu0 0
    %2849 = vmatpush2.bf16.xpose.msra.mxu0 0
    %2850 = vmatprep.subr.bf16.mxu0 0
    %2851 = vmatpush2.bf16.xpose.msra.mxu0 0
    %2852 = vmatprep.subr.bf16.mxu0 0
    %2853 = vmatpush2.bf16.xpose.msra.mxu0 0
    %2854 = vmatprep.subr.bf16.mxu0 0
    %2855 = vmatpush2.bf16.xpose.msra.mxu0 0
    %2856 = vmatprep.mubr.bf16.mxu0 0
    %2857 = vmatmul.mubr.bf16.gmra.mxu0 %v2819
    %v2858 = vpop.f32.mrf.mxu0
    %v2859 = vadd.f32 0.0, %v2858
    %v2860 = vpop.f32.mrf.mxu0
    %v2861 = vpop.f32.mrf.mxu0
    %v2862 = vpop.f32.mrf.mxu0
    %2863 = vdwg.mxu0
    %2865 = vrot.lane.b32.xlu0 %v2491, 64
    %v2866 = vpop.permute.xlu0 %2865
    %v2868 = vsel %vm2523, %v2491, 0
    %v2871 = vsel %vm2523, %v2866, 0
    %2873 = vmatprep.subr.bf16.mxu0 0
    %2874 = vmatpush1.bf16.xpose.msra.mxu0 0
    %2875 = vmatprep.subr.bf16.mxu0 0
    %2876 = vmatpush1.bf16.xpose.msra.mxu0 0
    %2877 = vmatprep.subr.bf16.mxu0 0
    %2878 = vmatpush1.bf16.xpose.msra.mxu0 0
    %2879 = vmatprep.subr.bf16.mxu0 0
    %2880 = vmatpush1.bf16.xpose.msra.mxu0 0
    %2881 = vmatprep.subr.bf16.mxu0 0
    %2882 = vmatpush1.bf16.xpose.msra.mxu0 0
    %2883 = vmatprep.subr.bf16.mxu0 0
    %2884 = vmatpush1.bf16.xpose.msra.mxu0 0
    %2885 = vmatprep.subr.bf16.mxu0 0
    %2886 = vmatpush1.bf16.xpose.msra.mxu0 0
    %2887 = vmatprep.subr.bf16.mxu0 0
    %2888 = vmatpush1.bf16.xpose.msra.mxu0 %v2871
    %2889 = vmatprep.subr.bf16.mxu0 0
    %2890 = vmatpush2.bf16.xpose.msra.mxu0 0
    %2891 = vmatprep.subr.bf16.mxu0 0
    %2892 = vmatpush2.bf16.xpose.msra.mxu0 0
    %2893 = vmatprep.subr.bf16.mxu0 0
    %2894 = vmatpush2.bf16.xpose.msra.mxu0 0
    %2895 = vmatprep.subr.bf16.mxu0 0
    %2896 = vmatpush2.bf16.xpose.msra.mxu0 0
    %2897 = vmatprep.subr.bf16.mxu0 0
    %2898 = vmatpush2.bf16.xpose.msra.mxu0 0
    %2899 = vmatprep.subr.bf16.mxu0 0
    %2900 = vmatpush2.bf16.xpose.msra.mxu0 0
    %2901 = vmatprep.subr.bf16.mxu0 0
    %2902 = vmatpush2.bf16.xpose.msra.mxu0 0
    %2903 = vmatprep.subr.bf16.mxu0 0
    %2904 = vmatpush2.bf16.xpose.msra.mxu0 0
    %2905 = vmatprep.mubr.bf16.mxu0 0
    %2906 = vmatmul.mubr.bf16.gmra.mxu0 %v2868
    %v2907 = vpop.f32.mrf.mxu0
    %v2908 = vadd.f32 0.0, %v2907
    %v2909 = vpop.f32.mrf.mxu0
    %v2910 = vpop.f32.mrf.mxu0
    %v2911 = vpop.f32.mrf.mxu0
    %2912 = vdwg.mxu0
    %v2913 = vmul.f32 %v2565, 0.25
    %v2914 = vmul.f32 %v2614, 0.25
    %v2915 = vmul.f32 %v2663, 0.25
    %v2916 = vmul.f32 %v2712, 0.25
    %v2917 = vmul.f32 %v2761, 0.25
    %v2918 = vmul.f32 %v2810, 0.25
    %v2919 = vmul.f32 %v2859, 0.25
    %v2920 = vmul.f32 %v2908, 0.25
    %v2921 = vadd.f32 %v2913, %v2310
    %v2922 = vadd.f32 %v2914, %v2310
    %v2923 = vadd.f32 %v2915, %v2310
    %v2924 = vadd.f32 %v2916, %v2310
    %v2925 = vadd.f32 %v2917, %v2310
    %v2926 = vadd.f32 %v2918, %v2310
    %v2927 = vadd.f32 %v2919, %v2310
    %v2928 = vadd.f32 %v2920, %v2310
    %vm2929 = vcmask 64512
    %v2930 = vsel %vm2929, %v2921, -inf
    %2931 = vmax.xlane.f32.xlu0 %v2930
    %v2932 = vpop.xlane.xlu0 %2931
    %v2933 = vsel %vm2929, %v2922, -inf
    %2934 = vmax.xlane.f32.xlu0 %v2933
    %v2935 = vpop.xlane.xlu0 %2934
    %v2936 = vsel %vm2929, %v2923, -inf
    %2937 = vmax.xlane.f32.xlu0 %v2936
    %v2938 = vpop.xlane.xlu0 %2937
    %v2939 = vsel %vm2929, %v2924, -inf
    %2940 = vmax.xlane.f32.xlu0 %v2939
    %v2941 = vpop.xlane.xlu0 %2940
    %v2942 = vsel %vm2929, %v2925, -inf
    %2943 = vmax.xlane.f32.xlu0 %v2942
    %v2944 = vpop.xlane.xlu0 %2943
    %v2945 = vsel %vm2929, %v2926, -inf
    %2946 = vmax.xlane.f32.xlu0 %v2945
    %v2947 = vpop.xlane.xlu0 %2946
    %v2948 = vsel %vm2929, %v2927, -inf
    %2949 = vmax.xlane.f32.xlu0 %v2948
    %v2950 = vpop.xlane.xlu0 %2949
    %v2951 = vsel %vm2929, %v2928, -inf
    %2952 = vmax.xlane.f32.xlu0 %v2951
    %v2953 = vpop.xlane.xlu0 %2952
    %v2954 = vsub.f32 %v2921, %v2932
    %v2955 = vsub.f32 %v2922, %v2935
    %v2956 = vsub.f32 %v2923, %v2938
    %v2957 = vsub.f32 %v2924, %v2941
    %v2958 = vsub.f32 %v2925, %v2944
    %v2959 = vsub.f32 %v2926, %v2947
    %v2960 = vsub.f32 %v2927, %v2950
    %v2961 = vsub.f32 %v2928, %v2953
    %v2962 = vmul.f32 %v2954, 1.442695
    %v2963 = vpow.pop %v2962
    %v2964 = vmul.f32 %v2955, 1.442695
    %v2965 = vpow.pop %v2964
    %v2966 = vmul.f32 %v2956, 1.442695
    %v2967 = vpow.pop %v2966
    %v2968 = vmul.f32 %v2957, 1.442695
    %v2969 = vpow.pop %v2968
    %v2970 = vmul.f32 %v2958, 1.442695
    %v2971 = vpow.pop %v2970
    %v2972 = vmul.f32 %v2959, 1.442695
    %v2973 = vpow.pop %v2972
    %v2974 = vmul.f32 %v2960, 1.442695
    %v2975 = vpow.pop %v2974
    %v2976 = vmul.f32 %v2961, 1.442695
    %v2977 = vpow.pop %v2976
    %v2978 = vsel %vm2929, %v2963, 0.0
    %2979 = vadd.xlane.f32.xlu0 %v2978
    %v2980 = vpop.xlane.xlu0 %2979
    %v2981 = vsel %vm2929, %v2965, 0.0
    %2982 = vadd.xlane.f32.xlu0 %v2981
    %v2983 = vpop.xlane.xlu0 %2982
    %v2984 = vsel %vm2929, %v2967, 0.0
    %2985 = vadd.xlane.f32.xlu0 %v2984
    %v2986 = vpop.xlane.xlu0 %2985
    %v2987 = vsel %vm2929, %v2969, 0.0
    %2988 = vadd.xlane.f32.xlu0 %v2987
    %v2989 = vpop.xlane.xlu0 %2988
    %v2990 = vsel %vm2929, %v2971, 0.0
    %2991 = vadd.xlane.f32.xlu0 %v2990
    %v2992 = vpop.xlane.xlu0 %2991
    %v2993 = vsel %vm2929, %v2973, 0.0
    %2994 = vadd.xlane.f32.xlu0 %v2993
    %v2995 = vpop.xlane.xlu0 %2994
    %v2996 = vsel %vm2929, %v2975, 0.0
    %2997 = vadd.xlane.f32.xlu0 %v2996
    %v2998 = vpop.xlane.xlu0 %2997
    %v2999 = vsel %vm2929, %v2977, 0.0
    %3000 = vadd.xlane.f32.xlu0 %v2999
    %v3001 = vpop.xlane.xlu0 %3000
    %v3002 = vrcp.pop %v2980
    %v3003 = vrcp.pop %v2983
    %v3004 = vrcp.pop %v2986
    %v3005 = vrcp.pop %v2989
    %v3006 = vrcp.pop %v2992
    %v3007 = vrcp.pop %v2995
    %v3008 = vrcp.pop %v2998
    %v3009 = vrcp.pop %v3001
    %v3010 = vmul.f32 %v2963, %v3002
    %v3011 = vmul.f32 %v2965, %v3003
    %v3012 = vmul.f32 %v2967, %v3004
    %v3013 = vmul.f32 %v2969, %v3005
    %v3014 = vmul.f32 %v2971, %v3006
    %v3015 = vmul.f32 %v2973, %v3007
    %v3016 = vmul.f32 %v2975, %v3008
    %v3017 = vmul.f32 %v2977, %v3009
    %v3018 = vpack.c.bf16 %v3010, %v3010
    %v3019 = vpack.c.bf16 %v3011, %v3011
    %v3020 = vpack.c.bf16 %v3012, %v3012
    %v3021 = vpack.c.bf16 %v3013, %v3013
    %v3022 = vpack.c.bf16 %v3014, %v3014
    %v3023 = vpack.c.bf16 %v3015, %v3015
    %v3024 = vpack.c.bf16 %v3016, %v3016
    %v3025 = vpack.c.bf16 %v3017, %v3017
    %v3027 = vsel %vm2929, %v3018, 0
    %vm3029 = vcmask 1043456
    %v3031 = vsel %vm3029, %v2512, 0
    %3033 = vmatprep.subr.bf16.mxu0 0
    %3034 = vmatpush1.bf16.msra.mxu0 0
    %3035 = vmatprep.subr.bf16.mxu0 0
    %3036 = vmatpush1.bf16.msra.mxu0 0
    %3037 = vmatprep.subr.bf16.mxu0 0
    %3038 = vmatpush1.bf16.msra.mxu0 0
    %3039 = vmatprep.subr.bf16.mxu0 0
    %3040 = vmatpush1.bf16.msra.mxu0 0
    %3041 = vmatprep.subr.bf16.mxu0 0
    %3042 = vmatpush1.bf16.msra.mxu0 0
    %3043 = vmatprep.subr.bf16.mxu0 0
    %3044 = vmatpush1.bf16.msra.mxu0 0
    %3045 = vmatprep.subr.bf16.mxu0 0
    %3046 = vmatpush1.bf16.msra.mxu0 0
    %3047 = vmatprep.subr.bf16.mxu0 0
    %3048 = vmatpush1.bf16.msra.mxu0 %v3031
    %3049 = vmatprep.subr.bf16.mxu0 0
    %3050 = vmatpush2.bf16.msra.mxu0 0
    %3051 = vmatprep.subr.bf16.mxu0 0
    %3052 = vmatpush2.bf16.msra.mxu0 0
    %3053 = vmatprep.subr.bf16.mxu0 0
    %3054 = vmatpush2.bf16.msra.mxu0 0
    %3055 = vmatprep.subr.bf16.mxu0 0
    %3056 = vmatpush2.bf16.msra.mxu0 0
    %3057 = vmatprep.subr.bf16.mxu0 0
    %3058 = vmatpush2.bf16.msra.mxu0 0
    %3059 = vmatprep.subr.bf16.mxu0 0
    %3060 = vmatpush2.bf16.msra.mxu0 0
    %3061 = vmatprep.subr.bf16.mxu0 0
    %3062 = vmatpush2.bf16.msra.mxu0 0
    %3063 = vmatprep.subr.bf16.mxu0 0
    %3064 = vmatpush2.bf16.msra.mxu0 0
    %3065 = vmatprep.mubr.bf16.mxu0 0
    %3066 = vmatmul.mubr.bf16.gmra.mxu0 %v3027
    %v3067 = vpop.f32.mrf.mxu0
    %v3068 = vadd.f32 0.0, %v3067
    %v3069 = vpop.f32.mrf.mxu0
    %v3070 = vpop.f32.mrf.mxu0
    %v3071 = vpop.f32.mrf.mxu0
    %3072 = vdwg.mxu0
    %v3074 = vsel %vm2929, %v3019, 0
    %v3077 = vsel %vm3029, %v2513, 0
    %3079 = vmatprep.subr.bf16.mxu0 0
    %3080 = vmatpush1.bf16.msra.mxu0 0
    %3081 = vmatprep.subr.bf16.mxu0 0
    %3082 = vmatpush1.bf16.msra.mxu0 0
    %3083 = vmatprep.subr.bf16.mxu0 0
    %3084 = vmatpush1.bf16.msra.mxu0 0
    %3085 = vmatprep.subr.bf16.mxu0 0
    %3086 = vmatpush1.bf16.msra.mxu0 0
    %3087 = vmatprep.subr.bf16.mxu0 0
    %3088 = vmatpush1.bf16.msra.mxu0 0
    %3089 = vmatprep.subr.bf16.mxu0 0
    %3090 = vmatpush1.bf16.msra.mxu0 0
    %3091 = vmatprep.subr.bf16.mxu0 0
    %3092 = vmatpush1.bf16.msra.mxu0 0
    %3093 = vmatprep.subr.bf16.mxu0 0
    %3094 = vmatpush1.bf16.msra.mxu0 %v3077
    %3095 = vmatprep.subr.bf16.mxu0 0
    %3096 = vmatpush2.bf16.msra.mxu0 0
    %3097 = vmatprep.subr.bf16.mxu0 0
    %3098 = vmatpush2.bf16.msra.mxu0 0
    %3099 = vmatprep.subr.bf16.mxu0 0
    %3100 = vmatpush2.bf16.msra.mxu0 0
    %3101 = vmatprep.subr.bf16.mxu0 0
    %3102 = vmatpush2.bf16.msra.mxu0 0
    %3103 = vmatprep.subr.bf16.mxu0 0
    %3104 = vmatpush2.bf16.msra.mxu0 0
    %3105 = vmatprep.subr.bf16.mxu0 0
    %3106 = vmatpush2.bf16.msra.mxu0 0
    %3107 = vmatprep.subr.bf16.mxu0 0
    %3108 = vmatpush2.bf16.msra.mxu0 0
    %3109 = vmatprep.subr.bf16.mxu0 0
    %3110 = vmatpush2.bf16.msra.mxu0 0
    %3111 = vmatprep.mubr.bf16.mxu0 0
    %3112 = vmatmul.mubr.bf16.gmra.mxu0 %v3074
    %v3113 = vpop.f32.mrf.mxu0
    %v3114 = vadd.f32 0.0, %v3113
    %v3115 = vpop.f32.mrf.mxu0
    %v3116 = vpop.f32.mrf.mxu0
    %v3117 = vpop.f32.mrf.mxu0
    %3118 = vdwg.mxu0
    %v3120 = vsel %vm2929, %v3020, 0
    %v3123 = vsel %vm3029, %v2514, 0
    %3125 = vmatprep.subr.bf16.mxu0 0
    %3126 = vmatpush1.bf16.msra.mxu0 0
    %3127 = vmatprep.subr.bf16.mxu0 0
    %3128 = vmatpush1.bf16.msra.mxu0 0
    %3129 = vmatprep.subr.bf16.mxu0 0
    %3130 = vmatpush1.bf16.msra.mxu0 0
    %3131 = vmatprep.subr.bf16.mxu0 0
    %3132 = vmatpush1.bf16.msra.mxu0 0
    %3133 = vmatprep.subr.bf16.mxu0 0
    %3134 = vmatpush1.bf16.msra.mxu0 0
    %3135 = vmatprep.subr.bf16.mxu0 0
    %3136 = vmatpush1.bf16.msra.mxu0 0
    %3137 = vmatprep.subr.bf16.mxu0 0
    %3138 = vmatpush1.bf16.msra.mxu0 0
    %3139 = vmatprep.subr.bf16.mxu0 0
    %3140 = vmatpush1.bf16.msra.mxu0 %v3123
    %3141 = vmatprep.subr.bf16.mxu0 0
    %3142 = vmatpush2.bf16.msra.mxu0 0
    %3143 = vmatprep.subr.bf16.mxu0 0
    %3144 = vmatpush2.bf16.msra.mxu0 0
    %3145 = vmatprep.subr.bf16.mxu0 0
    %3146 = vmatpush2.bf16.msra.mxu0 0
    %3147 = vmatprep.subr.bf16.mxu0 0
    %3148 = vmatpush2.bf16.msra.mxu0 0
    %3149 = vmatprep.subr.bf16.mxu0 0
    %3150 = vmatpush2.bf16.msra.mxu0 0
    %3151 = vmatprep.subr.bf16.mxu0 0
    %3152 = vmatpush2.bf16.msra.mxu0 0
    %3153 = vmatprep.subr.bf16.mxu0 0
    %3154 = vmatpush2.bf16.msra.mxu0 0
    %3155 = vmatprep.subr.bf16.mxu0 0
    %3156 = vmatpush2.bf16.msra.mxu0 0
    %3157 = vmatprep.mubr.bf16.mxu0 0
    %3158 = vmatmul.mubr.bf16.gmra.mxu0 %v3120
    %v3159 = vpop.f32.mrf.mxu0
    %v3160 = vadd.f32 0.0, %v3159
    %v3161 = vpop.f32.mrf.mxu0
    %v3162 = vpop.f32.mrf.mxu0
    %v3163 = vpop.f32.mrf.mxu0
    %3164 = vdwg.mxu0
    %v3166 = vsel %vm2929, %v3021, 0
    %v3169 = vsel %vm3029, %v2515, 0
    %3171 = vmatprep.subr.bf16.mxu0 0
    %3172 = vmatpush1.bf16.msra.mxu0 0
    %3173 = vmatprep.subr.bf16.mxu0 0
    %3174 = vmatpush1.bf16.msra.mxu0 0
    %3175 = vmatprep.subr.bf16.mxu0 0
    %3176 = vmatpush1.bf16.msra.mxu0 0
    %3177 = vmatprep.subr.bf16.mxu0 0
    %3178 = vmatpush1.bf16.msra.mxu0 0
    %3179 = vmatprep.subr.bf16.mxu0 0
    %3180 = vmatpush1.bf16.msra.mxu0 0
    %3181 = vmatprep.subr.bf16.mxu0 0
    %3182 = vmatpush1.bf16.msra.mxu0 0
    %3183 = vmatprep.subr.bf16.mxu0 0
    %3184 = vmatpush1.bf16.msra.mxu0 0
    %3185 = vmatprep.subr.bf16.mxu0 0
    %3186 = vmatpush1.bf16.msra.mxu0 %v3169
    %3187 = vmatprep.subr.bf16.mxu0 0
    %3188 = vmatpush2.bf16.msra.mxu0 0
    %3189 = vmatprep.subr.bf16.mxu0 0
    %3190 = vmatpush2.bf16.msra.mxu0 0
    %3191 = vmatprep.subr.bf16.mxu0 0
    %3192 = vmatpush2.bf16.msra.mxu0 0
    %3193 = vmatprep.subr.bf16.mxu0 0
    %3194 = vmatpush2.bf16.msra.mxu0 0
    %3195 = vmatprep.subr.bf16.mxu0 0
    %3196 = vmatpush2.bf16.msra.mxu0 0
    %3197 = vmatprep.subr.bf16.mxu0 0
    %3198 = vmatpush2.bf16.msra.mxu0 0
    %3199 = vmatprep.subr.bf16.mxu0 0
    %3200 = vmatpush2.bf16.msra.mxu0 0
    %3201 = vmatprep.subr.bf16.mxu0 0
    %3202 = vmatpush2.bf16.msra.mxu0 0
    %3203 = vmatprep.mubr.bf16.mxu0 0
    %3204 = vmatmul.mubr.bf16.gmra.mxu0 %v3166
    %v3205 = vpop.f32.mrf.mxu0
    %v3206 = vadd.f32 0.0, %v3205
    %v3207 = vpop.f32.mrf.mxu0
    %v3208 = vpop.f32.mrf.mxu0
    %v3209 = vpop.f32.mrf.mxu0
    %3210 = vdwg.mxu0
    %v3212 = vsel %vm2929, %v3022, 0
    %v3215 = vsel %vm3029, %v2516, 0
    %3217 = vmatprep.subr.bf16.mxu0 0
    %3218 = vmatpush1.bf16.msra.mxu0 0
    %3219 = vmatprep.subr.bf16.mxu0 0
    %3220 = vmatpush1.bf16.msra.mxu0 0
    %3221 = vmatprep.subr.bf16.mxu0 0
    %3222 = vmatpush1.bf16.msra.mxu0 0
    %3223 = vmatprep.subr.bf16.mxu0 0
    %3224 = vmatpush1.bf16.msra.mxu0 0
    %3225 = vmatprep.subr.bf16.mxu0 0
    %3226 = vmatpush1.bf16.msra.mxu0 0
    %3227 = vmatprep.subr.bf16.mxu0 0
    %3228 = vmatpush1.bf16.msra.mxu0 0
    %3229 = vmatprep.subr.bf16.mxu0 0
    %3230 = vmatpush1.bf16.msra.mxu0 0
    %3231 = vmatprep.subr.bf16.mxu0 0
    %3232 = vmatpush1.bf16.msra.mxu0 %v3215
    %3233 = vmatprep.subr.bf16.mxu0 0
    %3234 = vmatpush2.bf16.msra.mxu0 0
    %3235 = vmatprep.subr.bf16.mxu0 0
    %3236 = vmatpush2.bf16.msra.mxu0 0
    %3237 = vmatprep.subr.bf16.mxu0 0
    %3238 = vmatpush2.bf16.msra.mxu0 0
    %3239 = vmatprep.subr.bf16.mxu0 0
    %3240 = vmatpush2.bf16.msra.mxu0 0
    %3241 = vmatprep.subr.bf16.mxu0 0
    %3242 = vmatpush2.bf16.msra.mxu0 0
    %3243 = vmatprep.subr.bf16.mxu0 0
    %3244 = vmatpush2.bf16.msra.mxu0 0
    %3245 = vmatprep.subr.bf16.mxu0 0
    %3246 = vmatpush2.bf16.msra.mxu0 0
    %3247 = vmatprep.subr.bf16.mxu0 0
    %3248 = vmatpush2.bf16.msra.mxu0 0
    %3249 = vmatprep.mubr.bf16.mxu0 0
    %3250 = vmatmul.mubr.bf16.gmra.mxu0 %v3212
    %v3251 = vpop.f32.mrf.mxu0
    %v3252 = vadd.f32 0.0, %v3251
    %v3253 = vpop.f32.mrf.mxu0
    %v3254 = vpop.f32.mrf.mxu0
    %v3255 = vpop.f32.mrf.mxu0
    %3256 = vdwg.mxu0
    %v3258 = vsel %vm2929, %v3023, 0
    %v3261 = vsel %vm3029, %v2517, 0
    %3263 = vmatprep.subr.bf16.mxu0 0
    %3264 = vmatpush1.bf16.msra.mxu0 0
    %3265 = vmatprep.subr.bf16.mxu0 0
    %3266 = vmatpush1.bf16.msra.mxu0 0
    %3267 = vmatprep.subr.bf16.mxu0 0
    %3268 = vmatpush1.bf16.msra.mxu0 0
    %3269 = vmatprep.subr.bf16.mxu0 0
    %3270 = vmatpush1.bf16.msra.mxu0 0
    %3271 = vmatprep.subr.bf16.mxu0 0
    %3272 = vmatpush1.bf16.msra.mxu0 0
    %3273 = vmatprep.subr.bf16.mxu0 0
    %3274 = vmatpush1.bf16.msra.mxu0 0
    %3275 = vmatprep.subr.bf16.mxu0 0
    %3276 = vmatpush1.bf16.msra.mxu0 0
    %3277 = vmatprep.subr.bf16.mxu0 0
    %3278 = vmatpush1.bf16.msra.mxu0 %v3261
    %3279 = vmatprep.subr.bf16.mxu0 0
    %3280 = vmatpush2.bf16.msra.mxu0 0
    %3281 = vmatprep.subr.bf16.mxu0 0
    %3282 = vmatpush2.bf16.msra.mxu0 0
    %3283 = vmatprep.subr.bf16.mxu0 0
    %3284 = vmatpush2.bf16.msra.mxu0 0
    %3285 = vmatprep.subr.bf16.mxu0 0
    %3286 = vmatpush2.bf16.msra.mxu0 0
    %3287 = vmatprep.subr.bf16.mxu0 0
    %3288 = vmatpush2.bf16.msra.mxu0 0
    %3289 = vmatprep.subr.bf16.mxu0 0
    %3290 = vmatpush2.bf16.msra.mxu0 0
    %3291 = vmatprep.subr.bf16.mxu0 0
    %3292 = vmatpush2.bf16.msra.mxu0 0
    %3293 = vmatprep.subr.bf16.mxu0 0
    %3294 = vmatpush2.bf16.msra.mxu0 0
    %3295 = vmatprep.mubr.bf16.mxu0 0
    %3296 = vmatmul.mubr.bf16.gmra.mxu0 %v3258
    %v3297 = vpop.f32.mrf.mxu0
    %v3298 = vadd.f32 0.0, %v3297
    %v3299 = vpop.f32.mrf.mxu0
    %v3300 = vpop.f32.mrf.mxu0
    %v3301 = vpop.f32.mrf.mxu0
    %3302 = vdwg.mxu0
    %v3304 = vsel %vm2929, %v3024, 0
    %v3307 = vsel %vm3029, %v2518, 0
    %3309 = vmatprep.subr.bf16.mxu0 0
    %3310 = vmatpush1.bf16.msra.mxu0 0
    %3311 = vmatprep.subr.bf16.mxu0 0
    %3312 = vmatpush1.bf16.msra.mxu0 0
    %3313 = vmatprep.subr.bf16.mxu0 0
    %3314 = vmatpush1.bf16.msra.mxu0 0
    %3315 = vmatprep.subr.bf16.mxu0 0
    %3316 = vmatpush1.bf16.msra.mxu0 0
    %3317 = vmatprep.subr.bf16.mxu0 0
    %3318 = vmatpush1.bf16.msra.mxu0 0
    %3319 = vmatprep.subr.bf16.mxu0 0
    %3320 = vmatpush1.bf16.msra.mxu0 0
    %3321 = vmatprep.subr.bf16.mxu0 0
    %3322 = vmatpush1.bf16.msra.mxu0 0
    %3323 = vmatprep.subr.bf16.mxu0 0
    %3324 = vmatpush1.bf16.msra.mxu0 %v3307
    %3325 = vmatprep.subr.bf16.mxu0 0
    %3326 = vmatpush2.bf16.msra.mxu0 0
    %3327 = vmatprep.subr.bf16.mxu0 0
    %3328 = vmatpush2.bf16.msra.mxu0 0
    %3329 = vmatprep.subr.bf16.mxu0 0
    %3330 = vmatpush2.bf16.msra.mxu0 0
    %3331 = vmatprep.subr.bf16.mxu0 0
    %3332 = vmatpush2.bf16.msra.mxu0 0
    %3333 = vmatprep.subr.bf16.mxu0 0
    %3334 = vmatpush2.bf16.msra.mxu0 0
    %3335 = vmatprep.subr.bf16.mxu0 0
    %3336 = vmatpush2.bf16.msra.mxu0 0
    %3337 = vmatprep.subr.bf16.mxu0 0
    %3338 = vmatpush2.bf16.msra.mxu0 0
    %3339 = vmatprep.subr.bf16.mxu0 0
    %3340 = vmatpush2.bf16.msra.mxu0 0
    %3341 = vmatprep.mubr.bf16.mxu0 0
    %3342 = vmatmul.mubr.bf16.gmra.mxu0 %v3304
    %v3343 = vpop.f32.mrf.mxu0
    %v3344 = vadd.f32 0.0, %v3343
    %v3345 = vpop.f32.mrf.mxu0
    %v3346 = vpop.f32.mrf.mxu0
    %v3347 = vpop.f32.mrf.mxu0
    %3348 = vdwg.mxu0
    %v3350 = vsel %vm2929, %v3025, 0
    %v3353 = vsel %vm3029, %v2519, 0
    %3355 = vmatprep.subr.bf16.mxu0 0
    %3356 = vmatpush1.bf16.msra.mxu0 0
    %3357 = vmatprep.subr.bf16.mxu0 0
    %3358 = vmatpush1.bf16.msra.mxu0 0
    %3359 = vmatprep.subr.bf16.mxu0 0
    %3360 = vmatpush1.bf16.msra.mxu0 0
    %3361 = vmatprep.subr.bf16.mxu0 0
    %3362 = vmatpush1.bf16.msra.mxu0 0
    %3363 = vmatprep.subr.bf16.mxu0 0
    %3364 = vmatpush1.bf16.msra.mxu0 0
    %3365 = vmatprep.subr.bf16.mxu0 0
    %3366 = vmatpush1.bf16.msra.mxu0 0
    %3367 = vmatprep.subr.bf16.mxu0 0
    %3368 = vmatpush1.bf16.msra.mxu0 0
    %3369 = vmatprep.subr.bf16.mxu0 0
    %3370 = vmatpush1.bf16.msra.mxu0 %v3353
    %3371 = vmatprep.subr.bf16.mxu0 0
    %3372 = vmatpush2.bf16.msra.mxu0 0
    %3373 = vmatprep.subr.bf16.mxu0 0
    %3374 = vmatpush2.bf16.msra.mxu0 0
    %3375 = vmatprep.subr.bf16.mxu0 0
    %3376 = vmatpush2.bf16.msra.mxu0 0
    %3377 = vmatprep.subr.bf16.mxu0 0
    %3378 = vmatpush2.bf16.msra.mxu0 0
    %3379 = vmatprep.subr.bf16.mxu0 0
    %3380 = vmatpush2.bf16.msra.mxu0 0
    %3381 = vmatprep.subr.bf16.mxu0 0
    %3382 = vmatpush2.bf16.msra.mxu0 0
    %3383 = vmatprep.subr.bf16.mxu0 0
    %3384 = vmatpush2.bf16.msra.mxu0 0
    %3385 = vmatprep.subr.bf16.mxu0 0
    %3386 = vmatpush2.bf16.msra.mxu0 0
    %3387 = vmatprep.mubr.bf16.mxu0 0
    %3388 = vmatmul.mubr.bf16.gmra.mxu0 %v3350
    %v3389 = vpop.f32.mrf.mxu0
    %v3390 = vadd.f32 0.0, %v3389
    %v3391 = vpop.f32.mrf.mxu0
    %v3392 = vpop.f32.mrf.mxu0
    %v3393 = vpop.f32.mrf.mxu0
    %3394 = vdwg.mxu0
    %3396 = vrot.lane.b32.xlu0 %v3114, 16
    %v3397 = vpop.permute.xlu0 %3396
    %3400 = vrot.lane.b32.xlu0 %v3160, 32
    %v3401 = vpop.permute.xlu0 %3400
    %3404 = vrot.lane.b32.xlu0 %v3206, 48
    %v3405 = vpop.permute.xlu0 %3404
    %v3407 = vsel %vm2523, %v3068, %v3397
    %vm3408 = vcmask 261120
    %v3409 = vsel %vm3408, %v3407, %v3401
    %vm3410 = vcmask 392192
    %v3411 = vsel %vm3410, %v3409, %v3405
    %3413 = vrot.lane.b32.xlu0 %v3298, 16
    %v3414 = vpop.permute.xlu0 %3413
    %3417 = vrot.lane.b32.xlu0 %v3344, 32
    %v3418 = vpop.permute.xlu0 %3417
    %3421 = vrot.lane.b32.xlu0 %v3390, 48
    %v3422 = vpop.permute.xlu0 %3421
    %v3424 = vsel %vm2523, %v3252, %v3414
    %v3425 = vsel %vm3408, %v3424, %v3418
    %v3426 = vsel %vm3410, %v3425, %v3422
    %v3427 = vpack.c.bf16 %v3426, %v3411
    %v3428 = vld [vmem:[%s17] sm:$0xf]
    %v3429 = vld [vmem:[%s17 + $0x4] sm:$0xf]
    %v3430 = vld [vmem:[%s17 + $0x8] sm:$0xf]
    %v3431 = vld [vmem:[%s17 + $0xc] sm:$0xf]
    %v3432 = vld [vmem:[%s17 + $0x10] sm:$0xf]
    %v3433 = vld [vmem:[%s17 + $0x14] sm:$0xf]
    %v3434 = vld [vmem:[%s17 + $0x18] sm:$0xf]
    %v3435 = vld [vmem:[%s17 + $0x1c] sm:$0xf]
    %v3436 = vld [vmem:[%s19] sm:$0x1]
    %v3438 = vlaneseq
    %v3439 = vshrl.u32 %v3438, 7
    %v3440 = vsub.s32 0, %v3439
    %v3441 = vrot.slane %v3436, %v3440
    %v3451 = vunpack.c.l.b16 %v3428
    %v3452 = vunpack.c.l.b16 %v3429
    %v3453 = vunpack.c.l.b16 %v3430
    %v3454 = vunpack.c.l.b16 %v3431
    %v3455 = vunpack.c.l.b16 %v3432
    %v3456 = vunpack.c.l.b16 %v3433
    %v3457 = vunpack.c.l.b16 %v3434
    %v3458 = vunpack.c.l.b16 %v3435
    %v3459 = vpack.c.b16 %v3452, %v3451
    %v3460 = vpack.c.b16 %v3454, %v3453
    %v3461 = vpack.c.b16 %v3456, %v3455
    %v3462 = vpack.c.b16 %v3458, %v3457
    %v3468 = vsel %vm2311, %v3427, 0
    %3470 = vmatprep.subr.bf16.mxu0 0
    %3471 = vmatpush1.bf16.msra.mxu0 0
    %3472 = vmatprep.subr.bf16.mxu0 0
    %3473 = vmatpush1.bf16.msra.mxu0 0
    %3474 = vmatprep.subr.bf16.mxu0 0
    %3475 = vmatpush1.bf16.msra.mxu0 0
    %3476 = vmatprep.subr.bf16.mxu0 0
    %3477 = vmatpush1.bf16.msra.mxu0 0
    %3478 = vmatprep.subr.bf16.mxu0 0
    %3479 = vmatpush1.bf16.msra.mxu0 %v3462
    %3480 = vmatprep.subr.bf16.mxu0 0
    %3481 = vmatpush1.bf16.msra.mxu0 %v3461
    %3482 = vmatprep.subr.bf16.mxu0 0
    %3483 = vmatpush1.bf16.msra.mxu0 %v3460
    %3484 = vmatprep.subr.bf16.mxu0 0
    %3485 = vmatpush1.bf16.msra.mxu0 %v3459
    %3486 = vmatprep.subr.bf16.mxu0 0
    %3487 = vmatpush2.bf16.msra.mxu0 0
    %3488 = vmatprep.subr.bf16.mxu0 0
    %3489 = vmatpush2.bf16.msra.mxu0 0
    %3490 = vmatprep.subr.bf16.mxu0 0
    %3491 = vmatpush2.bf16.msra.mxu0 0
    %3492 = vmatprep.subr.bf16.mxu0 0
    %3493 = vmatpush2.bf16.msra.mxu0 0
    %3494 = vmatprep.subr.bf16.mxu0 0
    %3495 = vmatpush2.bf16.msra.mxu0 0
    %3496 = vmatprep.subr.bf16.mxu0 0
    %3497 = vmatpush2.bf16.msra.mxu0 0
    %3498 = vmatprep.subr.bf16.mxu0 0
    %3499 = vmatpush2.bf16.msra.mxu0 0
    %3500 = vmatprep.subr.bf16.mxu0 0
    %3501 = vmatpush2.bf16.msra.mxu0 0
    %3502 = vmatprep.mubr.bf16.mxu0 0
    %3503 = vmatmul.mubr.bf16.gmra.mxu0 %v3468
    %v3504 = vpop.f32.mrf.mxu0
    %v3505 = vadd.f32 %v3441, %v3504
    %v3506 = vpop.f32.mrf.mxu0
    %v3507 = vpop.f32.mrf.mxu0
    %v3508 = vadd.f32 %v3441, %v3507
    %v3509 = vpop.f32.mrf.mxu0
    %3510 = vdwg.mxu0
    %v3511 = vadd.f32 %v2304, %v3505
    %v3512 = vadd.f32 %v2307, %v3508
    %v3513 = vsel %vm2311, %v3511, 0.0
    %3514 = vadd.xlane.f32.xlu0 %v3513
    %v3515 = vpop.xlane.xlu0 %3514
    %v3516 = vsel %vm2311, %v3512, 0.0
    %3517 = vadd.xlane.f32.xlu0 %v3516
    %v3518 = vpop.xlane.xlu0 %3517
    %v3519 = vmul.f32 %v3515, %v2318
    %v3520 = vmul.f32 %v3518, %v2318
    %v3521 = vsub.f32 %v3511, %v3519
    %v3522 = vsub.f32 %v3512, %v3520
    %v3523 = vmul.f32 %v3521, %v3521
    %v3524 = vmul.f32 %v3522, %v3522
    %v3525 = vsel %vm2311, %v3523, 0.0
    %3526 = vadd.xlane.f32.xlu0 %v3525
    %v3527 = vpop.xlane.xlu0 %3526
    %v3528 = vsel %vm2311, %v3524, 0.0
    %3529 = vadd.xlane.f32.xlu0 %v3528
    %v3530 = vpop.xlane.xlu0 %3529
    %v3531 = vmul.f32 %v3527, %v2318
    %v3532 = vmul.f32 %v3530, %v2318
    %v3533 = vadd.f32 %v3531, 1e-06
    %v3534 = vadd.f32 %v3532, 1e-06
    %v3535 = vrsqrt.pop %v3533
    %v3536 = vrsqrt.pop %v3534
    %v3537 = vmul.f32 %v3521, %v3535
    %v3538 = vmul.f32 %v3522, %v3536
    %v3539 = vld [vmem:[%s21] sm:$0x1]
    %v3541 = vlaneseq
    %v3542 = vshrl.u32 %v3541, 7
    %v3543 = vsub.s32 0, %v3542
    %v3544 = vrot.slane %v3539, %v3543
    %v3546 = vmul.f32 %v3537, %v3544
    %v3547 = vmul.f32 %v3538, %v3544
    %v3548 = vld [vmem:[%s23] sm:$0x1]
    %v3550 = vlaneseq
    %v3551 = vshrl.u32 %v3550, 7
    %v3552 = vsub.s32 0, %v3551
    %v3553 = vrot.slane %v3548, %v3552
    %v3555 = vadd.f32 %v3546, %v3553
    %v3556 = vadd.f32 %v3547, %v3553
    %v3557 = vpack.c.bf16 %v3556, %v3555
    %v3558 = vld [vmem:[%s25] sm:$0xff]
    %v3559 = vld [vmem:[%s25 + $0x8] sm:$0xff]
    %v3560 = vld [vmem:[%s25 + $0x10] sm:$0xff]
    %v3561 = vld [vmem:[%s25 + $0x18] sm:$0xff]
    %v3562 = vld [vmem:[%s25 + $0x20] sm:$0xff]
    %v3563 = vld [vmem:[%s25 + $0x28] sm:$0xff]
    %v3564 = vld [vmem:[%s25 + $0x30] sm:$0xff]
    %v3565 = vld [vmem:[%s25 + $0x38] sm:$0xff]
    %v3566 = vld [vmem:[%s27] sm:$0x3]
    %v3568 = vlaneseq
    %v3569 = vshrl.u32 %v3568, 7
    %v3570 = vsub.s32 0, %v3569
    %v3571 = vrot.slane %v3566, %v3570
    %v3572 = vlaneseq
    %v3573 = vshrl.u32 %v3572, 7
    %v3574 = vsub.s32 1, %v3573
    %v3575 = vrot.slane %v3566, %v3574
    %v3586 = vunpack.c.l.b16 %v3558
    %v3587 = vunpack.c.h.b16 %v3558
    %v3588 = vunpack.c.l.b16 %v3559
    %v3589 = vunpack.c.h.b16 %v3559
    %v3590 = vunpack.c.l.b16 %v3560
    %v3591 = vunpack.c.h.b16 %v3560
    %v3592 = vunpack.c.l.b16 %v3561
    %v3593 = vunpack.c.h.b16 %v3561
    %v3594 = vunpack.c.l.b16 %v3562
    %v3595 = vunpack.c.h.b16 %v3562
    %v3596 = vunpack.c.l.b16 %v3563
    %v3597 = vunpack.c.h.b16 %v3563
    %v3598 = vunpack.c.l.b16 %v3564
    %v3599 = vunpack.c.h.b16 %v3564
    %v3600 = vunpack.c.l.b16 %v3565
    %v3601 = vunpack.c.h.b16 %v3565
    %v3602 = vpack.c.b16 %v3588, %v3586
    %v3603 = vpack.c.b16 %v3589, %v3587
    %v3604 = vpack.c.b16 %v3592, %v3590
    %v3605 = vpack.c.b16 %v3593, %v3591
    %v3606 = vpack.c.b16 %v3596, %v3594
    %v3607 = vpack.c.b16 %v3597, %v3595
    %v3608 = vpack.c.b16 %v3600, %v3598
    %v3609 = vpack.c.b16 %v3601, %v3599
    %v3619 = vsel %vm2311, %v3557, 0
    %3621 = vmatprep.subr.bf16.mxu0 0
    %3622 = vmatpush1.bf16.msra.mxu0 0
    %3623 = vmatprep.subr.bf16.mxu0 0
    %3624 = vmatpush1.bf16.msra.mxu0 0
    %3625 = vmatprep.subr.bf16.mxu0 0
    %3626 = vmatpush1.bf16.msra.mxu0 0
    %3627 = vmatprep.subr.bf16.mxu0 0
    %3628 = vmatpush1.bf16.msra.mxu0 0
    %3629 = vmatprep.subr.bf16.mxu0 %v3609
    %3630 = vmatpush1.bf16.msra.mxu0 %v3608
    %3631 = vmatprep.subr.bf16.mxu0 %v3607
    %3632 = vmatpush1.bf16.msra.mxu0 %v3606
    %3633 = vmatprep.subr.bf16.mxu0 %v3605
    %3634 = vmatpush1.bf16.msra.mxu0 %v3604
    %3635 = vmatprep.subr.bf16.mxu0 %v3603
    %3636 = vmatpush1.bf16.msra.mxu0 %v3602
    %3637 = vmatprep.subr.bf16.mxu0 0
    %3638 = vmatpush2.bf16.msra.mxu0 0
    %3639 = vmatprep.subr.bf16.mxu0 0
    %3640 = vmatpush2.bf16.msra.mxu0 0
    %3641 = vmatprep.subr.bf16.mxu0 0
    %3642 = vmatpush2.bf16.msra.mxu0 0
    %3643 = vmatprep.subr.bf16.mxu0 0
    %3644 = vmatpush2.bf16.msra.mxu0 0
    %3645 = vmatprep.subr.bf16.mxu0 0
    %3646 = vmatpush2.bf16.msra.mxu0 0
    %3647 = vmatprep.subr.bf16.mxu0 0
    %3648 = vmatpush2.bf16.msra.mxu0 0
    %3649 = vmatprep.subr.bf16.mxu0 0
    %3650 = vmatpush2.bf16.msra.mxu0 0
    %3651 = vmatprep.subr.bf16.mxu0 0
    %3652 = vmatpush2.bf16.msra.mxu0 0
    %3653 = vmatprep.mubr.bf16.mxu0 0
    %3654 = vmatmul.mubr.bf16.gmra.mxu0 %v3619
    %v3655 = vpop.f32.mrf.mxu0
    %v3656 = vadd.f32 %v3571, %v3655
    %v3657 = vpop.f32.mrf.mxu0
    %v3658 = vadd.f32 %v3575, %v3657
    %v3659 = vpop.f32.mrf.mxu0
    %v3660 = vadd.f32 %v3571, %v3659
    %v3661 = vpop.f32.mrf.mxu0
    %v3662 = vadd.f32 %v3575, %v3661
    %3663 = vdwg.mxu0
    %v3664 = vmul.f32 %v3656, %v3656
    %v3665 = vmul.f32 %v3658, %v3658
    %v3666 = vmul.f32 %v3660, %v3660
    %v3667 = vmul.f32 %v3662, %v3662
    %v3668 = vmul.f32 %v3656, %v3664
    %v3669 = vmul.f32 %v3658, %v3665
    %v3670 = vmul.f32 %v3660, %v3666
    %v3671 = vmul.f32 %v3662, %v3667
    %v3672 = vmul.f32 %v3668, 0.044715
    %v3673 = vmul.f32 %v3669, 0.044715
    %v3674 = vmul.f32 %v3670, 0.044715
    %v3675 = vmul.f32 %v3671, 0.044715
    %v3676 = vadd.f32 %v3656, %v3672
    %v3677 = vadd.f32 %v3658, %v3673
    %v3678 = vadd.f32 %v3660, %v3674
    %v3679 = vadd.f32 %v3662, %v3675
    %v3680 = vmul.f32 %v3676, 0.7978846
    %v3681 = vmul.f32 %v3677, 0.7978846
    %v3682 = vmul.f32 %v3678, 0.7978846
    %v3683 = vmul.f32 %v3679, 0.7978846
    %v3684 = vtanh.pop %v3680
    %v3685 = vtanh.pop %v3681
    %v3686 = vtanh.pop %v3682
    %v3687 = vtanh.pop %v3683
    %v3688 = vadd.f32 %v3684, 1.0
    %v3689 = vadd.f32 %v3685, 1.0
    %v3690 = vadd.f32 %v3686, 1.0
    %v3691 = vadd.f32 %v3687, 1.0
    %v3692 = vmul.f32 %v3688, 0.5
    %v3693 = vmul.f32 %v3689, 0.5
    %v3694 = vmul.f32 %v3690, 0.5
    %v3695 = vmul.f32 %v3691, 0.5
    %v3696 = vmul.f32 %v3656, %v3692
    %v3697 = vmul.f32 %v3658, %v3693
    %v3698 = vmul.f32 %v3660, %v3694
    %v3699 = vmul.f32 %v3662, %v3695
    %v3700 = vpack.c.bf16 %v3698, %v3696
    %v3701 = vpack.c.bf16 %v3699, %v3697
    %v3702 = vld [vmem:[%s29] sm:$0xf]
    %v3703 = vld [vmem:[%s29 + $0x4] sm:$0xf]
    %v3704 = vld [vmem:[%s29 + $0x8] sm:$0xf]
    %v3705 = vld [vmem:[%s29 + $0xc] sm:$0xf]
    %v3706 = vld [vmem:[%s29 + $0x10] sm:$0xf]
    %v3707 = vld [vmem:[%s29 + $0x14] sm:$0xf]
    %v3708 = vld [vmem:[%s29 + $0x18] sm:$0xf]
    %v3709 = vld [vmem:[%s29 + $0x1c] sm:$0xf]
    %v3710 = vld [vmem:[%s29 + $0x20] sm:$0xf]
    %v3711 = vld [vmem:[%s29 + $0x24] sm:$0xf]
    %v3712 = vld [vmem:[%s29 + $0x28] sm:$0xf]
    %v3713 = vld [vmem:[%s29 + $0x2c] sm:$0xf]
    %v3714 = vld [vmem:[%s29 + $0x30] sm:$0xf]
    %v3715 = vld [vmem:[%s29 + $0x34] sm:$0xf]
    %v3716 = vld [vmem:[%s29 + $0x38] sm:$0xf]
    %v3717 = vld [vmem:[%s29 + $0x3c] sm:$0xf]
    %v3718 = vld [vmem:[%s29 + $0x40] sm:$0xf]
    %v3719 = vld [vmem:[%s29 + $0x44] sm:$0xf]
    %v3720 = vld [vmem:[%s29 + $0x48] sm:$0xf]
    %v3721 = vld [vmem:[%s29 + $0x4c] sm:$0xf]
    %v3722 = vld [vmem:[%s29 + $0x50] sm:$0xf]
    %v3723 = vld [vmem:[%s29 + $0x54] sm:$0xf]
    %v3724 = vld [vmem:[%s29 + $0x58] sm:$0xf]
    %v3725 = vld [vmem:[%s29 + $0x5c] sm:$0xf]
    %v3726 = vld [vmem:[%s29 + $0x60] sm:$0xf]
    %v3727 = vld [vmem:[%s29 + $0x64] sm:$0xf]
    %v3728 = vld [vmem:[%s29 + $0x68] sm:$0xf]
    %v3729 = vld [vmem:[%s29 + $0x6c] sm:$0xf]
    %v3730 = vld [vmem:[%s29 + $0x70] sm:$0xf]
    %v3731 = vld [vmem:[%s29 + $0x74] sm:$0xf]
    %v3732 = vld [vmem:[%s29 + $0x78] sm:$0xf]
    %v3733 = vld [vmem:[%s29 + $0x7c] sm:$0xf]
    %v3734 = vld [vmem:[%s31] sm:$0x1]
    %v3736 = vlaneseq
    %v3737 = vshrl.u32 %v3736, 7
    %v3738 = vsub.s32 0, %v3737
    %v3739 = vrot.slane %v3734, %v3738
    %v3773 = vunpack.c.l.b16 %v3702
    %v3774 = vunpack.c.l.b16 %v3703
    %v3775 = vunpack.c.l.b16 %v3704
    %v3776 = vunpack.c.l.b16 %v3705
    %v3777 = vunpack.c.l.b16 %v3706
    %v3778 = vunpack.c.l.b16 %v3707
    %v3779 = vunpack.c.l.b16 %v3708
    %v3780 = vunpack.c.l.b16 %v3709
    %v3781 = vunpack.c.l.b16 %v3710
    %v3782 = vunpack.c.l.b16 %v3711
    %v3783 = vunpack.c.l.b16 %v3712
    %v3784 = vunpack.c.l.b16 %v3713
    %v3785 = vunpack.c.l.b16 %v3714
    %v3786 = vunpack.c.l.b16 %v3715
    %v3787 = vunpack.c.l.b16 %v3716
    %v3788 = vunpack.c.l.b16 %v3717
    %v3789 = vunpack.c.l.b16 %v3718
    %v3790 = vunpack.c.l.b16 %v3719
    %v3791 = vunpack.c.l.b16 %v3720
    %v3792 = vunpack.c.l.b16 %v3721
    %v3793 = vunpack.c.l.b16 %v3722
    %v3794 = vunpack.c.l.b16 %v3723
    %v3795 = vunpack.c.l.b16 %v3724
    %v3796 = vunpack.c.l.b16 %v3725
    %v3797 = vunpack.c.l.b16 %v3726
    %v3798 = vunpack.c.l.b16 %v3727
    %v3799 = vunpack.c.l.b16 %v3728
    %v3800 = vunpack.c.l.b16 %v3729
    %v3801 = vunpack.c.l.b16 %v3730
    %v3802 = vunpack.c.l.b16 %v3731
    %v3803 = vunpack.c.l.b16 %v3732
    %v3804 = vunpack.c.l.b16 %v3733
    %v3805 = vpack.c.b16 %v3774, %v3773
    %v3806 = vpack.c.b16 %v3776, %v3775
    %v3807 = vpack.c.b16 %v3778, %v3777
    %v3808 = vpack.c.b16 %v3780, %v3779
    %v3809 = vpack.c.b16 %v3782, %v3781
    %v3810 = vpack.c.b16 %v3784, %v3783
    %v3811 = vpack.c.b16 %v3786, %v3785
    %v3812 = vpack.c.b16 %v3788, %v3787
    %v3813 = vpack.c.b16 %v3790, %v3789
    %v3814 = vpack.c.b16 %v3792, %v3791
    %v3815 = vpack.c.b16 %v3794, %v3793
    %v3816 = vpack.c.b16 %v3796, %v3795
    %v3817 = vpack.c.b16 %v3798, %v3797
    %v3818 = vpack.c.b16 %v3800, %v3799
    %v3819 = vpack.c.b16 %v3802, %v3801
    %v3820 = vpack.c.b16 %v3804, %v3803
    %3837 = vmatprep.subr.bf16.mxu0 0
    %3838 = vmatpush1.bf16.msra.mxu0 %v3812
    %3839 = vmatprep.subr.bf16.mxu0 0
    %3840 = vmatpush1.bf16.msra.mxu0 %v3811
    %3841 = vmatprep.subr.bf16.mxu0 0
    %3842 = vmatpush1.bf16.msra.mxu0 %v3810
    %3843 = vmatprep.subr.bf16.mxu0 0
    %3844 = vmatpush1.bf16.msra.mxu0 %v3809
    %3845 = vmatprep.subr.bf16.mxu0 0
    %3846 = vmatpush1.bf16.msra.mxu0 %v3808
    %3847 = vmatprep.subr.bf16.mxu0 0
    %3848 = vmatpush1.bf16.msra.mxu0 %v3807
    %3849 = vmatprep.subr.bf16.mxu0 0
    %3850 = vmatpush1.bf16.msra.mxu0 %v3806
    %3851 = vmatprep.subr.bf16.mxu0 0
    %3852 = vmatpush1.bf16.msra.mxu0 %v3805
    %3853 = vmatprep.subr.bf16.mxu0 0
    %3854 = vmatpush2.bf16.msra.mxu0 %v3820
    %3855 = vmatprep.subr.bf16.mxu0 0
    %3856 = vmatpush2.bf16.msra.mxu0 %v3819
    %3857 = vmatprep.subr.bf16.mxu0 0
    %3858 = vmatpush2.bf16.msra.mxu0 %v3818
    %3859 = vmatprep.subr.bf16.mxu0 0
    %3860 = vmatpush2.bf16.msra.mxu0 %v3817
    %3861 = vmatprep.subr.bf16.mxu0 0
    %3862 = vmatpush2.bf16.msra.mxu0 %v3816
    %3863 = vmatprep.subr.bf16.mxu0 0
    %3864 = vmatpush2.bf16.msra.mxu0 %v3815
    %3865 = vmatprep.subr.bf16.mxu0 0
    %3866 = vmatpush2.bf16.msra.mxu0 %v3814
    %3867 = vmatprep.subr.bf16.mxu0 0
    %3868 = vmatpush2.bf16.msra.mxu0 %v3813
    %3869 = vmatprep.mubr.bf16.mxu0 %v3701
    %3870 = vmatmul.mubr.bf16.gmra.mxu0 %v3700
    %v3871 = vpop.f32.mrf.mxu0
    %v3872 = vadd.f32 %v3739, %v3871
    %v3873 = vpop.f32.mrf.mxu0
    %v3874 = vpop.f32.mrf.mxu0
    %v3875 = vadd.f32 %v3739, %v3874
    %v3876 = vpop.f32.mrf.mxu0
    %3877 = vdwg.mxu0
    %v3878 = vadd.f32 %v3511, %v3872
    %v3879 = vadd.f32 %v3512, %v3875
    %v3880 = vsel %vm2311, %v3878, 0.0
    %3881 = vadd.xlane.f32.xlu0 %v3880
    %v3882 = vpop.xlane.xlu0 %3881
    %v3883 = vsel %vm2311, %v3879, 0.0
    %3884 = vadd.xlane.f32.xlu0 %v3883
    %v3885 = vpop.xlane.xlu0 %3884
    %v3886 = vmul.f32 %v3882, %v2318
    %v3887 = vmul.f32 %v3885, %v2318
    %v3888 = vsub.f32 %v3878, %v3886
    %v3889 = vsub.f32 %v3879, %v3887
    %v3890 = vmul.f32 %v3888, %v3888
    %v3891 = vmul.f32 %v3889, %v3889
    %v3892 = vsel %vm2311, %v3890, 0.0
    %3893 = vadd.xlane.f32.xlu0 %v3892
    %v3894 = vpop.xlane.xlu0 %3893
    %v3895 = vsel %vm2311, %v3891, 0.0
    %3896 = vadd.xlane.f32.xlu0 %v3895
    %v3897 = vpop.xlane.xlu0 %3896
    %v3898 = vmul.f32 %v3894, %v2318
    %v3899 = vmul.f32 %v3897, %v2318
    %v3900 = vadd.f32 %v3898, 1e-06
    %v3901 = vadd.f32 %v3899, 1e-06
    %v3902 = vrsqrt.pop %v3900
    %v3903 = vrsqrt.pop %v3901
    %v3904 = vmul.f32 %v3888, %v3902
    %v3905 = vmul.f32 %v3889, %v3903
    %v3906 = vld [vmem:[%s33] sm:$0x1]
    %v3908 = vlaneseq
    %v3909 = vshrl.u32 %v3908, 7
    %v3910 = vsub.s32 0, %v3909
    %v3911 = vrot.slane %v3906, %v3910
    %v3913 = vmul.f32 %v3904, %v3911
    %v3914 = vmul.f32 %v3905, %v3911
    %v3915 = vld [vmem:[%s35] sm:$0x1]
    %v3917 = vlaneseq
    %v3918 = vshrl.u32 %v3917, 7
    %v3919 = vsub.s32 0, %v3918
    %v3920 = vrot.slane %v3915, %v3919
    %v3922 = vadd.f32 %v3913, %v3920
    %v3923 = vadd.f32 %v3914, %v3920
    %v3924 = vpack.c.bf16 %v3923, %v3922
    %v3925 = vld [vmem:[%s37] sm:$0xff]
    %v3926 = vld [vmem:[%s37 + $0x8] sm:$0xff]
    %v3927 = vld [vmem:[%s37 + $0x10] sm:$0xff]
    %v3928 = vld [vmem:[%s37 + $0x18] sm:$0xff]
    %v3929 = vld [vmem:[%s37 + $0x20] sm:$0xff]
    %v3930 = vld [vmem:[%s37 + $0x28] sm:$0xff]
    %v3931 = vld [vmem:[%s37 + $0x30] sm:$0xff]
    %v3932 = vld [vmem:[%s37 + $0x38] sm:$0xff]
    %v3933 = vld [vmem:[%s39] sm:$0x3]
    %v3935 = vlaneseq
    %v3936 = vshrl.u32 %v3935, 7
    %v3937 = vsub.s32 0, %v3936
    %v3938 = vrot.slane %v3933, %v3937
    %v3939 = vlaneseq
    %v3940 = vshrl.u32 %v3939, 7
    %v3941 = vsub.s32 1, %v3940
    %v3942 = vrot.slane %v3933, %v3941
    %v3953 = vunpack.c.l.b16 %v3925
    %v3954 = vunpack.c.h.b16 %v3925
    %v3955 = vunpack.c.l.b16 %v3926
    %v3956 = vunpack.c.h.b16 %v3926
    %v3957 = vunpack.c.l.b16 %v3927
    %v3958 = vunpack.c.h.b16 %v3927
    %v3959 = vunpack.c.l.b16 %v3928
    %v3960 = vunpack.c.h.b16 %v3928
    %v3961 = vunpack.c.l.b16 %v3929
    %v3962 = vunpack.c.h.b16 %v3929
    %v3963 = vunpack.c.l.b16 %v3930
    %v3964 = vunpack.c.h.b16 %v3930
    %v3965 = vunpack.c.l.b16 %v3931
    %v3966 = vunpack.c.h.b16 %v3931
    %v3967 = vunpack.c.l.b16 %v3932
    %v3968 = vunpack.c.h.b16 %v3932
    %v3969 = vpack.c.b16 %v3955, %v3953
    %v3970 = vpack.c.b16 %v3956, %v3954
    %v3971 = vpack.c.b16 %v3959, %v3957
    %v3972 = vpack.c.b16 %v3960, %v3958
    %v3973 = vpack.c.b16 %v3963, %v3961
    %v3974 = vpack.c.b16 %v3964, %v3962
    %v3975 = vpack.c.b16 %v3967, %v3965
    %v3976 = vpack.c.b16 %v3968, %v3966
    %v3986 = vsel %vm2311, %v3924, 0
    %3988 = vmatprep.subr.bf16.mxu0 0
    %3989 = vmatpush1.bf16.msra.mxu0 0
    %3990 = vmatprep.subr.bf16.mxu0 0
    %3991 = vmatpush1.bf16.msra.mxu0 0
    %3992 = vmatprep.subr.bf16.mxu0 0
    %3993 = vmatpush1.bf16.msra.mxu0 0
    %3994 = vmatprep.subr.bf16.mxu0 0
    %3995 = vmatpush1.bf16.msra.mxu0 0
    %3996 = vmatprep.subr.bf16.mxu0 %v3976
    %3997 = vmatpush1.bf16.msra.mxu0 %v3975
    %3998 = vmatprep.subr.bf16.mxu0 %v3974
    %3999 = vmatpush1.bf16.msra.mxu0 %v3973
    %4000 = vmatprep.subr.bf16.mxu0 %v3972
    %4001 = vmatpush1.bf16.msra.mxu0 %v3971
    %4002 = vmatprep.subr.bf16.mxu0 %v3970
    %4003 = vmatpush1.bf16.msra.mxu0 %v3969
    %4004 = vmatprep.subr.bf16.mxu0 0
    %4005 = vmatpush2.bf16.msra.mxu0 0
    %4006 = vmatprep.subr.bf16.mxu0 0
    %4007 = vmatpush2.bf16.msra.mxu0 0
    %4008 = vmatprep.subr.bf16.mxu0 0
    %4009 = vmatpush2.bf16.msra.mxu0 0
    %4010 = vmatprep.subr.bf16.mxu0 0
    %4011 = vmatpush2.bf16.msra.mxu0 0
    %4012 = vmatprep.subr.bf16.mxu0 0
    %4013 = vmatpush2.bf16.msra.mxu0 0
    %4014 = vmatprep.subr.bf16.mxu0 0
    %4015 = vmatpush2.bf16.msra.mxu0 0
    %4016 = vmatprep.subr.bf16.mxu0 0
    %4017 = vmatpush2.bf16.msra.mxu0 0
    %4018 = vmatprep.subr.bf16.mxu0 0
    %4019 = vmatpush2.bf16.msra.mxu0 0
    %4020 = vmatprep.mubr.bf16.mxu0 0
    %4021 = vmatmul.mubr.bf16.gmra.mxu0 %v3986
    %v4022 = vpop.f32.mrf.mxu0
    %v4023 = vadd.f32 %v3938, %v4022
    %v4024 = vpop.f32.mrf.mxu0
    %v4025 = vadd.f32 %v3942, %v4024
    %v4026 = vpop.f32.mrf.mxu0
    %v4027 = vadd.f32 %v3938, %v4026
    %v4028 = vpop.f32.mrf.mxu0
    %v4029 = vadd.f32 %v3942, %v4028
    %4030 = vdwg.mxu0
    %4032 = vrot.lane.b32.xlu0 %v4023, 112
    %v4033 = vpop.permute.xlu0 %4032
    %4035 = vrot.lane.b32.xlu0 %v4023, 96
    %v4036 = vpop.permute.xlu0 %4035
    %4038 = vrot.lane.b32.xlu0 %v4023, 80
    %v4039 = vpop.permute.xlu0 %4038
    %4042 = vrot.lane.b32.xlu0 %v4027, 112
    %v4043 = vpop.permute.xlu0 %4042
    %4045 = vrot.lane.b32.xlu0 %v4027, 96
    %v4046 = vpop.permute.xlu0 %4045
    %4048 = vrot.lane.b32.xlu0 %v4027, 80
    %v4049 = vpop.permute.xlu0 %4048
    %v4051 = vpack.c.bf16 %v4023, %v4023
    %v4052 = vpack.c.bf16 %v4033, %v4033
    %v4053 = vpack.c.bf16 %v4036, %v4036
    %v4054 = vpack.c.bf16 %v4039, %v4039
    %v4055 = vpack.c.bf16 %v4027, %v4027
    %v4056 = vpack.c.bf16 %v4043, %v4043
    %v4057 = vpack.c.bf16 %v4046, %v4046
    %v4058 = vpack.c.bf16 %v4049, %v4049
    %4060 = vrot.lane.b32.xlu0 %v4025, 112
    %v4061 = vpop.permute.xlu0 %4060
    %4063 = vrot.lane.b32.xlu0 %v4025, 96
    %v4064 = vpop.permute.xlu0 %4063
    %4066 = vrot.lane.b32.xlu0 %v4025, 80
    %v4067 = vpop.permute.xlu0 %4066
    %4070 = vrot.lane.b32.xlu0 %v4029, 112
    %v4071 = vpop.permute.xlu0 %4070
    %4073 = vrot.lane.b32.xlu0 %v4029, 96
    %v4074 = vpop.permute.xlu0 %4073
    %4076 = vrot.lane.b32.xlu0 %v4029, 80
    %v4077 = vpop.permute.xlu0 %4076
    %v4079 = vpack.c.bf16 %v4025, %v4025
    %v4080 = vpack.c.bf16 %v4061, %v4061
    %v4081 = vpack.c.bf16 %v4064, %v4064
    %v4082 = vpack.c.bf16 %v4067, %v4067
    %v4083 = vpack.c.bf16 %v4029, %v4029
    %v4084 = vpack.c.bf16 %v4071, %v4071
    %v4085 = vpack.c.bf16 %v4074, %v4074
    %v4086 = vpack.c.bf16 %v4077, %v4077
    %4088 = vrot.lane.b32.xlu0 %v4051, 64
    %v4089 = vpop.permute.xlu0 %4088
    %v4091 = vsel %vm2523, %v4051, 0
    %v4094 = vsel %vm2523, %v4089, 0
    %4096 = vmatprep.subr.bf16.mxu0 0
    %4097 = vmatpush1.bf16.xpose.msra.mxu0 0
    %4098 = vmatprep.subr.bf16.mxu0 0
    %4099 = vmatpush1.bf16.xpose.msra.mxu0 0
    %4100 = vmatprep.subr.bf16.mxu0 0
    %4101 = vmatpush1.bf16.xpose.msra.mxu0 0
    %4102 = vmatprep.subr.bf16.mxu0 0
    %4103 = vmatpush1.bf16.xpose.msra.mxu0 0
    %4104 = vmatprep.subr.bf16.mxu0 0
    %4105 = vmatpush1.bf16.xpose.msra.mxu0 0
    %4106 = vmatprep.subr.bf16.mxu0 0
    %4107 = vmatpush1.bf16.xpose.msra.mxu0 0
    %4108 = vmatprep.subr.bf16.mxu0 0
    %4109 = vmatpush1.bf16.xpose.msra.mxu0 0
    %4110 = vmatprep.subr.bf16.mxu0 0
    %4111 = vmatpush1.bf16.xpose.msra.mxu0 %v4094
    %4112 = vmatprep.subr.bf16.mxu0 0
    %4113 = vmatpush2.bf16.xpose.msra.mxu0 0
    %4114 = vmatprep.subr.bf16.mxu0 0
    %4115 = vmatpush2.bf16.xpose.msra.mxu0 0
    %4116 = vmatprep.subr.bf16.mxu0 0
    %4117 = vmatpush2.bf16.xpose.msra.mxu0 0
    %4118 = vmatprep.subr.bf16.mxu0 0
    %4119 = vmatpush2.bf16.xpose.msra.mxu0 0
    %4120 = vmatprep.subr.bf16.mxu0 0
    %4121 = vmatpush2.bf16.xpose.msra.mxu0 0
    %4122 = vmatprep.subr.bf16.mxu0 0
    %4123 = vmatpush2.bf16.xpose.msra.mxu0 0
    %4124 = vmatprep.subr.bf16.mxu0 0
    %4125 = vmatpush2.bf16.xpose.msra.mxu0 0
    %4126 = vmatprep.subr.bf16.mxu0 0
    %4127 = vmatpush2.bf16.xpose.msra.mxu0 0
    %4128 = vmatprep.mubr.bf16.mxu0 0
    %4129 = vmatmul.mubr.bf16.gmra.mxu0 %v4091
    %v4130 = vpop.f32.mrf.mxu0
    %v4131 = vadd.f32 0.0, %v4130
    %v4132 = vpop.f32.mrf.mxu0
    %v4133 = vpop.f32.mrf.mxu0
    %v4134 = vpop.f32.mrf.mxu0
    %4135 = vdwg.mxu0
    %4137 = vrot.lane.b32.xlu0 %v4052, 64
    %v4138 = vpop.permute.xlu0 %4137
    %v4140 = vsel %vm2523, %v4052, 0
    %v4143 = vsel %vm2523, %v4138, 0
    %4145 = vmatprep.subr.bf16.mxu0 0
    %4146 = vmatpush1.bf16.xpose.msra.mxu0 0
    %4147 = vmatprep.subr.bf16.mxu0 0
    %4148 = vmatpush1.bf16.xpose.msra.mxu0 0
    %4149 = vmatprep.subr.bf16.mxu0 0
    %4150 = vmatpush1.bf16.xpose.msra.mxu0 0
    %4151 = vmatprep.subr.bf16.mxu0 0
    %4152 = vmatpush1.bf16.xpose.msra.mxu0 0
    %4153 = vmatprep.subr.bf16.mxu0 0
    %4154 = vmatpush1.bf16.xpose.msra.mxu0 0
    %4155 = vmatprep.subr.bf16.mxu0 0
    %4156 = vmatpush1.bf16.xpose.msra.mxu0 0
    %4157 = vmatprep.subr.bf16.mxu0 0
    %4158 = vmatpush1.bf16.xpose.msra.mxu0 0
    %4159 = vmatprep.subr.bf16.mxu0 0
    %4160 = vmatpush1.bf16.xpose.msra.mxu0 %v4143
    %4161 = vmatprep.subr.bf16.mxu0 0
    %4162 = vmatpush2.bf16.xpose.msra.mxu0 0
    %4163 = vmatprep.subr.bf16.mxu0 0
    %4164 = vmatpush2.bf16.xpose.msra.mxu0 0
    %4165 = vmatprep.subr.bf16.mxu0 0
    %4166 = vmatpush2.bf16.xpose.msra.mxu0 0
    %4167 = vmatprep.subr.bf16.mxu0 0
    %4168 = vmatpush2.bf16.xpose.msra.mxu0 0
    %4169 = vmatprep.subr.bf16.mxu0 0
    %4170 = vmatpush2.bf16.xpose.msra.mxu0 0
    %4171 = vmatprep.subr.bf16.mxu0 0
    %4172 = vmatpush2.bf16.xpose.msra.mxu0 0
    %4173 = vmatprep.subr.bf16.mxu0 0
    %4174 = vmatpush2.bf16.xpose.msra.mxu0 0
    %4175 = vmatprep.subr.bf16.mxu0 0
    %4176 = vmatpush2.bf16.xpose.msra.mxu0 0
    %4177 = vmatprep.mubr.bf16.mxu0 0
    %4178 = vmatmul.mubr.bf16.gmra.mxu0 %v4140
    %v4179 = vpop.f32.mrf.mxu0
    %v4180 = vadd.f32 0.0, %v4179
    %v4181 = vpop.f32.mrf.mxu0
    %v4182 = vpop.f32.mrf.mxu0
    %v4183 = vpop.f32.mrf.mxu0
    %4184 = vdwg.mxu0
    %4186 = vrot.lane.b32.xlu0 %v4053, 64
    %v4187 = vpop.permute.xlu0 %4186
    %v4189 = vsel %vm2523, %v4053, 0
    %v4192 = vsel %vm2523, %v4187, 0
    %4194 = vmatprep.subr.bf16.mxu0 0
    %4195 = vmatpush1.bf16.xpose.msra.mxu0 0
    %4196 = vmatprep.subr.bf16.mxu0 0
    %4197 = vmatpush1.bf16.xpose.msra.mxu0 0
    %4198 = vmatprep.subr.bf16.mxu0 0
    %4199 = vmatpush1.bf16.xpose.msra.mxu0 0
    %4200 = vmatprep.subr.bf16.mxu0 0
    %4201 = vmatpush1.bf16.xpose.msra.mxu0 0
    %4202 = vmatprep.subr.bf16.mxu0 0
    %4203 = vmatpush1.bf16.xpose.msra.mxu0 0
    %4204 = vmatprep.subr.bf16.mxu0 0
    %4205 = vmatpush1.bf16.xpose.msra.mxu0 0
    %4206 = vmatprep.subr.bf16.mxu0 0
    %4207 = vmatpush1.bf16.xpose.msra.mxu0 0
    %4208 = vmatprep.subr.bf16.mxu0 0
    %4209 = vmatpush1.bf16.xpose.msra.mxu0 %v4192
    %4210 = vmatprep.subr.bf16.mxu0 0
    %4211 = vmatpush2.bf16.xpose.msra.mxu0 0
    %4212 = vmatprep.subr.bf16.mxu0 0
    %4213 = vmatpush2.bf16.xpose.msra.mxu0 0
    %4214 = vmatprep.subr.bf16.mxu0 0
    %4215 = vmatpush2.bf16.xpose.msra.mxu0 0
    %4216 = vmatprep.subr.bf16.mxu0 0
    %4217 = vmatpush2.bf16.xpose.msra.mxu0 0
    %4218 = vmatprep.subr.bf16.mxu0 0
    %4219 = vmatpush2.bf16.xpose.msra.mxu0 0
    %4220 = vmatprep.subr.bf16.mxu0 0
    %4221 = vmatpush2.bf16.xpose.msra.mxu0 0
    %4222 = vmatprep.subr.bf16.mxu0 0
    %4223 = vmatpush2.bf16.xpose.msra.mxu0 0
    %4224 = vmatprep.subr.bf16.mxu0 0
    %4225 = vmatpush2.bf16.xpose.msra.mxu0 0
    %4226 = vmatprep.mubr.bf16.mxu0 0
    %4227 = vmatmul.mubr.bf16.gmra.mxu0 %v4189
    %v4228 = vpop.f32.mrf.mxu0
    %v4229 = vadd.f32 0.0, %v4228
    %v4230 = vpop.f32.mrf.mxu0
    %v4231 = vpop.f32.mrf.mxu0
    %v4232 = vpop.f32.mrf.mxu0
    %4233 = vdwg.mxu0
    %4235 = vrot.lane.b32.xlu0 %v4054, 64
    %v4236 = vpop.permute.xlu0 %4235
    %v4238 = vsel %vm2523, %v4054, 0
    %v4241 = vsel %vm2523, %v4236, 0
    %4243 = vmatprep.subr.bf16.mxu0 0
    %4244 = vmatpush1.bf16.xpose.msra.mxu0 0
    %4245 = vmatprep.subr.bf16.mxu0 0
    %4246 = vmatpush1.bf16.xpose.msra.mxu0 0
    %4247 = vmatprep.subr.bf16.mxu0 0
    %4248 = vmatpush1.bf16.xpose.msra.mxu0 0
    %4249 = vmatprep.subr.bf16.mxu0 0
    %4250 = vmatpush1.bf16.xpose.msra.mxu0 0
    %4251 = vmatprep.subr.bf16.mxu0 0
    %4252 = vmatpush1.bf16.xpose.msra.mxu0 0
    %4253 = vmatprep.subr.bf16.mxu0 0
    %4254 = vmatpush1.bf16.xpose.msra.mxu0 0
    %4255 = vmatprep.subr.bf16.mxu0 0
    %4256 = vmatpush1.bf16.xpose.msra.mxu0 0
    %4257 = vmatprep.subr.bf16.mxu0 0
    %4258 = vmatpush1.bf16.xpose.msra.mxu0 %v4241
    %4259 = vmatprep.subr.bf16.mxu0 0
    %4260 = vmatpush2.bf16.xpose.msra.mxu0 0
    %4261 = vmatprep.subr.bf16.mxu0 0
    %4262 = vmatpush2.bf16.xpose.msra.mxu0 0
    %4263 = vmatprep.subr.bf16.mxu0 0
    %4264 = vmatpush2.bf16.xpose.msra.mxu0 0
    %4265 = vmatprep.subr.bf16.mxu0 0
    %4266 = vmatpush2.bf16.xpose.msra.mxu0 0
    %4267 = vmatprep.subr.bf16.mxu0 0
    %4268 = vmatpush2.bf16.xpose.msra.mxu0 0
    %4269 = vmatprep.subr.bf16.mxu0 0
    %4270 = vmatpush2.bf16.xpose.msra.mxu0 0
    %4271 = vmatprep.subr.bf16.mxu0 0
    %4272 = vmatpush2.bf16.xpose.msra.mxu0 0
    %4273 = vmatprep.subr.bf16.mxu0 0
    %4274 = vmatpush2.bf16.xpose.msra.mxu0 0
    %4275 = vmatprep.mubr.bf16.mxu0 0
    %4276 = vmatmul.mubr.bf16.gmra.mxu0 %v4238
    %v4277 = vpop.f32.mrf.mxu0
    %v4278 = vadd.f32 0.0, %v4277
    %v4279 = vpop.f32.mrf.mxu0
    %v4280 = vpop.f32.mrf.mxu0
    %v4281 = vpop.f32.mrf.mxu0
    %4282 = vdwg.mxu0
    %4284 = vrot.lane.b32.xlu0 %v4055, 64
    %v4285 = vpop.permute.xlu0 %4284
    %v4287 = vsel %vm2523, %v4055, 0
    %v4290 = vsel %vm2523, %v4285, 0
    %4292 = vmatprep.subr.bf16.mxu0 0
    %4293 = vmatpush1.bf16.xpose.msra.mxu0 0
    %4294 = vmatprep.subr.bf16.mxu0 0
    %4295 = vmatpush1.bf16.xpose.msra.mxu0 0
    %4296 = vmatprep.subr.bf16.mxu0 0
    %4297 = vmatpush1.bf16.xpose.msra.mxu0 0
    %4298 = vmatprep.subr.bf16.mxu0 0
    %4299 = vmatpush1.bf16.xpose.msra.mxu0 0
    %4300 = vmatprep.subr.bf16.mxu0 0
    %4301 = vmatpush1.bf16.xpose.msra.mxu0 0
    %4302 = vmatprep.subr.bf16.mxu0 0
    %4303 = vmatpush1.bf16.xpose.msra.mxu0 0
    %4304 = vmatprep.subr.bf16.mxu0 0
    %4305 = vmatpush1.bf16.xpose.msra.mxu0 0
    %4306 = vmatprep.subr.bf16.mxu0 0
    %4307 = vmatpush1.bf16.xpose.msra.mxu0 %v4290
    %4308 = vmatprep.subr.bf16.mxu0 0
    %4309 = vmatpush2.bf16.xpose.msra.mxu0 0
    %4310 = vmatprep.subr.bf16.mxu0 0
    %4311 = vmatpush2.bf16.xpose.msra.mxu0 0
    %4312 = vmatprep.subr.bf16.mxu0 0
    %4313 = vmatpush2.bf16.xpose.msra.mxu0 0
    %4314 = vmatprep.subr.bf16.mxu0 0
    %4315 = vmatpush2.bf16.xpose.msra.mxu0 0
    %4316 = vmatprep.subr.bf16.mxu0 0
    %4317 = vmatpush2.bf16.xpose.msra.mxu0 0
    %4318 = vmatprep.subr.bf16.mxu0 0
    %4319 = vmatpush2.bf16.xpose.msra.mxu0 0
    %4320 = vmatprep.subr.bf16.mxu0 0
    %4321 = vmatpush2.bf16.xpose.msra.mxu0 0
    %4322 = vmatprep.subr.bf16.mxu0 0
    %4323 = vmatpush2.bf16.xpose.msra.mxu0 0
    %4324 = vmatprep.mubr.bf16.mxu0 0
    %4325 = vmatmul.mubr.bf16.gmra.mxu0 %v4287
    %v4326 = vpop.f32.mrf.mxu0
    %v4327 = vadd.f32 0.0, %v4326
    %v4328 = vpop.f32.mrf.mxu0
    %v4329 = vpop.f32.mrf.mxu0
    %v4330 = vpop.f32.mrf.mxu0
    %4331 = vdwg.mxu0
    %4333 = vrot.lane.b32.xlu0 %v4056, 64
    %v4334 = vpop.permute.xlu0 %4333
    %v4336 = vsel %vm2523, %v4056, 0
    %v4339 = vsel %vm2523, %v4334, 0
    %4341 = vmatprep.subr.bf16.mxu0 0
    %4342 = vmatpush1.bf16.xpose.msra.mxu0 0
    %4343 = vmatprep.subr.bf16.mxu0 0
    %4344 = vmatpush1.bf16.xpose.msra.mxu0 0
    %4345 = vmatprep.subr.bf16.mxu0 0
    %4346 = vmatpush1.bf16.xpose.msra.mxu0 0
    %4347 = vmatprep.subr.bf16.mxu0 0
    %4348 = vmatpush1.bf16.xpose.msra.mxu0 0
    %4349 = vmatprep.subr.bf16.mxu0 0
    %4350 = vmatpush1.bf16.xpose.msra.mxu0 0
    %4351 = vmatprep.subr.bf16.mxu0 0
    %4352 = vmatpush1.bf16.xpose.msra.mxu0 0
    %4353 = vmatprep.subr.bf16.mxu0 0
    %4354 = vmatpush1.bf16.xpose.msra.mxu0 0
    %4355 = vmatprep.subr.bf16.mxu0 0
    %4356 = vmatpush1.bf16.xpose.msra.mxu0 %v4339
    %4357 = vmatprep.subr.bf16.mxu0 0
    %4358 = vmatpush2.bf16.xpose.msra.mxu0 0
    %4359 = vmatprep.subr.bf16.mxu0 0
    %4360 = vmatpush2.bf16.xpose.msra.mxu0 0
    %4361 = vmatprep.subr.bf16.mxu0 0
    %4362 = vmatpush2.bf16.xpose.msra.mxu0 0
    %4363 = vmatprep.subr.bf16.mxu0 0
    %4364 = vmatpush2.bf16.xpose.msra.mxu0 0
    %4365 = vmatprep.subr.bf16.mxu0 0
    %4366 = vmatpush2.bf16.xpose.msra.mxu0 0
    %4367 = vmatprep.subr.bf16.mxu0 0
    %4368 = vmatpush2.bf16.xpose.msra.mxu0 0
    %4369 = vmatprep.subr.bf16.mxu0 0
    %4370 = vmatpush2.bf16.xpose.msra.mxu0 0
    %4371 = vmatprep.subr.bf16.mxu0 0
    %4372 = vmatpush2.bf16.xpose.msra.mxu0 0
    %4373 = vmatprep.mubr.bf16.mxu0 0
    %4374 = vmatmul.mubr.bf16.gmra.mxu0 %v4336
    %v4375 = vpop.f32.mrf.mxu0
    %v4376 = vadd.f32 0.0, %v4375
    %v4377 = vpop.f32.mrf.mxu0
    %v4378 = vpop.f32.mrf.mxu0
    %v4379 = vpop.f32.mrf.mxu0
    %4380 = vdwg.mxu0
    %4382 = vrot.lane.b32.xlu0 %v4057, 64
    %v4383 = vpop.permute.xlu0 %4382
    %v4385 = vsel %vm2523, %v4057, 0
    %v4388 = vsel %vm2523, %v4383, 0
    %4390 = vmatprep.subr.bf16.mxu0 0
    %4391 = vmatpush1.bf16.xpose.msra.mxu0 0
    %4392 = vmatprep.subr.bf16.mxu0 0
    %4393 = vmatpush1.bf16.xpose.msra.mxu0 0
    %4394 = vmatprep.subr.bf16.mxu0 0
    %4395 = vmatpush1.bf16.xpose.msra.mxu0 0
    %4396 = vmatprep.subr.bf16.mxu0 0
    %4397 = vmatpush1.bf16.xpose.msra.mxu0 0
    %4398 = vmatprep.subr.bf16.mxu0 0
    %4399 = vmatpush1.bf16.xpose.msra.mxu0 0
    %4400 = vmatprep.subr.bf16.mxu0 0
    %4401 = vmatpush1.bf16.xpose.msra.mxu0 0
    %4402 = vmatprep.subr.bf16.mxu0 0
    %4403 = vmatpush1.bf16.xpose.msra.mxu0 0
    %4404 = vmatprep.subr.bf16.mxu0 0
    %4405 = vmatpush1.bf16.xpose.msra.mxu0 %v4388
    %4406 = vmatprep.subr.bf16.mxu0 0
    %4407 = vmatpush2.bf16.xpose.msra.mxu0 0
    %4408 = vmatprep.subr.bf16.mxu0 0
    %4409 = vmatpush2.bf16.xpose.msra.mxu0 0
    %4410 = vmatprep.subr.bf16.mxu0 0
    %4411 = vmatpush2.bf16.xpose.msra.mxu0 0
    %4412 = vmatprep.subr.bf16.mxu0 0
    %4413 = vmatpush2.bf16.xpose.msra.mxu0 0
    %4414 = vmatprep.subr.bf16.mxu0 0
    %4415 = vmatpush2.bf16.xpose.msra.mxu0 0
    %4416 = vmatprep.subr.bf16.mxu0 0
    %4417 = vmatpush2.bf16.xpose.msra.mxu0 0
    %4418 = vmatprep.subr.bf16.mxu0 0
    %4419 = vmatpush2.bf16.xpose.msra.mxu0 0
    %4420 = vmatprep.subr.bf16.mxu0 0
    %4421 = vmatpush2.bf16.xpose.msra.mxu0 0
    %4422 = vmatprep.mubr.bf16.mxu0 0
    %4423 = vmatmul.mubr.bf16.gmra.mxu0 %v4385
    %v4424 = vpop.f32.mrf.mxu0
    %v4425 = vadd.f32 0.0, %v4424
    %v4426 = vpop.f32.mrf.mxu0
    %v4427 = vpop.f32.mrf.mxu0
    %v4428 = vpop.f32.mrf.mxu0
    %4429 = vdwg.mxu0
    %4431 = vrot.lane.b32.xlu0 %v4058, 64
    %v4432 = vpop.permute.xlu0 %4431
    %v4434 = vsel %vm2523, %v4058, 0
    %v4437 = vsel %vm2523, %v4432, 0
    %4439 = vmatprep.subr.bf16.mxu0 0
    %4440 = vmatpush1.bf16.xpose.msra.mxu0 0
    %4441 = vmatprep.subr.bf16.mxu0 0
    %4442 = vmatpush1.bf16.xpose.msra.mxu0 0
    %4443 = vmatprep.subr.bf16.mxu0 0
    %4444 = vmatpush1.bf16.xpose.msra.mxu0 0
    %4445 = vmatprep.subr.bf16.mxu0 0
    %4446 = vmatpush1.bf16.xpose.msra.mxu0 0
    %4447 = vmatprep.subr.bf16.mxu0 0
    %4448 = vmatpush1.bf16.xpose.msra.mxu0 0
    %4449 = vmatprep.subr.bf16.mxu0 0
    %4450 = vmatpush1.bf16.xpose.msra.mxu0 0
    %4451 = vmatprep.subr.bf16.mxu0 0
    %4452 = vmatpush1.bf16.xpose.msra.mxu0 0
    %4453 = vmatprep.subr.bf16.mxu0 0
    %4454 = vmatpush1.bf16.xpose.msra.mxu0 %v4437
    %4455 = vmatprep.subr.bf16.mxu0 0
    %4456 = vmatpush2.bf16.xpose.msra.mxu0 0
    %4457 = vmatprep.subr.bf16.mxu0 0
    %4458 = vmatpush2.bf16.xpose.msra.mxu0 0
    %4459 = vmatprep.subr.bf16.mxu0 0
    %4460 = vmatpush2.bf16.xpose.msra.mxu0 0
    %4461 = vmatprep.subr.bf16.mxu0 0
    %4462 = vmatpush2.bf16.xpose.msra.mxu0 0
    %4463 = vmatprep.subr.bf16.mxu0 0
    %4464 = vmatpush2.bf16.xpose.msra.mxu0 0
    %4465 = vmatprep.subr.bf16.mxu0 0
    %4466 = vmatpush2.bf16.xpose.msra.mxu0 0
    %4467 = vmatprep.subr.bf16.mxu0 0
    %4468 = vmatpush2.bf16.xpose.msra.mxu0 0
    %4469 = vmatprep.subr.bf16.mxu0 0
    %4470 = vmatpush2.bf16.xpose.msra.mxu0 0
    %4471 = vmatprep.mubr.bf16.mxu0 0
    %4472 = vmatmul.mubr.bf16.gmra.mxu0 %v4434
    %v4473 = vpop.f32.mrf.mxu0
    %v4474 = vadd.f32 0.0, %v4473
    %v4475 = vpop.f32.mrf.mxu0
    %v4476 = vpop.f32.mrf.mxu0
    %v4477 = vpop.f32.mrf.mxu0
    %4478 = vdwg.mxu0
    %v4479 = vmul.f32 %v4131, 0.25
    %v4480 = vmul.f32 %v4180, 0.25
    %v4481 = vmul.f32 %v4229, 0.25
    %v4482 = vmul.f32 %v4278, 0.25
    %v4483 = vmul.f32 %v4327, 0.25
    %v4484 = vmul.f32 %v4376, 0.25
    %v4485 = vmul.f32 %v4425, 0.25
    %v4486 = vmul.f32 %v4474, 0.25
    %v4487 = vadd.f32 %v4479, %v2310
    %v4488 = vadd.f32 %v4480, %v2310
    %v4489 = vadd.f32 %v4481, %v2310
    %v4490 = vadd.f32 %v4482, %v2310
    %v4491 = vadd.f32 %v4483, %v2310
    %v4492 = vadd.f32 %v4484, %v2310
    %v4493 = vadd.f32 %v4485, %v2310
    %v4494 = vadd.f32 %v4486, %v2310
    %v4495 = vsel %vm2929, %v4487, -inf
    %4496 = vmax.xlane.f32.xlu0 %v4495
    %v4497 = vpop.xlane.xlu0 %4496
    %v4498 = vsel %vm2929, %v4488, -inf
    %4499 = vmax.xlane.f32.xlu0 %v4498
    %v4500 = vpop.xlane.xlu0 %4499
    %v4501 = vsel %vm2929, %v4489, -inf
    %4502 = vmax.xlane.f32.xlu0 %v4501
    %v4503 = vpop.xlane.xlu0 %4502
    %v4504 = vsel %vm2929, %v4490, -inf
    %4505 = vmax.xlane.f32.xlu0 %v4504
    %v4506 = vpop.xlane.xlu0 %4505
    %v4507 = vsel %vm2929, %v4491, -inf
    %4508 = vmax.xlane.f32.xlu0 %v4507
    %v4509 = vpop.xlane.xlu0 %4508
    %v4510 = vsel %vm2929, %v4492, -inf
    %4511 = vmax.xlane.f32.xlu0 %v4510
    %v4512 = vpop.xlane.xlu0 %4511
    %v4513 = vsel %vm2929, %v4493, -inf
    %4514 = vmax.xlane.f32.xlu0 %v4513
    %v4515 = vpop.xlane.xlu0 %4514
    %v4516 = vsel %vm2929, %v4494, -inf
    %4517 = vmax.xlane.f32.xlu0 %v4516
    %v4518 = vpop.xlane.xlu0 %4517
    %v4519 = vsub.f32 %v4487, %v4497
    %v4520 = vsub.f32 %v4488, %v4500
    %v4521 = vsub.f32 %v4489, %v4503
    %v4522 = vsub.f32 %v4490, %v4506
    %v4523 = vsub.f32 %v4491, %v4509
    %v4524 = vsub.f32 %v4492, %v4512
    %v4525 = vsub.f32 %v4493, %v4515
    %v4526 = vsub.f32 %v4494, %v4518
    %v4527 = vmul.f32 %v4519, 1.442695
    %v4528 = vpow.pop %v4527
    %v4529 = vmul.f32 %v4520, 1.442695
    %v4530 = vpow.pop %v4529
    %v4531 = vmul.f32 %v4521, 1.442695
    %v4532 = vpow.pop %v4531
    %v4533 = vmul.f32 %v4522, 1.442695
    %v4534 = vpow.pop %v4533
    %v4535 = vmul.f32 %v4523, 1.442695
    %v4536 = vpow.pop %v4535
    %v4537 = vmul.f32 %v4524, 1.442695
    %v4538 = vpow.pop %v4537
    %v4539 = vmul.f32 %v4525, 1.442695
    %v4540 = vpow.pop %v4539
    %v4541 = vmul.f32 %v4526, 1.442695
    %v4542 = vpow.pop %v4541
    %v4543 = vsel %vm2929, %v4528, 0.0
    %4544 = vadd.xlane.f32.xlu0 %v4543
    %v4545 = vpop.xlane.xlu0 %4544
    %v4546 = vsel %vm2929, %v4530, 0.0
    %4547 = vadd.xlane.f32.xlu0 %v4546
    %v4548 = vpop.xlane.xlu0 %4547
    %v4549 = vsel %vm2929, %v4532, 0.0
    %4550 = vadd.xlane.f32.xlu0 %v4549
    %v4551 = vpop.xlane.xlu0 %4550
    %v4552 = vsel %vm2929, %v4534, 0.0
    %4553 = vadd.xlane.f32.xlu0 %v4552
    %v4554 = vpop.xlane.xlu0 %4553
    %v4555 = vsel %vm2929, %v4536, 0.0
    %4556 = vadd.xlane.f32.xlu0 %v4555
    %v4557 = vpop.xlane.xlu0 %4556
    %v4558 = vsel %vm2929, %v4538, 0.0
    %4559 = vadd.xlane.f32.xlu0 %v4558
    %v4560 = vpop.xlane.xlu0 %4559
    %v4561 = vsel %vm2929, %v4540, 0.0
    %4562 = vadd.xlane.f32.xlu0 %v4561
    %v4563 = vpop.xlane.xlu0 %4562
    %v4564 = vsel %vm2929, %v4542, 0.0
    %4565 = vadd.xlane.f32.xlu0 %v4564
    %v4566 = vpop.xlane.xlu0 %4565
    %v4567 = vrcp.pop %v4545
    %v4568 = vrcp.pop %v4548
    %v4569 = vrcp.pop %v4551
    %v4570 = vrcp.pop %v4554
    %v4571 = vrcp.pop %v4557
    %v4572 = vrcp.pop %v4560
    %v4573 = vrcp.pop %v4563
    %v4574 = vrcp.pop %v4566
    %v4575 = vmul.f32 %v4528, %v4567
    %v4576 = vmul.f32 %v4530, %v4568
    %v4577 = vmul.f32 %v4532, %v4569
    %v4578 = vmul.f32 %v4534, %v4570
    %v4579 = vmul.f32 %v4536, %v4571
    %v4580 = vmul.f32 %v4538, %v4572
    %v4581 = vmul.f32 %v4540, %v4573
    %v4582 = vmul.f32 %v4542, %v4574
    %v4583 = vpack.c.bf16 %v4575, %v4575
    %v4584 = vpack.c.bf16 %v4576, %v4576
    %v4585 = vpack.c.bf16 %v4577, %v4577
    %v4586 = vpack.c.bf16 %v4578, %v4578
    %v4587 = vpack.c.bf16 %v4579, %v4579
    %v4588 = vpack.c.bf16 %v4580, %v4580
    %v4589 = vpack.c.bf16 %v4581, %v4581
    %v4590 = vpack.c.bf16 %v4582, %v4582
    %v4592 = vsel %vm2929, %v4583, 0
    %v4595 = vsel %vm3029, %v4079, 0
    %4597 = vmatprep.subr.bf16.mxu0 0
    %4598 = vmatpush1.bf16.msra.mxu0 0
    %4599 = vmatprep.subr.bf16.mxu0 0
    %4600 = vmatpush1.bf16.msra.mxu0 0
    %4601 = vmatprep.subr.bf16.mxu0 0
    %4602 = vmatpush1.bf16.msra.mxu0 0
    %4603 = vmatprep.subr.bf16.mxu0 0
    %4604 = vmatpush1.bf16.msra.mxu0 0
    %4605 = vmatprep.subr.bf16.mxu0 0
    %4606 = vmatpush1.bf16.msra.mxu0 0
    %4607 = vmatprep.subr.bf16.mxu0 0
    %4608 = vmatpush1.bf16.msra.mxu0 0
    %4609 = vmatprep.subr.bf16.mxu0 0
    %4610 = vmatpush1.bf16.msra.mxu0 0
    %4611 = vmatprep.subr.bf16.mxu0 0
    %4612 = vmatpush1.bf16.msra.mxu0 %v4595
    %4613 = vmatprep.subr.bf16.mxu0 0
    %4614 = vmatpush2.bf16.msra.mxu0 0
    %4615 = vmatprep.subr.bf16.mxu0 0
    %4616 = vmatpush2.bf16.msra.mxu0 0
    %4617 = vmatprep.subr.bf16.mxu0 0
    %4618 = vmatpush2.bf16.msra.mxu0 0
    %4619 = vmatprep.subr.bf16.mxu0 0
    %4620 = vmatpush2.bf16.msra.mxu0 0
    %4621 = vmatprep.subr.bf16.mxu0 0
    %4622 = vmatpush2.bf16.msra.mxu0 0
    %4623 = vmatprep.subr.bf16.mxu0 0
    %4624 = vmatpush2.bf16.msra.mxu0 0
    %4625 = vmatprep.subr.bf16.mxu0 0
    %4626 = vmatpush2.bf16.msra.mxu0 0
    %4627 = vmatprep.subr.bf16.mxu0 0
    %4628 = vmatpush2.bf16.msra.mxu0 0
    %4629 = vmatprep.mubr.bf16.mxu0 0
    %4630 = vmatmul.mubr.bf16.gmra.mxu0 %v4592
    %v4631 = vpop.f32.mrf.mxu0
    %v4632 = vadd.f32 0.0, %v4631
    %v4633 = vpop.f32.mrf.mxu0
    %v4634 = vpop.f32.mrf.mxu0
    %v4635 = vpop.f32.mrf.mxu0
    %4636 = vdwg.mxu0
    %v4638 = vsel %vm2929, %v4584, 0
    %v4641 = vsel %vm3029, %v4080, 0
    %4643 = vmatprep.subr.bf16.mxu0 0
    %4644 = vmatpush1.bf16.msra.mxu0 0
    %4645 = vmatprep.subr.bf16.mxu0 0
    %4646 = vmatpush1.bf16.msra.mxu0 0
    %4647 = vmatprep.subr.bf16.mxu0 0
    %4648 = vmatpush1.bf16.msra.mxu0 0
    %4649 = vmatprep.subr.bf16.mxu0 0
    %4650 = vmatpush1.bf16.msra.mxu0 0
    %4651 = vmatprep.subr.bf16.mxu0 0
    %4652 = vmatpush1.bf16.msra.mxu0 0
    %4653 = vmatprep.subr.bf16.mxu0 0
    %4654 = vmatpush1.bf16.msra.mxu0 0
    %4655 = vmatprep.subr.bf16.mxu0 0
    %4656 = vmatpush1.bf16.msra.mxu0 0
    %4657 = vmatprep.subr.bf16.mxu0 0
    %4658 = vmatpush1.bf16.msra.mxu0 %v4641
    %4659 = vmatprep.subr.bf16.mxu0 0
    %4660 = vmatpush2.bf16.msra.mxu0 0
    %4661 = vmatprep.subr.bf16.mxu0 0
    %4662 = vmatpush2.bf16.msra.mxu0 0
    %4663 = vmatprep.subr.bf16.mxu0 0
    %4664 = vmatpush2.bf16.msra.mxu0 0
    %4665 = vmatprep.subr.bf16.mxu0 0
    %4666 = vmatpush2.bf16.msra.mxu0 0
    %4667 = vmatprep.subr.bf16.mxu0 0
    %4668 = vmatpush2.bf16.msra.mxu0 0
    %4669 = vmatprep.subr.bf16.mxu0 0
    %4670 = vmatpush2.bf16.msra.mxu0 0
    %4671 = vmatprep.subr.bf16.mxu0 0
    %4672 = vmatpush2.bf16.msra.mxu0 0
    %4673 = vmatprep.subr.bf16.mxu0 0
    %4674 = vmatpush2.bf16.msra.mxu0 0
    %4675 = vmatprep.mubr.bf16.mxu0 0
    %4676 = vmatmul.mubr.bf16.gmra.mxu0 %v4638
    %v4677 = vpop.f32.mrf.mxu0
    %v4678 = vadd.f32 0.0, %v4677
    %v4679 = vpop.f32.mrf.mxu0
    %v4680 = vpop.f32.mrf.mxu0
    %v4681 = vpop.f32.mrf.mxu0
    %4682 = vdwg.mxu0
    %v4684 = vsel %vm2929, %v4585, 0
    %v4687 = vsel %vm3029, %v4081, 0
    %4689 = vmatprep.subr.bf16.mxu0 0
    %4690 = vmatpush1.bf16.msra.mxu0 0
    %4691 = vmatprep.subr.bf16.mxu0 0
    %4692 = vmatpush1.bf16.msra.mxu0 0
    %4693 = vmatprep.subr.bf16.mxu0 0
    %4694 = vmatpush1.bf16.msra.mxu0 0
    %4695 = vmatprep.subr.bf16.mxu0 0
    %4696 = vmatpush1.bf16.msra.mxu0 0
    %4697 = vmatprep.subr.bf16.mxu0 0
    %4698 = vmatpush1.bf16.msra.mxu0 0
    %4699 = vmatprep.subr.bf16.mxu0 0
    %4700 = vmatpush1.bf16.msra.mxu0 0
    %4701 = vmatprep.subr.bf16.mxu0 0
    %4702 = vmatpush1.bf16.msra.mxu0 0
    %4703 = vmatprep.subr.bf16.mxu0 0
    %4704 = vmatpush1.bf16.msra.mxu0 %v4687
    %4705 = vmatprep.subr.bf16.mxu0 0
    %4706 = vmatpush2.bf16.msra.mxu0 0
    %4707 = vmatprep.subr.bf16.mxu0 0
    %4708 = vmatpush2.bf16.msra.mxu0 0
    %4709 = vmatprep.subr.bf16.mxu0 0
    %4710 = vmatpush2.bf16.msra.mxu0 0
    %4711 = vmatprep.subr.bf16.mxu0 0
    %4712 = vmatpush2.bf16.msra.mxu0 0
    %4713 = vmatprep.subr.bf16.mxu0 0
    %4714 = vmatpush2.bf16.msra.mxu0 0
    %4715 = vmatprep.subr.bf16.mxu0 0
    %4716 = vmatpush2.bf16.msra.mxu0 0
    %4717 = vmatprep.subr.bf16.mxu0 0
    %4718 = vmatpush2.bf16.msra.mxu0 0
    %4719 = vmatprep.subr.bf16.mxu0 0
    %4720 = vmatpush2.bf16.msra.mxu0 0
    %4721 = vmatprep.mubr.bf16.mxu0 0
    %4722 = vmatmul.mubr.bf16.gmra.mxu0 %v4684
    %v4723 = vpop.f32.mrf.mxu0
    %v4724 = vadd.f32 0.0, %v4723
    %v4725 = vpop.f32.mrf.mxu0
    %v4726 = vpop.f32.mrf.mxu0
    %v4727 = vpop.f32.mrf.mxu0
    %4728 = vdwg.mxu0
    %v4730 = vsel %vm2929, %v4586, 0
    %v4733 = vsel %vm3029, %v4082, 0
    %4735 = vmatprep.subr.bf16.mxu0 0
    %4736 = vmatpush1.bf16.msra.mxu0 0
    %4737 = vmatprep.subr.bf16.mxu0 0
    %4738 = vmatpush1.bf16.msra.mxu0 0
    %4739 = vmatprep.subr.bf16.mxu0 0
    %4740 = vmatpush1.bf16.msra.mxu0 0
    %4741 = vmatprep.subr.bf16.mxu0 0
    %4742 = vmatpush1.bf16.msra.mxu0 0
    %4743 = vmatprep.subr.bf16.mxu0 0
    %4744 = vmatpush1.bf16.msra.mxu0 0
    %4745 = vmatprep.subr.bf16.mxu0 0
    %4746 = vmatpush1.bf16.msra.mxu0 0
    %4747 = vmatprep.subr.bf16.mxu0 0
    %4748 = vmatpush1.bf16.msra.mxu0 0
    %4749 = vmatprep.subr.bf16.mxu0 0
    %4750 = vmatpush1.bf16.msra.mxu0 %v4733
    %4751 = vmatprep.subr.bf16.mxu0 0
    %4752 = vmatpush2.bf16.msra.mxu0 0
    %4753 = vmatprep.subr.bf16.mxu0 0
    %4754 = vmatpush2.bf16.msra.mxu0 0
    %4755 = vmatprep.subr.bf16.mxu0 0
    %4756 = vmatpush2.bf16.msra.mxu0 0
    %4757 = vmatprep.subr.bf16.mxu0 0
    %4758 = vmatpush2.bf16.msra.mxu0 0
    %4759 = vmatprep.subr.bf16.mxu0 0
    %4760 = vmatpush2.bf16.msra.mxu0 0
    %4761 = vmatprep.subr.bf16.mxu0 0
    %4762 = vmatpush2.bf16.msra.mxu0 0
    %4763 = vmatprep.subr.bf16.mxu0 0
    %4764 = vmatpush2.bf16.msra.mxu0 0
    %4765 = vmatprep.subr.bf16.mxu0 0
    %4766 = vmatpush2.bf16.msra.mxu0 0
    %4767 = vmatprep.mubr.bf16.mxu0 0
    %4768 = vmatmul.mubr.bf16.gmra.mxu0 %v4730
    %v4769 = vpop.f32.mrf.mxu0
    %v4770 = vadd.f32 0.0, %v4769
    %v4771 = vpop.f32.mrf.mxu0
    %v4772 = vpop.f32.mrf.mxu0
    %v4773 = vpop.f32.mrf.mxu0
    %4774 = vdwg.mxu0
    %v4776 = vsel %vm2929, %v4587, 0
    %v4779 = vsel %vm3029, %v4083, 0
    %4781 = vmatprep.subr.bf16.mxu0 0
    %4782 = vmatpush1.bf16.msra.mxu0 0
    %4783 = vmatprep.subr.bf16.mxu0 0
    %4784 = vmatpush1.bf16.msra.mxu0 0
    %4785 = vmatprep.subr.bf16.mxu0 0
    %4786 = vmatpush1.bf16.msra.mxu0 0
    %4787 = vmatprep.subr.bf16.mxu0 0
    %4788 = vmatpush1.bf16.msra.mxu0 0
    %4789 = vmatprep.subr.bf16.mxu0 0
    %4790 = vmatpush1.bf16.msra.mxu0 0
    %4791 = vmatprep.subr.bf16.mxu0 0
    %4792 = vmatpush1.bf16.msra.mxu0 0
    %4793 = vmatprep.subr.bf16.mxu0 0
    %4794 = vmatpush1.bf16.msra.mxu0 0
    %4795 = vmatprep.subr.bf16.mxu0 0
    %4796 = vmatpush1.bf16.msra.mxu0 %v4779
    %4797 = vmatprep.subr.bf16.mxu0 0
    %4798 = vmatpush2.bf16.msra.mxu0 0
    %4799 = vmatprep.subr.bf16.mxu0 0
    %4800 = vmatpush2.bf16.msra.mxu0 0
    %4801 = vmatprep.subr.bf16.mxu0 0
    %4802 = vmatpush2.bf16.msra.mxu0 0
    %4803 = vmatprep.subr.bf16.mxu0 0
    %4804 = vmatpush2.bf16.msra.mxu0 0
    %4805 = vmatprep.subr.bf16.mxu0 0
    %4806 = vmatpush2.bf16.msra.mxu0 0
    %4807 = vmatprep.subr.bf16.mxu0 0
    %4808 = vmatpush2.bf16.msra.mxu0 0
    %4809 = vmatprep.subr.bf16.mxu0 0
    %4810 = vmatpush2.bf16.msra.mxu0 0
    %4811 = vmatprep.subr.bf16.mxu0 0
    %4812 = vmatpush2.bf16.msra.mxu0 0
    %4813 = vmatprep.mubr.bf16.mxu0 0
    %4814 = vmatmul.mubr.bf16.gmra.mxu0 %v4776
    %v4815 = vpop.f32.mrf.mxu0
    %v4816 = vadd.f32 0.0, %v4815
    %v4817 = vpop.f32.mrf.mxu0
    %v4818 = vpop.f32.mrf.mxu0
    %v4819 = vpop.f32.mrf.mxu0
    %4820 = vdwg.mxu0
    %v4822 = vsel %vm2929, %v4588, 0
    %v4825 = vsel %vm3029, %v4084, 0
    %4827 = vmatprep.subr.bf16.mxu0 0
    %4828 = vmatpush1.bf16.msra.mxu0 0
    %4829 = vmatprep.subr.bf16.mxu0 0
    %4830 = vmatpush1.bf16.msra.mxu0 0
    %4831 = vmatprep.subr.bf16.mxu0 0
    %4832 = vmatpush1.bf16.msra.mxu0 0
    %4833 = vmatprep.subr.bf16.mxu0 0
    %4834 = vmatpush1.bf16.msra.mxu0 0
    %4835 = vmatprep.subr.bf16.mxu0 0
    %4836 = vmatpush1.bf16.msra.mxu0 0
    %4837 = vmatprep.subr.bf16.mxu0 0
    %4838 = vmatpush1.bf16.msra.mxu0 0
    %4839 = vmatprep.subr.bf16.mxu0 0
    %4840 = vmatpush1.bf16.msra.mxu0 0
    %4841 = vmatprep.subr.bf16.mxu0 0
    %4842 = vmatpush1.bf16.msra.mxu0 %v4825
    %4843 = vmatprep.subr.bf16.mxu0 0
    %4844 = vmatpush2.bf16.msra.mxu0 0
    %4845 = vmatprep.subr.bf16.mxu0 0
    %4846 = vmatpush2.bf16.msra.mxu0 0
    %4847 = vmatprep.subr.bf16.mxu0 0
    %4848 = vmatpush2.bf16.msra.mxu0 0
    %4849 = vmatprep.subr.bf16.mxu0 0
    %4850 = vmatpush2.bf16.msra.mxu0 0
    %4851 = vmatprep.subr.bf16.mxu0 0
    %4852 = vmatpush2.bf16.msra.mxu0 0
    %4853 = vmatprep.subr.bf16.mxu0 0
    %4854 = vmatpush2.bf16.msra.mxu0 0
    %4855 = vmatprep.subr.bf16.mxu0 0
    %4856 = vmatpush2.bf16.msra.mxu0 0
    %4857 = vmatprep.subr.bf16.mxu0 0
    %4858 = vmatpush2.bf16.msra.mxu0 0
    %4859 = vmatprep.mubr.bf16.mxu0 0
    %4860 = vmatmul.mubr.bf16.gmra.mxu0 %v4822
    %v4861 = vpop.f32.mrf.mxu0
    %v4862 = vadd.f32 0.0, %v4861
    %v4863 = vpop.f32.mrf.mxu0
    %v4864 = vpop.f32.mrf.mxu0
    %v4865 = vpop.f32.mrf.mxu0
    %4866 = vdwg.mxu0
    %v4868 = vsel %vm2929, %v4589, 0
    %v4871 = vsel %vm3029, %v4085, 0
    %4873 = vmatprep.subr.bf16.mxu0 0
    %4874 = vmatpush1.bf16.msra.mxu0 0
    %4875 = vmatprep.subr.bf16.mxu0 0
    %4876 = vmatpush1.bf16.msra.mxu0 0
    %4877 = vmatprep.subr.bf16.mxu0 0
    %4878 = vmatpush1.bf16.msra.mxu0 0
    %4879 = vmatprep.subr.bf16.mxu0 0
    %4880 = vmatpush1.bf16.msra.mxu0 0
    %4881 = vmatprep.subr.bf16.mxu0 0
    %4882 = vmatpush1.bf16.msra.mxu0 0
    %4883 = vmatprep.subr.bf16.mxu0 0
    %4884 = vmatpush1.bf16.msra.mxu0 0
    %4885 = vmatprep.subr.bf16.mxu0 0
    %4886 = vmatpush1.bf16.msra.mxu0 0
    %4887 = vmatprep.subr.bf16.mxu0 0
    %4888 = vmatpush1.bf16.msra.mxu0 %v4871
    %4889 = vmatprep.subr.bf16.mxu0 0
    %4890 = vmatpush2.bf16.msra.mxu0 0
    %4891 = vmatprep.subr.bf16.mxu0 0
    %4892 = vmatpush2.bf16.msra.mxu0 0
    %4893 = vmatprep.subr.bf16.mxu0 0
    %4894 = vmatpush2.bf16.msra.mxu0 0
    %4895 = vmatprep.subr.bf16.mxu0 0
    %4896 = vmatpush2.bf16.msra.mxu0 0
    %4897 = vmatprep.subr.bf16.mxu0 0
    %4898 = vmatpush2.bf16.msra.mxu0 0
    %4899 = vmatprep.subr.bf16.mxu0 0
    %4900 = vmatpush2.bf16.msra.mxu0 0
    %4901 = vmatprep.subr.bf16.mxu0 0
    %4902 = vmatpush2.bf16.msra.mxu0 0
    %4903 = vmatprep.subr.bf16.mxu0 0
    %4904 = vmatpush2.bf16.msra.mxu0 0
    %4905 = vmatprep.mubr.bf16.mxu0 0
    %4906 = vmatmul.mubr.bf16.gmra.mxu0 %v4868
    %v4907 = vpop.f32.mrf.mxu0
    %v4908 = vadd.f32 0.0, %v4907
    %v4909 = vpop.f32.mrf.mxu0
    %v4910 = vpop.f32.mrf.mxu0
    %v4911 = vpop.f32.mrf.mxu0
    %4912 = vdwg.mxu0
    %v4914 = vsel %vm2929, %v4590, 0
    %v4917 = vsel %vm3029, %v4086, 0
    %4919 = vmatprep.subr.bf16.mxu0 0
    %4920 = vmatpush1.bf16.msra.mxu0 0
    %4921 = vmatprep.subr.bf16.mxu0 0
    %4922 = vmatpush1.bf16.msra.mxu0 0
    %4923 = vmatprep.subr.bf16.mxu0 0
    %4924 = vmatpush1.bf16.msra.mxu0 0
    %4925 = vmatprep.subr.bf16.mxu0 0
    %4926 = vmatpush1.bf16.msra.mxu0 0
    %4927 = vmatprep.subr.bf16.mxu0 0
    %4928 = vmatpush1.bf16.msra.mxu0 0
    %4929 = vmatprep.subr.bf16.mxu0 0
    %4930 = vmatpush1.bf16.msra.mxu0 0
    %4931 = vmatprep.subr.bf16.mxu0 0
    %4932 = vmatpush1.bf16.msra.mxu0 0
    %4933 = vmatprep.subr.bf16.mxu0 0
    %4934 = vmatpush1.bf16.msra.mxu0 %v4917
    %4935 = vmatprep.subr.bf16.mxu0 0
    %4936 = vmatpush2.bf16.msra.mxu0 0
    %4937 = vmatprep.subr.bf16.mxu0 0
    %4938 = vmatpush2.bf16.msra.mxu0 0
    %4939 = vmatprep.subr.bf16.mxu0 0
    %4940 = vmatpush2.bf16.msra.mxu0 0
    %4941 = vmatprep.subr.bf16.mxu0 0
    %4942 = vmatpush2.bf16.msra.mxu0 0
    %4943 = vmatprep.subr.bf16.mxu0 0
    %4944 = vmatpush2.bf16.msra.mxu0 0
    %4945 = vmatprep.subr.bf16.mxu0 0
    %4946 = vmatpush2.bf16.msra.mxu0 0
    %4947 = vmatprep.subr.bf16.mxu0 0
    %4948 = vmatpush2.bf16.msra.mxu0 0
    %4949 = vmatprep.subr.bf16.mxu0 0
    %4950 = vmatpush2.bf16.msra.mxu0 0
    %4951 = vmatprep.mubr.bf16.mxu0 0
    %4952 = vmatmul.mubr.bf16.gmra.mxu0 %v4914
    %v4953 = vpop.f32.mrf.mxu0
    %v4954 = vadd.f32 0.0, %v4953
    %v4955 = vpop.f32.mrf.mxu0
    %v4956 = vpop.f32.mrf.mxu0
    %v4957 = vpop.f32.mrf.mxu0
    %4958 = vdwg.mxu0
    %4960 = vrot.lane.b32.xlu0 %v4678, 16
    %v4961 = vpop.permute.xlu0 %4960
    %4964 = vrot.lane.b32.xlu0 %v4724, 32
    %v4965 = vpop.permute.xlu0 %4964
    %4968 = vrot.lane.b32.xlu0 %v4770, 48
    %v4969 = vpop.permute.xlu0 %4968
    %v4971 = vsel %vm2523, %v4632, %v4961
    %v4972 = vsel %vm3408, %v4971, %v4965
    %v4973 = vsel %vm3410, %v4972, %v4969
    %4975 = vrot.lane.b32.xlu0 %v4862, 16
    %v4976 = vpop.permute.xlu0 %4975
    %4979 = vrot.lane.b32.xlu0 %v4908, 32
    %v4980 = vpop.permute.xlu0 %4979
    %4983 = vrot.lane.b32.xlu0 %v4954, 48
    %v4984 = vpop.permute.xlu0 %4983
    %v4986 = vsel %vm2523, %v4816, %v4976
    %v4987 = vsel %vm3408, %v4986, %v4980
    %v4988 = vsel %vm3410, %v4987, %v4984
    %v4989 = vpack.c.bf16 %v4988, %v4973
    %v4990 = vld [vmem:[%s41] sm:$0xf]
    %v4991 = vld [vmem:[%s41 + $0x4] sm:$0xf]
    %v4992 = vld [vmem:[%s41 + $0x8] sm:$0xf]
    %v4993 = vld [vmem:[%s41 + $0xc] sm:$0xf]
    %v4994 = vld [vmem:[%s41 + $0x10] sm:$0xf]
    %v4995 = vld [vmem:[%s41 + $0x14] sm:$0xf]
    %v4996 = vld [vmem:[%s41 + $0x18] sm:$0xf]
    %v4997 = vld [vmem:[%s41 + $0x1c] sm:$0xf]
    %v4998 = vld [vmem:[%s43] sm:$0x1]
    %v5000 = vlaneseq
    %v5001 = vshrl.u32 %v5000, 7
    %v5002 = vsub.s32 0, %v5001
    %v5003 = vrot.slane %v4998, %v5002
    %v5013 = vunpack.c.l.b16 %v4990
    %v5014 = vunpack.c.l.b16 %v4991
    %v5015 = vunpack.c.l.b16 %v4992
    %v5016 = vunpack.c.l.b16 %v4993
    %v5017 = vunpack.c.l.b16 %v4994
    %v5018 = vunpack.c.l.b16 %v4995
    %v5019 = vunpack.c.l.b16 %v4996
    %v5020 = vunpack.c.l.b16 %v4997
    %v5021 = vpack.c.b16 %v5014, %v5013
    %v5022 = vpack.c.b16 %v5016, %v5015
    %v5023 = vpack.c.b16 %v5018, %v5017
    %v5024 = vpack.c.b16 %v5020, %v5019
    %v5030 = vsel %vm2311, %v4989, 0
    %5032 = vmatprep.subr.bf16.mxu0 0
    %5033 = vmatpush1.bf16.msra.mxu0 0
    %5034 = vmatprep.subr.bf16.mxu0 0
    %5035 = vmatpush1.bf16.msra.mxu0 0
    %5036 = vmatprep.subr.bf16.mxu0 0
    %5037 = vmatpush1.bf16.msra.mxu0 0
    %5038 = vmatprep.subr.bf16.mxu0 0
    %5039 = vmatpush1.bf16.msra.mxu0 0
    %5040 = vmatprep.subr.bf16.mxu0 0
    %5041 = vmatpush1.bf16.msra.mxu0 %v5024
    %5042 = vmatprep.subr.bf16.mxu0 0
    %5043 = vmatpush1.bf16.msra.mxu0 %v5023
    %5044 = vmatprep.subr.bf16.mxu0 0
    %5045 = vmatpush1.bf16.msra.mxu0 %v5022
    %5046 = vmatprep.subr.bf16.mxu0 0
    %5047 = vmatpush1.bf16.msra.mxu0 %v5021
    %5048 = vmatprep.subr.bf16.mxu0 0
    %5049 = vmatpush2.bf16.msra.mxu0 0
    %5050 = vmatprep.subr.bf16.mxu0 0
    %5051 = vmatpush2.bf16.msra.mxu0 0
    %5052 = vmatprep.subr.bf16.mxu0 0
    %5053 = vmatpush2.bf16.msra.mxu0 0
    %5054 = vmatprep.subr.bf16.mxu0 0
    %5055 = vmatpush2.bf16.msra.mxu0 0
    %5056 = vmatprep.subr.bf16.mxu0 0
    %5057 = vmatpush2.bf16.msra.mxu0 0
    %5058 = vmatprep.subr.bf16.mxu0 0
    %5059 = vmatpush2.bf16.msra.mxu0 0
    %5060 = vmatprep.subr.bf16.mxu0 0
    %5061 = vmatpush2.bf16.msra.mxu0 0
    %5062 = vmatprep.subr.bf16.mxu0 0
    %5063 = vmatpush2.bf16.msra.mxu0 0
    %5064 = vmatprep.mubr.bf16.mxu0 0
    %5065 = vmatmul.mubr.bf16.gmra.mxu0 %v5030
    %v5066 = vpop.f32.mrf.mxu0
    %v5067 = vadd.f32 %v5003, %v5066
    %v5068 = vpop.f32.mrf.mxu0
    %v5069 = vpop.f32.mrf.mxu0
    %v5070 = vadd.f32 %v5003, %v5069
    %v5071 = vpop.f32.mrf.mxu0
    %5072 = vdwg.mxu0
    %v5073 = vadd.f32 %v3878, %v5067
    %v5074 = vadd.f32 %v3879, %v5070
    %v5075 = vsel %vm2311, %v5073, 0.0
    %5076 = vadd.xlane.f32.xlu0 %v5075
    %v5077 = vpop.xlane.xlu0 %5076
    %v5078 = vsel %vm2311, %v5074, 0.0
    %5079 = vadd.xlane.f32.xlu0 %v5078
    %v5080 = vpop.xlane.xlu0 %5079
    %v5081 = vmul.f32 %v5077, %v2318
    %v5082 = vmul.f32 %v5080, %v2318
    %v5083 = vsub.f32 %v5073, %v5081
    %v5084 = vsub.f32 %v5074, %v5082
    %v5085 = vmul.f32 %v5083, %v5083
    %v5086 = vmul.f32 %v5084, %v5084
    %v5087 = vsel %vm2311, %v5085, 0.0
    %5088 = vadd.xlane.f32.xlu0 %v5087
    %v5089 = vpop.xlane.xlu0 %5088
    %v5090 = vsel %vm2311, %v5086, 0.0
    %5091 = vadd.xlane.f32.xlu0 %v5090
    %v5092 = vpop.xlane.xlu0 %5091
    %v5093 = vmul.f32 %v5089, %v2318
    %v5094 = vmul.f32 %v5092, %v2318
    %v5095 = vadd.f32 %v5093, 1e-06
    %v5096 = vadd.f32 %v5094, 1e-06
    %v5097 = vrsqrt.pop %v5095
    %v5098 = vrsqrt.pop %v5096
    %v5099 = vmul.f32 %v5083, %v5097
    %v5100 = vmul.f32 %v5084, %v5098
    %v5101 = vld [vmem:[%s45] sm:$0x1]
    %v5103 = vlaneseq
    %v5104 = vshrl.u32 %v5103, 7
    %v5105 = vsub.s32 0, %v5104
    %v5106 = vrot.slane %v5101, %v5105
    %v5108 = vmul.f32 %v5099, %v5106
    %v5109 = vmul.f32 %v5100, %v5106
    %v5110 = vld [vmem:[%s47] sm:$0x1]
    %v5112 = vlaneseq
    %v5113 = vshrl.u32 %v5112, 7
    %v5114 = vsub.s32 0, %v5113
    %v5115 = vrot.slane %v5110, %v5114
    %v5117 = vadd.f32 %v5108, %v5115
    %v5118 = vadd.f32 %v5109, %v5115
    %v5119 = vpack.c.bf16 %v5118, %v5117
    %v5120 = vld [vmem:[%s49] sm:$0xff]
    %v5121 = vld [vmem:[%s49 + $0x8] sm:$0xff]
    %v5122 = vld [vmem:[%s49 + $0x10] sm:$0xff]
    %v5123 = vld [vmem:[%s49 + $0x18] sm:$0xff]
    %v5124 = vld [vmem:[%s49 + $0x20] sm:$0xff]
    %v5125 = vld [vmem:[%s49 + $0x28] sm:$0xff]
    %v5126 = vld [vmem:[%s49 + $0x30] sm:$0xff]
    %v5127 = vld [vmem:[%s49 + $0x38] sm:$0xff]
    %v5128 = vld [vmem:[%s51] sm:$0x3]
    %v5130 = vlaneseq
    %v5131 = vshrl.u32 %v5130, 7
    %v5132 = vsub.s32 0, %v5131
    %v5133 = vrot.slane %v5128, %v5132
    %v5134 = vlaneseq
    %v5135 = vshrl.u32 %v5134, 7
    %v5136 = vsub.s32 1, %v5135
    %v5137 = vrot.slane %v5128, %v5136
    %v5148 = vunpack.c.l.b16 %v5120
    %v5149 = vunpack.c.h.b16 %v5120
    %v5150 = vunpack.c.l.b16 %v5121
    %v5151 = vunpack.c.h.b16 %v5121
    %v5152 = vunpack.c.l.b16 %v5122
    %v5153 = vunpack.c.h.b16 %v5122
    %v5154 = vunpack.c.l.b16 %v5123
    %v5155 = vunpack.c.h.b16 %v5123
    %v5156 = vunpack.c.l.b16 %v5124
    %v5157 = vunpack.c.h.b16 %v5124
    %v5158 = vunpack.c.l.b16 %v5125
    %v5159 = vunpack.c.h.b16 %v5125
    %v5160 = vunpack.c.l.b16 %v5126
    %v5161 = vunpack.c.h.b16 %v5126
    %v5162 = vunpack.c.l.b16 %v5127
    %v5163 = vunpack.c.h.b16 %v5127
    %v5164 = vpack.c.b16 %v5150, %v5148
    %v5165 = vpack.c.b16 %v5151, %v5149
    %v5166 = vpack.c.b16 %v5154, %v5152
    %v5167 = vpack.c.b16 %v5155, %v5153
    %v5168 = vpack.c.b16 %v5158, %v5156
    %v5169 = vpack.c.b16 %v5159, %v5157
    %v5170 = vpack.c.b16 %v5162, %v5160
    %v5171 = vpack.c.b16 %v5163, %v5161
    %v5181 = vsel %vm2311, %v5119, 0
    %5183 = vmatprep.subr.bf16.mxu0 0
    %5184 = vmatpush1.bf16.msra.mxu0 0
    %5185 = vmatprep.subr.bf16.mxu0 0
    %5186 = vmatpush1.bf16.msra.mxu0 0
    %5187 = vmatprep.subr.bf16.mxu0 0
    %5188 = vmatpush1.bf16.msra.mxu0 0
    %5189 = vmatprep.subr.bf16.mxu0 0
    %5190 = vmatpush1.bf16.msra.mxu0 0
    %5191 = vmatprep.subr.bf16.mxu0 %v5171
    %5192 = vmatpush1.bf16.msra.mxu0 %v5170
    %5193 = vmatprep.subr.bf16.mxu0 %v5169
    %5194 = vmatpush1.bf16.msra.mxu0 %v5168
    %5195 = vmatprep.subr.bf16.mxu0 %v5167
    %5196 = vmatpush1.bf16.msra.mxu0 %v5166
    %5197 = vmatprep.subr.bf16.mxu0 %v5165
    %5198 = vmatpush1.bf16.msra.mxu0 %v5164
    %5199 = vmatprep.subr.bf16.mxu0 0
    %5200 = vmatpush2.bf16.msra.mxu0 0
    %5201 = vmatprep.subr.bf16.mxu0 0
    %5202 = vmatpush2.bf16.msra.mxu0 0
    %5203 = vmatprep.subr.bf16.mxu0 0
    %5204 = vmatpush2.bf16.msra.mxu0 0
    %5205 = vmatprep.subr.bf16.mxu0 0
    %5206 = vmatpush2.bf16.msra.mxu0 0
    %5207 = vmatprep.subr.bf16.mxu0 0
    %5208 = vmatpush2.bf16.msra.mxu0 0
    %5209 = vmatprep.subr.bf16.mxu0 0
    %5210 = vmatpush2.bf16.msra.mxu0 0
    %5211 = vmatprep.subr.bf16.mxu0 0
    %5212 = vmatpush2.bf16.msra.mxu0 0
    %5213 = vmatprep.subr.bf16.mxu0 0
    %5214 = vmatpush2.bf16.msra.mxu0 0
    %5215 = vmatprep.mubr.bf16.mxu0 0
    %5216 = vmatmul.mubr.bf16.gmra.mxu0 %v5181
    %v5217 = vpop.f32.mrf.mxu0
    %v5218 = vadd.f32 %v5133, %v5217
    %v5219 = vpop.f32.mrf.mxu0
    %v5220 = vadd.f32 %v5137, %v5219
    %v5221 = vpop.f32.mrf.mxu0
    %v5222 = vadd.f32 %v5133, %v5221
    %v5223 = vpop.f32.mrf.mxu0
    %v5224 = vadd.f32 %v5137, %v5223
    %5225 = vdwg.mxu0
    %v5226 = vmul.f32 %v5218, %v5218
    %v5227 = vmul.f32 %v5220, %v5220
    %v5228 = vmul.f32 %v5222, %v5222
    %v5229 = vmul.f32 %v5224, %v5224
    %v5230 = vmul.f32 %v5218, %v5226
    %v5231 = vmul.f32 %v5220, %v5227
    %v5232 = vmul.f32 %v5222, %v5228
    %v5233 = vmul.f32 %v5224, %v5229
    %v5234 = vmul.f32 %v5230, 0.044715
    %v5235 = vmul.f32 %v5231, 0.044715
    %v5236 = vmul.f32 %v5232, 0.044715
    %v5237 = vmul.f32 %v5233, 0.044715
    %v5238 = vadd.f32 %v5218, %v5234
    %v5239 = vadd.f32 %v5220, %v5235
    %v5240 = vadd.f32 %v5222, %v5236
    %v5241 = vadd.f32 %v5224, %v5237
    %v5242 = vmul.f32 %v5238, 0.7978846
    %v5243 = vmul.f32 %v5239, 0.7978846
    %v5244 = vmul.f32 %v5240, 0.7978846
    %v5245 = vmul.f32 %v5241, 0.7978846
    %v5246 = vtanh.pop %v5242
    %v5247 = vtanh.pop %v5243
    %v5248 = vtanh.pop %v5244
    %v5249 = vtanh.pop %v5245
    %v5250 = vadd.f32 %v5246, 1.0
    %v5251 = vadd.f32 %v5247, 1.0
    %v5252 = vadd.f32 %v5248, 1.0
    %v5253 = vadd.f32 %v5249, 1.0
    %v5254 = vmul.f32 %v5250, 0.5
    %v5255 = vmul.f32 %v5251, 0.5
    %v5256 = vmul.f32 %v5252, 0.5
    %v5257 = vmul.f32 %v5253, 0.5
    %v5258 = vmul.f32 %v5218, %v5254
    %v5259 = vmul.f32 %v5220, %v5255
    %v5260 = vmul.f32 %v5222, %v5256
    %v5261 = vmul.f32 %v5224, %v5257
    %v5262 = vpack.c.bf16 %v5260, %v5258
    %v5263 = vpack.c.bf16 %v5261, %v5259
    %v5264 = vld [vmem:[%s53] sm:$0xf]
    %v5265 = vld [vmem:[%s53 + $0x4] sm:$0xf]
    %v5266 = vld [vmem:[%s53 + $0x8] sm:$0xf]
    %v5267 = vld [vmem:[%s53 + $0xc] sm:$0xf]
    %v5268 = vld [vmem:[%s53 + $0x10] sm:$0xf]
    %v5269 = vld [vmem:[%s53 + $0x14] sm:$0xf]
    %v5270 = vld [vmem:[%s53 + $0x18] sm:$0xf]
    %v5271 = vld [vmem:[%s53 + $0x1c] sm:$0xf]
    %v5272 = vld [vmem:[%s53 + $0x20] sm:$0xf]
    %v5273 = vld [vmem:[%s53 + $0x24] sm:$0xf]
    %v5274 = vld [vmem:[%s53 + $0x28] sm:$0xf]
    %v5275 = vld [vmem:[%s53 + $0x2c] sm:$0xf]
    %v5276 = vld [vmem:[%s53 + $0x30] sm:$0xf]
    %v5277 = vld [vmem:[%s53 + $0x34] sm:$0xf]
    %v5278 = vld [vmem:[%s53 + $0x38] sm:$0xf]
    %v5279 = vld [vmem:[%s53 + $0x3c] sm:$0xf]
    %v5280 = vld [vmem:[%s53 + $0x40] sm:$0xf]
    %v5281 = vld [vmem:[%s53 + $0x44] sm:$0xf]
    %v5282 = vld [vmem:[%s53 + $0x48] sm:$0xf]
    %v5283 = vld [vmem:[%s53 + $0x4c] sm:$0xf]
    %v5284 = vld [vmem:[%s53 + $0x50] sm:$0xf]
    %v5285 = vld [vmem:[%s53 + $0x54] sm:$0xf]
    %v5286 = vld [vmem:[%s53 + $0x58] sm:$0xf]
    %v5287 = vld [vmem:[%s53 + $0x5c] sm:$0xf]
    %v5288 = vld [vmem:[%s53 + $0x60] sm:$0xf]
    %v5289 = vld [vmem:[%s53 + $0x64] sm:$0xf]
    %v5290 = vld [vmem:[%s53 + $0x68] sm:$0xf]
    %v5291 = vld [vmem:[%s53 + $0x6c] sm:$0xf]
    %v5292 = vld [vmem:[%s53 + $0x70] sm:$0xf]
    %v5293 = vld [vmem:[%s53 + $0x74] sm:$0xf]
    %v5294 = vld [vmem:[%s53 + $0x78] sm:$0xf]
    %v5295 = vld [vmem:[%s53 + $0x7c] sm:$0xf]
    %v5296 = vld [vmem:[%s55] sm:$0x1]
    %v5298 = vlaneseq
    %v5299 = vshrl.u32 %v5298, 7
    %v5300 = vsub.s32 0, %v5299
    %v5301 = vrot.slane %v5296, %v5300
    %v5335 = vunpack.c.l.b16 %v5264
    %v5336 = vunpack.c.l.b16 %v5265
    %v5337 = vunpack.c.l.b16 %v5266
    %v5338 = vunpack.c.l.b16 %v5267
    %v5339 = vunpack.c.l.b16 %v5268
    %v5340 = vunpack.c.l.b16 %v5269
    %v5341 = vunpack.c.l.b16 %v5270
    %v5342 = vunpack.c.l.b16 %v5271
    %v5343 = vunpack.c.l.b16 %v5272
    %v5344 = vunpack.c.l.b16 %v5273
    %v5345 = vunpack.c.l.b16 %v5274
    %v5346 = vunpack.c.l.b16 %v5275
    %v5347 = vunpack.c.l.b16 %v5276
    %v5348 = vunpack.c.l.b16 %v5277
    %v5349 = vunpack.c.l.b16 %v5278
    %v5350 = vunpack.c.l.b16 %v5279
    %v5351 = vunpack.c.l.b16 %v5280
    %v5352 = vunpack.c.l.b16 %v5281
    %v5353 = vunpack.c.l.b16 %v5282
    %v5354 = vunpack.c.l.b16 %v5283
    %v5355 = vunpack.c.l.b16 %v5284
    %v5356 = vunpack.c.l.b16 %v5285
    %v5357 = vunpack.c.l.b16 %v5286
    %v5358 = vunpack.c.l.b16 %v5287
    %v5359 = vunpack.c.l.b16 %v5288
    %v5360 = vunpack.c.l.b16 %v5289
    %v5361 = vunpack.c.l.b16 %v5290
    %v5362 = vunpack.c.l.b16 %v5291
    %v5363 = vunpack.c.l.b16 %v5292
    %v5364 = vunpack.c.l.b16 %v5293
    %v5365 = vunpack.c.l.b16 %v5294
    %v5366 = vunpack.c.l.b16 %v5295
    %v5367 = vpack.c.b16 %v5336, %v5335
    %v5368 = vpack.c.b16 %v5338, %v5337
    %v5369 = vpack.c.b16 %v5340, %v5339
    %v5370 = vpack.c.b16 %v5342, %v5341
    %v5371 = vpack.c.b16 %v5344, %v5343
    %v5372 = vpack.c.b16 %v5346, %v5345
    %v5373 = vpack.c.b16 %v5348, %v5347
    %v5374 = vpack.c.b16 %v5350, %v5349
    %v5375 = vpack.c.b16 %v5352, %v5351
    %v5376 = vpack.c.b16 %v5354, %v5353
    %v5377 = vpack.c.b16 %v5356, %v5355
    %v5378 = vpack.c.b16 %v5358, %v5357
    %v5379 = vpack.c.b16 %v5360, %v5359
    %v5380 = vpack.c.b16 %v5362, %v5361
    %v5381 = vpack.c.b16 %v5364, %v5363
    %v5382 = vpack.c.b16 %v5366, %v5365
    %5399 = vmatprep.subr.bf16.mxu0 0
    %5400 = vmatpush1.bf16.msra.mxu0 %v5374
    %5401 = vmatprep.subr.bf16.mxu0 0
    %5402 = vmatpush1.bf16.msra.mxu0 %v5373
    %5403 = vmatprep.subr.bf16.mxu0 0
    %5404 = vmatpush1.bf16.msra.mxu0 %v5372
    %5405 = vmatprep.subr.bf16.mxu0 0
    %5406 = vmatpush1.bf16.msra.mxu0 %v5371
    %5407 = vmatprep.subr.bf16.mxu0 0
    %5408 = vmatpush1.bf16.msra.mxu0 %v5370
    %5409 = vmatprep.subr.bf16.mxu0 0
    %5410 = vmatpush1.bf16.msra.mxu0 %v5369
    %5411 = vmatprep.subr.bf16.mxu0 0
    %5412 = vmatpush1.bf16.msra.mxu0 %v5368
    %5413 = vmatprep.subr.bf16.mxu0 0
    %5414 = vmatpush1.bf16.msra.mxu0 %v5367
    %5415 = vmatprep.subr.bf16.mxu0 0
    %5416 = vmatpush2.bf16.msra.mxu0 %v5382
    %5417 = vmatprep.subr.bf16.mxu0 0
    %5418 = vmatpush2.bf16.msra.mxu0 %v5381
    %5419 = vmatprep.subr.bf16.mxu0 0
    %5420 = vmatpush2.bf16.msra.mxu0 %v5380
    %5421 = vmatprep.subr.bf16.mxu0 0
    %5422 = vmatpush2.bf16.msra.mxu0 %v5379
    %5423 = vmatprep.subr.bf16.mxu0 0
    %5424 = vmatpush2.bf16.msra.mxu0 %v5378
    %5425 = vmatprep.subr.bf16.mxu0 0
    %5426 = vmatpush2.bf16.msra.mxu0 %v5377
    %5427 = vmatprep.subr.bf16.mxu0 0
    %5428 = vmatpush2.bf16.msra.mxu0 %v5376
    %5429 = vmatprep.subr.bf16.mxu0 0
    %5430 = vmatpush2.bf16.msra.mxu0 %v5375
    %5431 = vmatprep.mubr.bf16.mxu0 %v5263
    %5432 = vmatmul.mubr.bf16.gmra.mxu0 %v5262
    %v5433 = vpop.f32.mrf.mxu0
    %v5434 = vadd.f32 %v5301, %v5433
    %v5435 = vpop.f32.mrf.mxu0
    %v5436 = vpop.f32.mrf.mxu0
    %v5437 = vadd.f32 %v5301, %v5436
    %v5438 = vpop.f32.mrf.mxu0
    %5439 = vdwg.mxu0
    %v5440 = vadd.f32 %v5073, %v5434
    %v5441 = vadd.f32 %v5074, %v5437
    %v5443 = vrot.slane %v5441, 7
    %vm5445 = vcmask 1040384
    %v5446 = vsel %vm5445, %v5440, %v5443
    %vm5447 = vcmask 517120
    %v5448 = vsel %vm5447, %v5446, 0.0
    %5449 = vadd.xlane.f32.xlu0 %v5448
    %v5450 = vpop.xlane.xlu0 %5449
    %v5451 = vmul.f32 %v5450, %v2318
    %v5452 = vsub.f32 %v5446, %v5451
    %v5453 = vmul.f32 %v5452, %v5452
    %v5454 = vsel %vm5447, %v5453, 0.0
    %5455 = vadd.xlane.f32.xlu0 %v5454
    %v5456 = vpop.xlane.xlu0 %5455
    %v5457 = vmul.f32 %v5456, %v2318
    %v5458 = vadd.f32 %v5457, 1e-06
    %v5459 = vrsqrt.pop %v5458
    %v5460 = vmul.f32 %v5452, %v5459
    %v5461 = vld [vmem:[%s57] sm:$0x1]
    %v5463 = vlaneseq
    %v5464 = vshrl.u32 %v5463, 7
    %v5465 = vsub.s32 0, %v5464
    %v5466 = vrot.slane %v5461, %v5465
    %v5468 = vmul.f32 %v5460, %v5466
    %v5469 = vld [vmem:[%s59] sm:$0x1]
    %v5471 = vlaneseq
    %v5472 = vshrl.u32 %v5471, 7
    %v5473 = vsub.s32 0, %v5472
    %v5474 = vrot.slane %v5469, %v5473
    %v5476 = vadd.f32 %v5468, %v5474
    %v5477 = vpack.c.bf16 %v5476, %v5476
    %v5478 = vld [vmem:[%s61] sm:$0xf]
    %v5479 = vld [vmem:[%s61 + $0x4] sm:$0xf]
    %v5480 = vld [vmem:[%s61 + $0x8] sm:$0xf]
    %v5481 = vld [vmem:[%s61 + $0xc] sm:$0xf]
    %v5482 = vld [vmem:[%s61 + $0x10] sm:$0xf]
    %v5483 = vld [vmem:[%s61 + $0x14] sm:$0xf]
    %v5484 = vld [vmem:[%s61 + $0x18] sm:$0xf]
    %v5485 = vld [vmem:[%s61 + $0x1c] sm:$0xf]
    %v5486 = vld [vmem:[%s63] sm:$0x1]
    %v5488 = vlaneseq
    %v5489 = vshrl.u32 %v5488, 7
    %v5490 = vsub.s32 0, %v5489
    %v5491 = vrot.slane %v5486, %v5490
    %v5501 = vunpack.c.l.b16 %v5478
    %v5502 = vunpack.c.l.b16 %v5479
    %v5503 = vunpack.c.l.b16 %v5480
    %v5504 = vunpack.c.l.b16 %v5481
    %v5505 = vunpack.c.l.b16 %v5482
    %v5506 = vunpack.c.l.b16 %v5483
    %v5507 = vunpack.c.l.b16 %v5484
    %v5508 = vunpack.c.l.b16 %v5485
    %v5509 = vpack.c.b16 %v5502, %v5501
    %v5510 = vpack.c.b16 %v5504, %v5503
    %v5511 = vpack.c.b16 %v5506, %v5505
    %v5512 = vpack.c.b16 %v5508, %v5507
    %v5518 = vsel %vm2311, %v5477, 0
    %5520 = vmatprep.subr.bf16.mxu0 0
    %5521 = vmatpush1.bf16.msra.mxu0 0
    %5522 = vmatprep.subr.bf16.mxu0 0
    %5523 = vmatpush1.bf16.msra.mxu0 0
    %5524 = vmatprep.subr.bf16.mxu0 0
    %5525 = vmatpush1.bf16.msra.mxu0 0
    %5526 = vmatprep.subr.bf16.mxu0 0
    %5527 = vmatpush1.bf16.msra.mxu0 0
    %5528 = vmatprep.subr.bf16.mxu0 0
    %5529 = vmatpush1.bf16.msra.mxu0 %v5512
    %5530 = vmatprep.subr.bf16.mxu0 0
    %5531 = vmatpush1.bf16.msra.mxu0 %v5511
    %5532 = vmatprep.subr.bf16.mxu0 0
    %5533 = vmatpush1.bf16.msra.mxu0 %v5510
    %5534 = vmatprep.subr.bf16.mxu0 0
    %5535 = vmatpush1.bf16.msra.mxu0 %v5509
    %5536 = vmatprep.subr.bf16.mxu0 0
    %5537 = vmatpush2.bf16.msra.mxu0 0
    %5538 = vmatprep.subr.bf16.mxu0 0
    %5539 = vmatpush2.bf16.msra.mxu0 0
    %5540 = vmatprep.subr.bf16.mxu0 0
    %5541 = vmatpush2.bf16.msra.mxu0 0
    %5542 = vmatprep.subr.bf16.mxu0 0
    %5543 = vmatpush2.bf16.msra.mxu0 0
    %5544 = vmatprep.subr.bf16.mxu0 0
    %5545 = vmatpush2.bf16.msra.mxu0 0
    %5546 = vmatprep.subr.bf16.mxu0 0
    %5547 = vmatpush2.bf16.msra.mxu0 0
    %5548 = vmatprep.subr.bf16.mxu0 0
    %5549 = vmatpush2.bf16.msra.mxu0 0
    %5550 = vmatprep.subr.bf16.mxu0 0
    %5551 = vmatpush2.bf16.msra.mxu0 0
    %5552 = vmatprep.mubr.bf16.mxu0 0
    %5553 = vmatmul.mubr.bf16.gmra.mxu0 %v5518
    %v5554 = vpop.f32.mrf.mxu0
    %v5555 = vadd.f32 %v5491, %v5554
    %v5556 = vpop.f32.mrf.mxu0
    %v5557 = vpop.f32.mrf.mxu0
    %v5558 = vpop.f32.mrf.mxu0
    %5559 = vdwg.mxu0
    %vm5560 = vcmask 25600
    %v5561 = vsel %vm5560, %v5555, -inf
    %5562 = vmax.xlane.f32.xlu0 %v5561
    %v5563 = vpop.xlane.xlu0 %5562
    %v5564 = vsub.f32 %v5555, %v5563
    %v5565 = vmul.f32 %v5564, 1.442695
    %v5566 = vpow.pop %v5565
    %v5567 = vsel %vm5560, %v5566, 0.0
    %5568 = vadd.xlane.f32.xlu0 %v5567
    %v5569 = vpop.xlane.xlu0 %5568
    %v5570 = vrcp.pop %v5569
    %v5571 = vmul.f32 %v5566, %v5570
    %5572 = vst.msk [vmem:[#allocation2] sm:$0x3] %vm5560, %v5571
    // Predicated region
    $region130: #{_lambda_.1} parent=1 // pred_check
      _
    $region131: #{_lambda_.1} parent=1 // pred_check_branch
      %5574 = sbr.rel (0) target = $region133
    $region132: #{_lambda_.1} parent=1 // pred_region
      %s5576 = ssub.s32 32, 32
      %5577 = vsyncadd [#allocation3], %s5576
      %s5579 = sshll.u32 [#allocation2], 4
      %s5580 = int_to_ptr.vmem [resolvable:$true] %s5579
      %5582 = dma.vmem_to_hbm [thread:$0]  %s5580, 32, %s65, [#allocation3]
    $region133: #{_lambda_.1} parent=1 // pred_fallthru
      _
    // Predicated region
    $region134: #{_lambda_.1} parent=1 // pred_check
      _
    $region135: #{_lambda_.1} parent=1 // pred_check_branch
      %5584 = sbr.rel (0) target = $region137
    $region136: #{_lambda_.1} parent=1 // pred_region
      %5585 = dma.done [#allocation3], 32
    $region137: #{_lambda_.1} parent=1 // pred_fallthru
      _
    %5586 = vsyncpa [#allocation3], 1

</llo_original>
